<compile_context>
chip_gen: v7x
topology: tpu7x:2x2x1
jax: 0.10.0
libtpu: 0.0.40
codegen_flags: <defaults>
</compile_context>

<pallas_src>
import math
import functools

import jax
import jax.numpy as jnp
from jax.experimental import pallas as pl
from jax.experimental.pallas import tpu as pltpu


def _vit_block_kernel(x_ref,
                      g1_ref, b1_ref,
                      wqkv_ref, bqkv_ref,
                      g2_ref, b2_ref,
                      w1_ref, bb1_ref, w2_ref, bb2_ref,
                      o_ref,
                      res_sc, yn_sc, acc_sc,
                      *, n_heads: int, d_head: int, eps: float,
                      tb: int, n_valid: int, heads_per_group: int):
    """Grid = (batch_blocks, mlp_hidden_chunks).

    NOTE: the scratch-persistence scheme (prologue gated on f == 0, epilogue on
    f == nf - 1, accumulation in between) is only correct because the f axis is
    the LAST (innermost) grid axis and is marked "arbitrary".  Do not reorder
    the grid or mark the f axis "parallel".
    """
    f = pl.program_id(1)
    nf = pl.num_programs(1)
    D = n_heads * d_head
    n_pad = x_ref.shape[1]              # padded token count
    rows = tb * n_pad

    # ---- prologue: LN1 + attention + residual + LN2 (once per batch block) ----
    @pl.when(f == 0)
    def _prologue():
        x = x_ref[...].reshape(rows, D).astype(jnp.float32)

        # LayerNorm 1 (f32).
        mu = jnp.mean(x, axis=-1, keepdims=True)
        var = jnp.mean((x - mu) * (x - mu), axis=-1, keepdims=True)
        xn = (x - mu) * jax.lax.rsqrt(var + eps) * g1_ref[...] + b1_ref[...]

        # Fused QKV projection: one (rows,D)x(D,3D) MXU op, bf16 in / f32 acc,
        # then a single bf16 cast of qkv+bias; per-head slices below are taken
        # from this bf16 tensor (no f32 q/k/v temporaries).
        qkv = (jnp.dot(xn.astype(jnp.bfloat16), wqkv_ref[...],
                       preferred_element_type=jnp.float32)
               + bqkv_ref[...]).astype(jnp.bfloat16)            # (rows, 3D)

        # Key-padding mask (built only when the wrapper padded the token dim).
        if n_valid < n_pad:
            kvalid = jax.lax.broadcasted_iota(jnp.int32, (1, n_pad), 1) < n_valid
            neg = jnp.where(kvalid, 0.0, -1e30).astype(jnp.float32)
        else:
            neg = None

        scale = 1.0 / math.sqrt(d_head)
        # Attention per batch element inside the block; heads processed in
        # groups so each res_sc store covers >=128 lanes when d_head allows.
        for b in range(tb):
            r0 = b * n_pad
            for g0 in range(0, n_heads, heads_per_group):
                outs = []
                for h in range(g0, g0 + heads_per_group):
                    qh = qkv[r0:r0 + n_pad, h * d_head:(h + 1) * d_head]
                    kh = qkv[r0:r0 + n_pad, D + h * d_head:D + (h + 1) * d_head]
                    vh = qkv[r0:r0 + n_pad, 2 * D + h * d_head:2 * D + (h + 1) * d_head]
                    s = jax.lax.dot_general(                    # q @ k^T : (n_pad, n_pad)
                        qh, kh, (((1,), (1,)), ((), ())),
                        preferred_element_type=jnp.float32) * scale
                    if neg is not None:
                        s = s + neg
                    s = s - jnp.max(s, axis=-1, keepdims=True)
                    p = jnp.exp(s)
                    p = p * pl.reciprocal(jnp.sum(p, axis=-1, keepdims=True), approx=True)
                    outs.append(jnp.dot(p.astype(jnp.bfloat16), vh,
                                        preferred_element_type=jnp.float32))
                grp = outs[0] if len(outs) == 1 else jnp.concatenate(outs, axis=-1)
                res_sc[r0:r0 + n_pad,
                       g0 * d_head:(g0 + heads_per_group) * d_head] = grp

        out1 = x + res_sc[...]                                  # residual 1 (f32)

        # LayerNorm 2 (f32); store bf16 for the MLP matmuls.
        mu2 = jnp.mean(out1, axis=-1, keepdims=True)
        var2 = jnp.mean((out1 - mu2) * (out1 - mu2), axis=-1, keepdims=True)
        yn = (out1 - mu2) * jax.lax.rsqrt(var2 + eps) * g2_ref[...] + b2_ref[...]
        yn_sc[...] = yn.astype(jnp.bfloat16)

        # Accumulator starts at residual + MLP output bias -> bare epilogue store.
        acc_sc[...] = out1 + bb2_ref[...]

    # ---- MLP chunk over the 4*D hidden dim (every f-step) ----
    h1 = jnp.dot(yn_sc[...], w1_ref[...],
                 preferred_element_type=jnp.float32) + bb1_ref[...]      # (rows, TF) f32
    h1 = 0.5 * h1 * (1.0 + jax.lax.erf(h1 * (1.0 / math.sqrt(2.0))))     # exact GELU
    acc_sc[...] += jnp.dot(h1.astype(jnp.bfloat16), w2_ref[...],
                           preferred_element_type=jnp.float32)           # (rows, D) f32

    # ---- epilogue: single lane-dense store ----
    @pl.when(f == nf - 1)
    def _epilogue():
        o_ref[...] = acc_sc[...].reshape(tb, n_pad, D).astype(o_ref.dtype)


def vit_block(x, params, *, n_heads: int, eps: float = 1e-5,
              f_chunk: int = 512, tb_target: int = 2):
    """x: (B, N, D) float32; params: dict (see init_params)."""
    B, N, D = x.shape
    d_head = D // n_heads
    F = 4 * D

    # MLP hidden chunk (lane dim must be a multiple of 128, or cover all of F).
    # On v5e/v6e (128 MiB VMEM, MLP not DMA-bound) a larger f_chunk (1024-2048)
    # cuts per-step overhead and accumulator traffic; v7x keeps the default.
    if f_chunk < F and F % f_chunk == 0 and f_chunk % 128 == 0:
        TF = f_chunk
    else:
        TF = F
    NF = F // TF

    # Batch block: largest divisor of B that is <= tb_target.  Each streamed
    # w1/w2 chunk is then reused TB times (raises MLP arithmetic intensity).
    TB = 1
    for cand in range(min(tb_target, B), 0, -1):
        if B % cand == 0:
            TB = cand
            break

    # Pad the token dim to an MXU/layout-friendly multiple; padded key columns
    # are masked out of softmax inside the kernel, pad rows cropped below.
    pad_mult = 128 if N > 64 else 8
    Np = ((N + pad_mult - 1) // pad_mult) * pad_mult
    x_in = x if Np == N else jnp.pad(x, ((0, 0), (0, Np - N), (0, 0)))

    # Head grouping for lane-dense attention-output stores (>=128 lanes when
    # d_head allows, e.g. 2 heads/group for the typical ViT d_head=64).
    heads_per_group = max(1, min(n_heads, 128 // max(1, d_head)))
    while n_heads % heads_per_group:
        heads_per_group -= 1

    p = params
    bf16 = jnp.bfloat16
    # Fuse QKV weights/biases in the wrapper; matmul weights in bf16.
    wqkv = jnp.concatenate([p["wq"], p["wk"], p["wv"]], axis=1).astype(bf16)  # (D, 3D)
    bqkv = jnp.concatenate([p["bq"], p["bk"], p["bv"]], axis=1)               # (1, 3D) f32
    w1 = p["w1"].astype(bf16)                                                 # (D, 4D)
    w2 = p["w2"].astype(bf16)                                                 # (4D, D)

    # VMEM limit: ~3/4 of physical VMEM (~48 MiB v7x, ~96 MiB v5e/v6e).
    try:
        vmem_limit = min(int(pltpu.get_tpu_info().vmem_capacity_bytes) * 3 // 4,
                         100 * 1024 * 1024)
    except Exception:
        vmem_limit = None   # let the compiler pick its default

    kernel = functools.partial(_vit_block_kernel,
                               n_heads=n_heads, d_head=d_head, eps=eps,
                               tb=TB, n_valid=N, heads_per_group=heads_per_group)

    def build(single_buffer_consts: bool):
        const_kw = {"pipeline_mode": pl.Buffered(1)} if single_buffer_consts else {}

        def const2d(shape):
            return pl.BlockSpec(shape, lambda b, f: (0, 0), **const_kw)

        in_specs = [
            pl.BlockSpec((TB, Np, D), lambda b, f: (b, 0, 0)),   # x
            const2d((1, D)),                                     # g1
            const2d((1, D)),                                     # b1
            const2d((D, 3 * D)),                                 # wqkv (bf16)
            const2d((1, 3 * D)),                                 # bqkv
            const2d((1, D)),                                     # g2
            const2d((1, D)),                                     # b2
            pl.BlockSpec((D, TF), lambda b, f: (0, f)),          # w1 chunk (bf16)
            pl.BlockSpec((1, TF), lambda b, f: (0, f)),          # bb1 chunk
            pl.BlockSpec((TF, D), lambda b, f: (f, 0)),          # w2 chunk (bf16)
            const2d((1, D)),                                     # bb2
        ]
        return pl.pallas_call(
            kernel,
            out_shape=jax.ShapeDtypeStruct((B, Np, D), x.dtype),
            grid_spec=pltpu.PrefetchScalarGridSpec(
                num_scalar_prefetch=0,
                grid=(B // TB, NF),          # f (reduction) axis MUST stay innermost
                in_specs=in_specs,
                out_specs=pl.BlockSpec((TB, Np, D), lambda b, f: (b, 0, 0)),
                scratch_shapes=[
                    pltpu.VMEM((TB * Np, D), jnp.float32),   # attn out / residual
                    pltpu.VMEM((TB * Np, D), jnp.bfloat16),  # LN2 output for MLP
                    pltpu.VMEM((TB * Np, D), jnp.float32),   # MLP accumulator
                ],
            ),
            compiler_params=pltpu.CompilerParams(
                dimension_semantics=("parallel", "arbitrary"),
                vmem_limit_bytes=vmem_limit,
            ),
        )

    args = (x_in, p["g1"], p["b1"], wqkv, bqkv, p["g2"], p["b2"],
            w1, p["bb1"], w2, p["bb2"])
    try:
        out = jax.block_until_ready(build(True)(*args))
    except Exception:
        # Installed Pallas rejected single-buffered constant specs (or the
        # optimized build failed for another reason): fall back to defaults.
        out = build(False)(*args)
    return out if Np == N else out[:, :N, :]


def init_params(key, hidden_d, n_heads):
    """Deterministic synthetic parameters (block-diagonal QKV from per-head linears)."""
    d_head = hidden_d // n_heads
    ks = jax.random.split(key, 12)

    def blockdiag(subkey):
        heads = jax.random.normal(subkey, (n_heads, d_head, d_head), jnp.float32) * 0.1
        w = jnp.zeros((hidden_d, hidden_d), jnp.float32)
        for h in range(n_heads):
            w = w.at[h * d_head:(h + 1) * d_head, h * d_head:(h + 1) * d_head].set(heads[h])
        return w

    params = dict(
        g1=jnp.ones((1, hidden_d), jnp.float32),
        b1=jnp.zeros((1, hidden_d), jnp.float32),
        wq=blockdiag(ks[0]),
        bq=jax.random.normal(ks[1], (1, hidden_d), jnp.float32) * 0.01,
        wk=blockdiag(ks[2]),
        bk=jax.random.normal(ks[3], (1, hidden_d), jnp.float32) * 0.01,
        wv=blockdiag(ks[4]),
        bv=jax.random.normal(ks[5], (1, hidden_d), jnp.float32) * 0.01,
        g2=jnp.ones((1, hidden_d), jnp.float32),
        b2=jnp.zeros((1, hidden_d), jnp.float32),
        w1=jax.random.normal(ks[6], (hidden_d, 4 * hidden_d), jnp.float32) * 0.05,
        bb1=jax.random.normal(ks[7], (1, 4 * hidden_d), jnp.float32) * 0.01,
        w2=jax.random.normal(ks[8], (4 * hidden_d, hidden_d), jnp.float32) * 0.05,
        bb2=jax.random.normal(ks[9], (1, hidden_d), jnp.float32) * 0.01,
    )
    return params


def vit_block_ref(x, p, *, n_heads, eps=1e-5):
    """Pure-JAX f32 reference for validation."""
    B, N, D = x.shape
    dh = D // n_heads

    def ln(v, g, b):
        mu = jnp.mean(v, -1, keepdims=True)
        var = jnp.mean((v - mu) ** 2, -1, keepdims=True)
        return (v - mu) / jnp.sqrt(var + eps) * g + b

    xn = ln(x, p["g1"], p["b1"])
    q = xn @ p["wq"] + p["bq"]
    k = xn @ p["wk"] + p["bk"]
    v = xn @ p["wv"] + p["bv"]
    q = q.reshape(B, N, n_heads, dh).transpose(0, 2, 1, 3)
    k = k.reshape(B, N, n_heads, dh).transpose(0, 2, 1, 3)
    v = v.reshape(B, N, n_heads, dh).transpose(0, 2, 1, 3)
    s = jnp.einsum("bhqd,bhkd->bhqk", q, k) / math.sqrt(dh)
    a = jax.nn.softmax(s, axis=-1)
    attn = jnp.einsum("bhqk,bhkd->bhqd", a, v).transpose(0, 2, 1, 3).reshape(B, N, D)
    out1 = x + attn
    yn = ln(out1, p["g2"], p["b2"])
    h = yn @ p["w1"] + p["bb1"]
    h = 0.5 * h * (1.0 + jax.lax.erf(h / math.sqrt(2.0)))
    return out1 + (h @ p["w2"] + p["bb2"])


if __name__ == "__main__":
    def run_case(B, N, hidden_d, n_heads, f_chunk):
        key = jax.random.PRNGKey(0)
        kx, kp = jax.random.split(key)
        x = jax.random.normal(kx, (B, N, hidden_d), jnp.float32)
        params = init_params(kp, hidden_d, n_heads)
        out = vit_block(x, params, n_heads=n_heads, f_chunk=f_chunk)
        out = jax.block_until_ready(out)
        ref = vit_block_ref(x, params, n_heads=n_heads)
        assert out.shape == (B, N, hidden_d)
        # bf16 matmul inputs + approx softmax reciprocal => compare against the
        # f32 reference with a correspondingly loosened tolerance.
        assert jnp.allclose(out, ref, atol=3e-2, rtol=3e-2), (
            f"mismatch vs JAX reference for case {(B, N, hidden_d, n_heads)}")

    # Case 1: batch-blocked (TB=2), padded token dim (12 -> 16, exercises the
    # softmax key mask) and a 2-chunk MLP reduction (f_chunk=128 < 4*64).
    run_case(B=2, N=12, hidden_d=64, n_heads=4, f_chunk=128)
    # Case 2: odd batch (TB=1, 3 batch grid steps), no padding, single MLP chunk.
    run_case(B=3, N=8, hidden_d=32, n_heads=4, f_chunk=512)

    print("KERNEL_OK")
</pallas_src>

<mosaic_0001>
module attributes {stable_mosaic.version = 11 : i64} {
  func.func @_vit_block_kernel(%arg0: i32, %arg1: i32, %arg2: memref<2x16x64xf32, #tpu.memory_space<vmem>>, %arg3: memref<1x64xf32, #tpu.memory_space<vmem>>, %arg4: memref<1x64xf32, #tpu.memory_space<vmem>>, %arg5: memref<64x192xbf16, #tpu.memory_space<vmem>>, %arg6: memref<1x192xf32, #tpu.memory_space<vmem>>, %arg7: memref<1x64xf32, #tpu.memory_space<vmem>>, %arg8: memref<1x64xf32, #tpu.memory_space<vmem>>, %arg9: memref<64x128xbf16, #tpu.memory_space<vmem>>, %arg10: memref<1x128xf32, #tpu.memory_space<vmem>>, %arg11: memref<128x64xbf16, #tpu.memory_space<vmem>>, %arg12: memref<1x64xf32, #tpu.memory_space<vmem>>, %arg13: memref<2x16x64xf32, #tpu.memory_space<vmem>>, %arg14: memref<32x64xf32, #tpu.memory_space<vmem>>, %arg15: memref<32x64xbf16, #tpu.memory_space<vmem>>, %arg16: memref<32x64xf32, #tpu.memory_space<vmem>>) attributes {dimension_semantics = [#tpu.dimension_semantics<parallel>, #tpu.dimension_semantics<arbitrary>], iteration_bounds = array<i64: 1, 2>, scalar_prefetch = 0 : i64, scratch_operands = 3 : i64, tpu.core_type = #tpu.core_type<tc>, window_params = [{transform_indices = @transform_0, window_bounds = array<i64: 2, 16, 64>}, {pipeline_mode = #tpu.pipeline_mode<synchronous>, transform_indices = @transform_1, window_bounds = array<i64: 1, 64>}, {pipeline_mode = #tpu.pipeline_mode<synchronous>, transform_indices = @transform_2, window_bounds = array<i64: 1, 64>}, {pipeline_mode = #tpu.pipeline_mode<synchronous>, transform_indices = @transform_3, window_bounds = array<i64: 64, 192>}, {pipeline_mode = #tpu.pipeline_mode<synchronous>, transform_indices = @transform_4, window_bounds = array<i64: 1, 192>}, {pipeline_mode = #tpu.pipeline_mode<synchronous>, transform_indices = @transform_5, window_bounds = array<i64: 1, 64>}, {pipeline_mode = #tpu.pipeline_mode<synchronous>, transform_indices = @transform_6, window_bounds = array<i64: 1, 64>}, {transform_indices = @transform_7, window_bounds = array<i64: 64, 128>}, {transform_indices = @transform_8, window_bounds = array<i64: 1, 128>}, {transform_indices = @transform_9, window_bounds = array<i64: 128, 64>}, {pipeline_mode = #tpu.pipeline_mode<synchronous>, transform_indices = @transform_10, window_bounds = array<i64: 1, 64>}, {transform_indices = @transform_11, window_bounds = array<i64: 2, 16, 64>}]} {
    %c0_i32 = arith.constant 0 : i32
    %0 = arith.cmpi eq, %arg1, %c0_i32 : i32
    %1 = arith.extui %0 : i1 to i32
    %c0_i32_0 = arith.constant 0 : i32
    %2 = arith.cmpi ne, %1, %c0_i32_0 : i32
    scf.if %2 {
      %c0_17 = arith.constant 0 : index
      %c0_18 = arith.constant 0 : index
      %c0_19 = arith.constant 0 : index
      %26 = vector.load %arg2[%c0_17, %c0_18, %c0_19] : memref<2x16x64xf32, #tpu.memory_space<vmem>>, vector<2x16x64xf32>
      %27 = vector.shape_cast %26 : vector<2x16x64xf32> to vector<32x64xf32>
      %cst_20 = arith.constant dense<0.000000e+00> : vector<32xf32>
      %28 = vector.multi_reduction <add>, %27, %cst_20 [1] : vector<32x64xf32> to vector<32xf32>
      %29 = vector.shape_cast %28 : vector<32xf32> to vector<32x1xf32>
      %cst_21 = arith.constant 6.400000e+01 : f32
      %30 = vector.broadcast %cst_21 : f32 to vector<32x1xf32>
      %31 = arith.divf %29, %30 : vector<32x1xf32>
      %32 = vector.broadcast %31 : vector<32x1xf32> to vector<32x64xf32>
      %33 = arith.subf %27, %32 : vector<32x64xf32>
      %34 = vector.broadcast %31 : vector<32x1xf32> to vector<32x64xf32>
      %35 = arith.subf %27, %34 : vector<32x64xf32>
      %36 = arith.mulf %33, %35 : vector<32x64xf32>
      %cst_22 = arith.constant dense<0.000000e+00> : vector<32xf32>
      %37 = vector.multi_reduction <add>, %36, %cst_22 [1] : vector<32x64xf32> to vector<32xf32>
      %38 = vector.shape_cast %37 : vector<32xf32> to vector<32x1xf32>
      %cst_23 = arith.constant 6.400000e+01 : f32
      %39 = vector.broadcast %cst_23 : f32 to vector<32x1xf32>
      %40 = arith.divf %38, %39 : vector<32x1xf32>
      %41 = vector.broadcast %31 : vector<32x1xf32> to vector<32x64xf32>
      %42 = arith.subf %27, %41 : vector<32x64xf32>
      %cst_24 = arith.constant 9.99999974E-6 : f32
      %43 = vector.broadcast %cst_24 : f32 to vector<32x1xf32>
      %44 = arith.addf %40, %43 : vector<32x1xf32>
      %45 = math.rsqrt %44 : vector<32x1xf32>
      %46 = vector.broadcast %45 : vector<32x1xf32> to vector<32x64xf32>
      %47 = arith.mulf %42, %46 : vector<32x64xf32>
      %c0_25 = arith.constant 0 : index
      %c0_26 = arith.constant 0 : index
      %48 = vector.load %arg3[%c0_25, %c0_26] : memref<1x64xf32, #tpu.memory_space<vmem>>, vector<1x64xf32>
      %49 = vector.broadcast %48 : vector<1x64xf32> to vector<32x64xf32>
      %50 = arith.mulf %47, %49 : vector<32x64xf32>
      %c0_27 = arith.constant 0 : index
      %c0_28 = arith.constant 0 : index
      %51 = vector.load %arg4[%c0_27, %c0_28] : memref<1x64xf32, #tpu.memory_space<vmem>>, vector<1x64xf32>
      %52 = vector.broadcast %51 : vector<1x64xf32> to vector<32x64xf32>
      %53 = arith.addf %50, %52 : vector<32x64xf32>
      %54 = arith.truncf %53 : vector<32x64xf32> to vector<32x64xbf16>
      %c0_29 = arith.constant 0 : index
      %c0_30 = arith.constant 0 : index
      %55 = vector.load %arg5[%c0_29, %c0_30] : memref<64x192xbf16, #tpu.memory_space<vmem>>, vector<64x192xbf16>
      %cst_31 = arith.constant dense<0.000000e+00> : vector<32x192xf32>
      %56 = tpu.matmul %54, %55, %cst_31 {dimension_numbers = #tpu.dot_dimension_numbers<[1], [0], [0], [1], [0, 0, 1, 1], [], []>} : vector<32x64xbf16>, vector<64x192xbf16>, vector<32x192xf32> -> vector<32x192xf32>
      %c0_32 = arith.constant 0 : index
      %c0_33 = arith.constant 0 : index
      %57 = vector.load %arg6[%c0_32, %c0_33] : memref<1x192xf32, #tpu.memory_space<vmem>>, vector<1x192xf32>
      %58 = vector.broadcast %57 : vector<1x192xf32> to vector<32x192xf32>
      %59 = arith.addf %56, %58 : vector<32x192xf32>
      %60 = arith.truncf %59 : vector<32x192xf32> to vector<32x192xbf16>
      %61 = tpu.iota {dimensions = array<i32: 1>} : vector<1x16xi32>
      %c12_i32 = arith.constant 12 : i32
      %62 = vector.broadcast %c12_i32 : i32 to vector<1x16xi32>
      %63 = arith.cmpi slt, %61, %62 : vector<1x16xi32>
      %cst_34 = arith.constant 0.000000e+00 : f32
      %cst_35 = arith.constant -1.000000e+30 : f32
      %64 = vector.broadcast %cst_34 : f32 to vector<1x16xf32>
      %65 = vector.broadcast %cst_35 : f32 to vector<1x16xf32>
      %66 = arith.select %63, %64, %65 : vector<1x16xi1>, vector<1x16xf32>
      %67 = vector.extract_strided_slice %60 {offsets = [0, 0], sizes = [16, 16], strides = [1, 1]} : vector<32x192xbf16> to vector<16x16xbf16>
      %68 = vector.extract_strided_slice %60 {offsets = [0, 64], sizes = [16, 16], strides = [1, 1]} : vector<32x192xbf16> to vector<16x16xbf16>
      %69 = vector.extract_strided_slice %60 {offsets = [0, 128], sizes = [16, 16], strides = [1, 1]} : vector<32x192xbf16> to vector<16x16xbf16>
      %cst_36 = arith.constant dense<0.000000e+00> : vector<16x16xf32>
      %70 = tpu.matmul %67, %68, %cst_36 {dimension_numbers = #tpu.dot_dimension_numbers<[1], [1], [0], [0], [0, 0, 1, 0], [], []>} : vector<16x16xbf16>, vector<16x16xbf16>, vector<16x16xf32> -> vector<16x16xf32>
      %cst_37 = arith.constant 2.500000e-01 : f32
      %71 = vector.broadcast %cst_37 : f32 to vector<16x16xf32>
      %72 = arith.mulf %70, %71 : vector<16x16xf32>
      %73 = vector.broadcast %66 : vector<1x16xf32> to vector<16x16xf32>
      %74 = arith.addf %72, %73 : vector<16x16xf32>
      %cst_38 = arith.constant dense<0xFF800000> : vector<16xf32>
      %75 = vector.multi_reduction <maximumf>, %74, %cst_38 [1] : vector<16x16xf32> to vector<16xf32>
      %76 = vector.shape_cast %75 : vector<16xf32> to vector<16x1xf32>
      %77 = vector.broadcast %76 : vector<16x1xf32> to vector<16x16xf32>
      %78 = arith.subf %74, %77 : vector<16x16xf32>
      %79 = math.exp %78 : vector<16x16xf32>
      %cst_39 = arith.constant dense<0.000000e+00> : vector<16xf32>
      %80 = vector.multi_reduction <add>, %79, %cst_39 [1] : vector<16x16xf32> to vector<16xf32>
      %81 = vector.shape_cast %80 : vector<16xf32> to vector<16x1xf32>
      %82 = tpu.reciprocal %81 {approx = true} : vector<16x1xf32> -> vector<16x1xf32>
      %83 = vector.broadcast %82 : vector<16x1xf32> to vector<16x16xf32>
      %84 = arith.mulf %79, %83 : vector<16x16xf32>
      %85 = arith.truncf %84 : vector<16x16xf32> to vector<16x16xbf16>
      %cst_40 = arith.constant dense<0.000000e+00> : vector<16x16xf32>
      %86 = tpu.matmul %85, %69, %cst_40 {dimension_numbers = #tpu.dot_dimension_numbers<[1], [0], [0], [1], [0, 0, 1, 1], [], []>} : vector<16x16xbf16>, vector<16x16xbf16>, vector<16x16xf32> -> vector<16x16xf32>
      %87 = vector.extract_strided_slice %60 {offsets = [0, 16], sizes = [16, 16], strides = [1, 1]} : vector<32x192xbf16> to vector<16x16xbf16>
      %88 = vector.extract_strided_slice %60 {offsets = [0, 80], sizes = [16, 16], strides = [1, 1]} : vector<32x192xbf16> to vector<16x16xbf16>
      %89 = vector.extract_strided_slice %60 {offsets = [0, 144], sizes = [16, 16], strides = [1, 1]} : vector<32x192xbf16> to vector<16x16xbf16>
      %cst_41 = arith.constant dense<0.000000e+00> : vector<16x16xf32>
      %90 = tpu.matmul %87, %88, %cst_41 {dimension_numbers = #tpu.dot_dimension_numbers<[1], [1], [0], [0], [0, 0, 1, 0], [], []>} : vector<16x16xbf16>, vector<16x16xbf16>, vector<16x16xf32> -> vector<16x16xf32>
      %cst_42 = arith.constant 2.500000e-01 : f32
      %91 = vector.broadcast %cst_42 : f32 to vector<16x16xf32>
      %92 = arith.mulf %90, %91 : vector<16x16xf32>
      %93 = vector.broadcast %66 : vector<1x16xf32> to vector<16x16xf32>
      %94 = arith.addf %92, %93 : vector<16x16xf32>
      %cst_43 = arith.constant dense<0xFF800000> : vector<16xf32>
      %95 = vector.multi_reduction <maximumf>, %94, %cst_43 [1] : vector<16x16xf32> to vector<16xf32>
      %96 = vector.shape_cast %95 : vector<16xf32> to vector<16x1xf32>
      %97 = vector.broadcast %96 : vector<16x1xf32> to vector<16x16xf32>
      %98 = arith.subf %94, %97 : vector<16x16xf32>
      %99 = math.exp %98 : vector<16x16xf32>
      %cst_44 = arith.constant dense<0.000000e+00> : vector<16xf32>
      %100 = vector.multi_reduction <add>, %99, %cst_44 [1] : vector<16x16xf32> to vector<16xf32>
      %101 = vector.shape_cast %100 : vector<16xf32> to vector<16x1xf32>
      %102 = tpu.reciprocal %101 {approx = true} : vector<16x1xf32> -> vector<16x1xf32>
      %103 = vector.broadcast %102 : vector<16x1xf32> to vector<16x16xf32>
      %104 = arith.mulf %99, %103 : vector<16x16xf32>
      %105 = arith.truncf %104 : vector<16x16xf32> to vector<16x16xbf16>
      %cst_45 = arith.constant dense<0.000000e+00> : vector<16x16xf32>
      %106 = tpu.matmul %105, %89, %cst_45 {dimension_numbers = #tpu.dot_dimension_numbers<[1], [0], [0], [1], [0, 0, 1, 1], [], []>} : vector<16x16xbf16>, vector<16x16xbf16>, vector<16x16xf32> -> vector<16x16xf32>
      %107 = vector.extract_strided_slice %60 {offsets = [0, 32], sizes = [16, 16], strides = [1, 1]} : vector<32x192xbf16> to vector<16x16xbf16>
      %108 = vector.extract_strided_slice %60 {offsets = [0, 96], sizes = [16, 16], strides = [1, 1]} : vector<32x192xbf16> to vector<16x16xbf16>
      %109 = vector.extract_strided_slice %60 {offsets = [0, 160], sizes = [16, 16], strides = [1, 1]} : vector<32x192xbf16> to vector<16x16xbf16>
      %cst_46 = arith.constant dense<0.000000e+00> : vector<16x16xf32>
      %110 = tpu.matmul %107, %108, %cst_46 {dimension_numbers = #tpu.dot_dimension_numbers<[1], [1], [0], [0], [0, 0, 1, 0], [], []>} : vector<16x16xbf16>, vector<16x16xbf16>, vector<16x16xf32> -> vector<16x16xf32>
      %cst_47 = arith.constant 2.500000e-01 : f32
      %111 = vector.broadcast %cst_47 : f32 to vector<16x16xf32>
      %112 = arith.mulf %110, %111 : vector<16x16xf32>
      %113 = vector.broadcast %66 : vector<1x16xf32> to vector<16x16xf32>
      %114 = arith.addf %112, %113 : vector<16x16xf32>
      %cst_48 = arith.constant dense<0xFF800000> : vector<16xf32>
      %115 = vector.multi_reduction <maximumf>, %114, %cst_48 [1] : vector<16x16xf32> to vector<16xf32>
      %116 = vector.shape_cast %115 : vector<16xf32> to vector<16x1xf32>
      %117 = vector.broadcast %116 : vector<16x1xf32> to vector<16x16xf32>
      %118 = arith.subf %114, %117 : vector<16x16xf32>
      %119 = math.exp %118 : vector<16x16xf32>
      %cst_49 = arith.constant dense<0.000000e+00> : vector<16xf32>
      %120 = vector.multi_reduction <add>, %119, %cst_49 [1] : vector<16x16xf32> to vector<16xf32>
      %121 = vector.shape_cast %120 : vector<16xf32> to vector<16x1xf32>
      %122 = tpu.reciprocal %121 {approx = true} : vector<16x1xf32> -> vector<16x1xf32>
      %123 = vector.broadcast %122 : vector<16x1xf32> to vector<16x16xf32>
      %124 = arith.mulf %119, %123 : vector<16x16xf32>
      %125 = arith.truncf %124 : vector<16x16xf32> to vector<16x16xbf16>
      %cst_50 = arith.constant dense<0.000000e+00> : vector<16x16xf32>
      %126 = tpu.matmul %125, %109, %cst_50 {dimension_numbers = #tpu.dot_dimension_numbers<[1], [0], [0], [1], [0, 0, 1, 1], [], []>} : vector<16x16xbf16>, vector<16x16xbf16>, vector<16x16xf32> -> vector<16x16xf32>
      %127 = vector.extract_strided_slice %60 {offsets = [0, 48], sizes = [16, 16], strides = [1, 1]} : vector<32x192xbf16> to vector<16x16xbf16>
      %128 = vector.extract_strided_slice %60 {offsets = [0, 112], sizes = [16, 16], strides = [1, 1]} : vector<32x192xbf16> to vector<16x16xbf16>
      %129 = vector.extract_strided_slice %60 {offsets = [0, 176], sizes = [16, 16], strides = [1, 1]} : vector<32x192xbf16> to vector<16x16xbf16>
      %cst_51 = arith.constant dense<0.000000e+00> : vector<16x16xf32>
      %130 = tpu.matmul %127, %128, %cst_51 {dimension_numbers = #tpu.dot_dimension_numbers<[1], [1], [0], [0], [0, 0, 1, 0], [], []>} : vector<16x16xbf16>, vector<16x16xbf16>, vector<16x16xf32> -> vector<16x16xf32>
      %cst_52 = arith.constant 2.500000e-01 : f32
      %131 = vector.broadcast %cst_52 : f32 to vector<16x16xf32>
      %132 = arith.mulf %130, %131 : vector<16x16xf32>
      %133 = vector.broadcast %66 : vector<1x16xf32> to vector<16x16xf32>
      %134 = arith.addf %132, %133 : vector<16x16xf32>
      %cst_53 = arith.constant dense<0xFF800000> : vector<16xf32>
      %135 = vector.multi_reduction <maximumf>, %134, %cst_53 [1] : vector<16x16xf32> to vector<16xf32>
      %136 = vector.shape_cast %135 : vector<16xf32> to vector<16x1xf32>
      %137 = vector.broadcast %136 : vector<16x1xf32> to vector<16x16xf32>
      %138 = arith.subf %134, %137 : vector<16x16xf32>
      %139 = math.exp %138 : vector<16x16xf32>
      %cst_54 = arith.constant dense<0.000000e+00> : vector<16xf32>
      %140 = vector.multi_reduction <add>, %139, %cst_54 [1] : vector<16x16xf32> to vector<16xf32>
      %141 = vector.shape_cast %140 : vector<16xf32> to vector<16x1xf32>
      %142 = tpu.reciprocal %141 {approx = true} : vector<16x1xf32> -> vector<16x1xf32>
      %143 = vector.broadcast %142 : vector<16x1xf32> to vector<16x16xf32>
      %144 = arith.mulf %139, %143 : vector<16x16xf32>
      %145 = arith.truncf %144 : vector<16x16xf32> to vector<16x16xbf16>
      %cst_55 = arith.constant dense<0.000000e+00> : vector<16x16xf32>
      %146 = tpu.matmul %145, %129, %cst_55 {dimension_numbers = #tpu.dot_dimension_numbers<[1], [0], [0], [1], [0, 0, 1, 1], [], []>} : vector<16x16xbf16>, vector<16x16xbf16>, vector<16x16xf32> -> vector<16x16xf32>
      %147 = tpu.concatenate %86, %106, %126, %146 in 1 : vector<16x16xf32>, vector<16x16xf32>, vector<16x16xf32>, vector<16x16xf32> -> vector<16x64xf32>
      %c0_56 = arith.constant 0 : index
      %c0_57 = arith.constant 0 : index
      %148 = vector.load %arg14[%c0_56, %c0_57] : memref<32x64xf32, #tpu.memory_space<vmem>>, vector<16x64xf32>
      tpu.vector_store %arg14[%c0_56, %c0_57], %147 {strides = array<i32>} : memref<32x64xf32, #tpu.memory_space<vmem>>, vector<16x64xf32>,
      %149 = vector.extract_strided_slice %60 {offsets = [16, 0], sizes = [16, 16], strides = [1, 1]} : vector<32x192xbf16> to vector<16x16xbf16>
      %150 = vector.extract_strided_slice %60 {offsets = [16, 64], sizes = [16, 16], strides = [1, 1]} : vector<32x192xbf16> to vector<16x16xbf16>
      %151 = vector.extract_strided_slice %60 {offsets = [16, 128], sizes = [16, 16], strides = [1, 1]} : vector<32x192xbf16> to vector<16x16xbf16>
      %cst_58 = arith.constant dense<0.000000e+00> : vector<16x16xf32>
      %152 = tpu.matmul %149, %150, %cst_58 {dimension_numbers = #tpu.dot_dimension_numbers<[1], [1], [0], [0], [0, 0, 1, 0], [], []>} : vector<16x16xbf16>, vector<16x16xbf16>, vector<16x16xf32> -> vector<16x16xf32>
      %cst_59 = arith.constant 2.500000e-01 : f32
      %153 = vector.broadcast %cst_59 : f32 to vector<16x16xf32>
      %154 = arith.mulf %152, %153 : vector<16x16xf32>
      %155 = vector.broadcast %66 : vector<1x16xf32> to vector<16x16xf32>
      %156 = arith.addf %154, %155 : vector<16x16xf32>
      %cst_60 = arith.constant dense<0xFF800000> : vector<16xf32>
      %157 = vector.multi_reduction <maximumf>, %156, %cst_60 [1] : vector<16x16xf32> to vector<16xf32>
      %158 = vector.shape_cast %157 : vector<16xf32> to vector<16x1xf32>
      %159 = vector.broadcast %158 : vector<16x1xf32> to vector<16x16xf32>
      %160 = arith.subf %156, %159 : vector<16x16xf32>
      %161 = math.exp %160 : vector<16x16xf32>
      %cst_61 = arith.constant dense<0.000000e+00> : vector<16xf32>
      %162 = vector.multi_reduction <add>, %161, %cst_61 [1] : vector<16x16xf32> to vector<16xf32>
      %163 = vector.shape_cast %162 : vector<16xf32> to vector<16x1xf32>
      %164 = tpu.reciprocal %163 {approx = true} : vector<16x1xf32> -> vector<16x1xf32>
      %165 = vector.broadcast %164 : vector<16x1xf32> to vector<16x16xf32>
      %166 = arith.mulf %161, %165 : vector<16x16xf32>
      %167 = arith.truncf %166 : vector<16x16xf32> to vector<16x16xbf16>
      %cst_62 = arith.constant dense<0.000000e+00> : vector<16x16xf32>
      %168 = tpu.matmul %167, %151, %cst_62 {dimension_numbers = #tpu.dot_dimension_numbers<[1], [0], [0], [1], [0, 0, 1, 1], [], []>} : vector<16x16xbf16>, vector<16x16xbf16>, vector<16x16xf32> -> vector<16x16xf32>
      %169 = vector.extract_strided_slice %60 {offsets = [16, 16], sizes = [16, 16], strides = [1, 1]} : vector<32x192xbf16> to vector<16x16xbf16>
      %170 = vector.extract_strided_slice %60 {offsets = [16, 80], sizes = [16, 16], strides = [1, 1]} : vector<32x192xbf16> to vector<16x16xbf16>
      %171 = vector.extract_strided_slice %60 {offsets = [16, 144], sizes = [16, 16], strides = [1, 1]} : vector<32x192xbf16> to vector<16x16xbf16>
      %cst_63 = arith.constant dense<0.000000e+00> : vector<16x16xf32>
      %172 = tpu.matmul %169, %170, %cst_63 {dimension_numbers = #tpu.dot_dimension_numbers<[1], [1], [0], [0], [0, 0, 1, 0], [], []>} : vector<16x16xbf16>, vector<16x16xbf16>, vector<16x16xf32> -> vector<16x16xf32>
      %cst_64 = arith.constant 2.500000e-01 : f32
      %173 = vector.broadcast %cst_64 : f32 to vector<16x16xf32>
      %174 = arith.mulf %172, %173 : vector<16x16xf32>
      %175 = vector.broadcast %66 : vector<1x16xf32> to vector<16x16xf32>
      %176 = arith.addf %174, %175 : vector<16x16xf32>
      %cst_65 = arith.constant dense<0xFF800000> : vector<16xf32>
      %177 = vector.multi_reduction <maximumf>, %176, %cst_65 [1] : vector<16x16xf32> to vector<16xf32>
      %178 = vector.shape_cast %177 : vector<16xf32> to vector<16x1xf32>
      %179 = vector.broadcast %178 : vector<16x1xf32> to vector<16x16xf32>
      %180 = arith.subf %176, %179 : vector<16x16xf32>
      %181 = math.exp %180 : vector<16x16xf32>
      %cst_66 = arith.constant dense<0.000000e+00> : vector<16xf32>
      %182 = vector.multi_reduction <add>, %181, %cst_66 [1] : vector<16x16xf32> to vector<16xf32>
      %183 = vector.shape_cast %182 : vector<16xf32> to vector<16x1xf32>
      %184 = tpu.reciprocal %183 {approx = true} : vector<16x1xf32> -> vector<16x1xf32>
      %185 = vector.broadcast %184 : vector<16x1xf32> to vector<16x16xf32>
      %186 = arith.mulf %181, %185 : vector<16x16xf32>
      %187 = arith.truncf %186 : vector<16x16xf32> to vector<16x16xbf16>
      %cst_67 = arith.constant dense<0.000000e+00> : vector<16x16xf32>
      %188 = tpu.matmul %187, %171, %cst_67 {dimension_numbers = #tpu.dot_dimension_numbers<[1], [0], [0], [1], [0, 0, 1, 1], [], []>} : vector<16x16xbf16>, vector<16x16xbf16>, vector<16x16xf32> -> vector<16x16xf32>
      %189 = vector.extract_strided_slice %60 {offsets = [16, 32], sizes = [16, 16], strides = [1, 1]} : vector<32x192xbf16> to vector<16x16xbf16>
      %190 = vector.extract_strided_slice %60 {offsets = [16, 96], sizes = [16, 16], strides = [1, 1]} : vector<32x192xbf16> to vector<16x16xbf16>
      %191 = vector.extract_strided_slice %60 {offsets = [16, 160], sizes = [16, 16], strides = [1, 1]} : vector<32x192xbf16> to vector<16x16xbf16>
      %cst_68 = arith.constant dense<0.000000e+00> : vector<16x16xf32>
      %192 = tpu.matmul %189, %190, %cst_68 {dimension_numbers = #tpu.dot_dimension_numbers<[1], [1], [0], [0], [0, 0, 1, 0], [], []>} : vector<16x16xbf16>, vector<16x16xbf16>, vector<16x16xf32> -> vector<16x16xf32>
      %cst_69 = arith.constant 2.500000e-01 : f32
      %193 = vector.broadcast %cst_69 : f32 to vector<16x16xf32>
      %194 = arith.mulf %192, %193 : vector<16x16xf32>
      %195 = vector.broadcast %66 : vector<1x16xf32> to vector<16x16xf32>
      %196 = arith.addf %194, %195 : vector<16x16xf32>
      %cst_70 = arith.constant dense<0xFF800000> : vector<16xf32>
      %197 = vector.multi_reduction <maximumf>, %196, %cst_70 [1] : vector<16x16xf32> to vector<16xf32>
      %198 = vector.shape_cast %197 : vector<16xf32> to vector<16x1xf32>
      %199 = vector.broadcast %198 : vector<16x1xf32> to vector<16x16xf32>
      %200 = arith.subf %196, %199 : vector<16x16xf32>
      %201 = math.exp %200 : vector<16x16xf32>
      %cst_71 = arith.constant dense<0.000000e+00> : vector<16xf32>
      %202 = vector.multi_reduction <add>, %201, %cst_71 [1] : vector<16x16xf32> to vector<16xf32>
      %203 = vector.shape_cast %202 : vector<16xf32> to vector<16x1xf32>
      %204 = tpu.reciprocal %203 {approx = true} : vector<16x1xf32> -> vector<16x1xf32>
      %205 = vector.broadcast %204 : vector<16x1xf32> to vector<16x16xf32>
      %206 = arith.mulf %201, %205 : vector<16x16xf32>
      %207 = arith.truncf %206 : vector<16x16xf32> to vector<16x16xbf16>
      %cst_72 = arith.constant dense<0.000000e+00> : vector<16x16xf32>
      %208 = tpu.matmul %207, %191, %cst_72 {dimension_numbers = #tpu.dot_dimension_numbers<[1], [0], [0], [1], [0, 0, 1, 1], [], []>} : vector<16x16xbf16>, vector<16x16xbf16>, vector<16x16xf32> -> vector<16x16xf32>
      %209 = vector.extract_strided_slice %60 {offsets = [16, 48], sizes = [16, 16], strides = [1, 1]} : vector<32x192xbf16> to vector<16x16xbf16>
      %210 = vector.extract_strided_slice %60 {offsets = [16, 112], sizes = [16, 16], strides = [1, 1]} : vector<32x192xbf16> to vector<16x16xbf16>
      %211 = vector.extract_strided_slice %60 {offsets = [16, 176], sizes = [16, 16], strides = [1, 1]} : vector<32x192xbf16> to vector<16x16xbf16>
      %cst_73 = arith.constant dense<0.000000e+00> : vector<16x16xf32>
      %212 = tpu.matmul %209, %210, %cst_73 {dimension_numbers = #tpu.dot_dimension_numbers<[1], [1], [0], [0], [0, 0, 1, 0], [], []>} : vector<16x16xbf16>, vector<16x16xbf16>, vector<16x16xf32> -> vector<16x16xf32>
      %cst_74 = arith.constant 2.500000e-01 : f32
      %213 = vector.broadcast %cst_74 : f32 to vector<16x16xf32>
      %214 = arith.mulf %212, %213 : vector<16x16xf32>
      %215 = vector.broadcast %66 : vector<1x16xf32> to vector<16x16xf32>
      %216 = arith.addf %214, %215 : vector<16x16xf32>
      %cst_75 = arith.constant dense<0xFF800000> : vector<16xf32>
      %217 = vector.multi_reduction <maximumf>, %216, %cst_75 [1] : vector<16x16xf32> to vector<16xf32>
      %218 = vector.shape_cast %217 : vector<16xf32> to vector<16x1xf32>
      %219 = vector.broadcast %218 : vector<16x1xf32> to vector<16x16xf32>
      %220 = arith.subf %216, %219 : vector<16x16xf32>
      %221 = math.exp %220 : vector<16x16xf32>
      %cst_76 = arith.constant dense<0.000000e+00> : vector<16xf32>
      %222 = vector.multi_reduction <add>, %221, %cst_76 [1] : vector<16x16xf32> to vector<16xf32>
      %223 = vector.shape_cast %222 : vector<16xf32> to vector<16x1xf32>
      %224 = tpu.reciprocal %223 {approx = true} : vector<16x1xf32> -> vector<16x1xf32>
      %225 = vector.broadcast %224 : vector<16x1xf32> to vector<16x16xf32>
      %226 = arith.mulf %221, %225 : vector<16x16xf32>
      %227 = arith.truncf %226 : vector<16x16xf32> to vector<16x16xbf16>
      %cst_77 = arith.constant dense<0.000000e+00> : vector<16x16xf32>
      %228 = tpu.matmul %227, %211, %cst_77 {dimension_numbers = #tpu.dot_dimension_numbers<[1], [0], [0], [1], [0, 0, 1, 1], [], []>} : vector<16x16xbf16>, vector<16x16xbf16>, vector<16x16xf32> -> vector<16x16xf32>
      %229 = tpu.concatenate %168, %188, %208, %228 in 1 : vector<16x16xf32>, vector<16x16xf32>, vector<16x16xf32>, vector<16x16xf32> -> vector<16x64xf32>
      %c16 = arith.constant 16 : index
      %c0_78 = arith.constant 0 : index
      %230 = vector.load %arg14[%c16, %c0_78] : memref<32x64xf32, #tpu.memory_space<vmem>>, vector<16x64xf32>
      tpu.vector_store %arg14[%c16, %c0_78], %229 {strides = array<i32>} : memref<32x64xf32, #tpu.memory_space<vmem>>, vector<16x64xf32>,
      %c0_79 = arith.constant 0 : index
      %c0_80 = arith.constant 0 : index
      %231 = vector.load %arg14[%c0_79, %c0_80] : memref<32x64xf32, #tpu.memory_space<vmem>>, vector<32x64xf32>
      %232 = arith.addf %27, %231 : vector<32x64xf32>
      %cst_81 = arith.constant dense<0.000000e+00> : vector<32xf32>
      %233 = vector.multi_reduction <add>, %232, %cst_81 [1] : vector<32x64xf32> to vector<32xf32>
      %234 = vector.shape_cast %233 : vector<32xf32> to vector<32x1xf32>
      %cst_82 = arith.constant 6.400000e+01 : f32
      %235 = vector.broadcast %cst_82 : f32 to vector<32x1xf32>
      %236 = arith.divf %234, %235 : vector<32x1xf32>
      %237 = vector.broadcast %236 : vector<32x1xf32> to vector<32x64xf32>
      %238 = arith.subf %232, %237 : vector<32x64xf32>
      %239 = vector.broadcast %236 : vector<32x1xf32> to vector<32x64xf32>
      %240 = arith.subf %232, %239 : vector<32x64xf32>
      %241 = arith.mulf %238, %240 : vector<32x64xf32>
      %cst_83 = arith.constant dense<0.000000e+00> : vector<32xf32>
      %242 = vector.multi_reduction <add>, %241, %cst_83 [1] : vector<32x64xf32> to vector<32xf32>
      %243 = vector.shape_cast %242 : vector<32xf32> to vector<32x1xf32>
      %cst_84 = arith.constant 6.400000e+01 : f32
      %244 = vector.broadcast %cst_84 : f32 to vector<32x1xf32>
      %245 = arith.divf %243, %244 : vector<32x1xf32>
      %246 = vector.broadcast %236 : vector<32x1xf32> to vector<32x64xf32>
      %247 = arith.subf %232, %246 : vector<32x64xf32>
      %cst_85 = arith.constant 9.99999974E-6 : f32
      %248 = vector.broadcast %cst_85 : f32 to vector<32x1xf32>
      %249 = arith.addf %245, %248 : vector<32x1xf32>
      %250 = math.rsqrt %249 : vector<32x1xf32>
      %251 = vector.broadcast %250 : vector<32x1xf32> to vector<32x64xf32>
      %252 = arith.mulf %247, %251 : vector<32x64xf32>
      %c0_86 = arith.constant 0 : index
      %c0_87 = arith.constant 0 : index
      %253 = vector.load %arg7[%c0_86, %c0_87] : memref<1x64xf32, #tpu.memory_space<vmem>>, vector<1x64xf32>
      %254 = vector.broadcast %253 : vector<1x64xf32> to vector<32x64xf32>
      %255 = arith.mulf %252, %254 : vector<32x64xf32>
      %c0_88 = arith.constant 0 : index
      %c0_89 = arith.constant 0 : index
      %256 = vector.load %arg8[%c0_88, %c0_89] : memref<1x64xf32, #tpu.memory_space<vmem>>, vector<1x64xf32>
      %257 = vector.broadcast %256 : vector<1x64xf32> to vector<32x64xf32>
      %258 = arith.addf %255, %257 : vector<32x64xf32>
      %259 = arith.truncf %258 : vector<32x64xf32> to vector<32x64xbf16>
      %c0_90 = arith.constant 0 : index
      %c0_91 = arith.constant 0 : index
      %260 = vector.load %arg15[%c0_90, %c0_91] : memref<32x64xbf16, #tpu.memory_space<vmem>>, vector<32x64xbf16>
      tpu.vector_store %arg15[%c0_90, %c0_91], %259 {strides = array<i32>} : memref<32x64xbf16, #tpu.memory_space<vmem>>, vector<32x64xbf16>,
      %c0_92 = arith.constant 0 : index
      %c0_93 = arith.constant 0 : index
      %261 = vector.load %arg12[%c0_92, %c0_93] : memref<1x64xf32, #tpu.memory_space<vmem>>, vector<1x64xf32>
      %262 = vector.broadcast %261 : vector<1x64xf32> to vector<32x64xf32>
      %263 = arith.addf %232, %262 : vector<32x64xf32>
      %c0_94 = arith.constant 0 : index
      %c0_95 = arith.constant 0 : index
      %264 = vector.load %arg16[%c0_94, %c0_95] : memref<32x64xf32, #tpu.memory_space<vmem>>, vector<32x64xf32>
      tpu.vector_store %arg16[%c0_94, %c0_95], %263 {strides = array<i32>} : memref<32x64xf32, #tpu.memory_space<vmem>>, vector<32x64xf32>,
    } else {
    }
    %c0 = arith.constant 0 : index
    %c0_1 = arith.constant 0 : index
    %3 = vector.load %arg15[%c0, %c0_1] : memref<32x64xbf16, #tpu.memory_space<vmem>>, vector<32x64xbf16>
    %c0_2 = arith.constant 0 : index
    %c0_3 = arith.constant 0 : index
    %4 = vector.load %arg9[%c0_2, %c0_3] : memref<64x128xbf16, #tpu.memory_space<vmem>>, vector<64x128xbf16>
    %cst = arith.constant dense<0.000000e+00> : vector<32x128xf32>
    %5 = tpu.matmul %3, %4, %cst {dimension_numbers = #tpu.dot_dimension_numbers<[1], [0], [0], [1], [0, 0, 1, 1], [], []>} : vector<32x64xbf16>, vector<64x128xbf16>, vector<32x128xf32> -> vector<32x128xf32>
    %c0_4 = arith.constant 0 : index
    %c0_5 = arith.constant 0 : index
    %6 = vector.load %arg10[%c0_4, %c0_5] : memref<1x128xf32, #tpu.memory_space<vmem>>, vector<1x128xf32>
    %7 = vector.broadcast %6 : vector<1x128xf32> to vector<32x128xf32>
    %8 = arith.addf %5, %7 : vector<32x128xf32>
    %cst_6 = arith.constant 5.000000e-01 : f32
    %9 = vector.broadcast %cst_6 : f32 to vector<32x128xf32>
    %10 = arith.mulf %9, %8 : vector<32x128xf32>
    %cst_7 = arith.constant 0.707106769 : f32
    %11 = vector.broadcast %cst_7 : f32 to vector<32x128xf32>
    %12 = arith.mulf %8, %11 : vector<32x128xf32>
    %13 = math.erf %12 : vector<32x128xf32>
    %cst_8 = arith.constant 1.000000e+00 : f32
    %14 = vector.broadcast %cst_8 : f32 to vector<32x128xf32>
    %15 = arith.addf %14, %13 : vector<32x128xf32>
    %16 = arith.mulf %10, %15 : vector<32x128xf32>
    %c0_9 = arith.constant 0 : index
    %c0_10 = arith.constant 0 : index
    %17 = vector.load %arg16[%c0_9, %c0_10] : memref<32x64xf32, #tpu.memory_space<vmem>>, vector<32x64xf32>
    %18 = arith.truncf %16 : vector<32x128xf32> to vector<32x128xbf16>
    %c0_11 = arith.constant 0 : index
    %c0_12 = arith.constant 0 : index
    %19 = vector.load %arg11[%c0_11, %c0_12] : memref<128x64xbf16, #tpu.memory_space<vmem>>, vector<128x64xbf16>
    %cst_13 = arith.constant dense<0.000000e+00> : vector<32x64xf32>
    %20 = tpu.matmul %18, %19, %cst_13 {dimension_numbers = #tpu.dot_dimension_numbers<[1], [0], [0], [1], [0, 0, 1, 1], [], []>} : vector<32x128xbf16>, vector<128x64xbf16>, vector<32x64xf32> -> vector<32x64xf32>
    %21 = arith.addf %17, %20 : vector<32x64xf32>
    %c0_14 = arith.constant 0 : index
    %c0_15 = arith.constant 0 : index
    %22 = vector.load %arg16[%c0_14, %c0_15] : memref<32x64xf32, #tpu.memory_space<vmem>>, vector<32x64xf32>
    tpu.vector_store %arg16[%c0_14, %c0_15], %21 {strides = array<i32>} : memref<32x64xf32, #tpu.memory_space<vmem>>, vector<32x64xf32>,
    %c1_i32 = arith.constant 1 : i32
    %23 = arith.cmpi eq, %arg1, %c1_i32 : i32
    %24 = arith.extui %23 : i1 to i32
    %c0_i32_16 = arith.constant 0 : i32
    %25 = arith.cmpi ne, %24, %c0_i32_16 : i32
    scf.if %25 {
      %c0_17 = arith.constant 0 : index
      %c0_18 = arith.constant 0 : index
      %26 = vector.load %arg16[%c0_17, %c0_18] : memref<32x64xf32, #tpu.memory_space<vmem>>, vector<32x64xf32>
      %27 = vector.shape_cast %26 : vector<32x64xf32> to vector<2x16x64xf32>
      %c0_19 = arith.constant 0 : index
      %c0_20 = arith.constant 0 : index
      %c0_21 = arith.constant 0 : index
      %28 = vector.load %arg13[%c0_19, %c0_20, %c0_21] : memref<2x16x64xf32, #tpu.memory_space<vmem>>, vector<2x16x64xf32>
      tpu.vector_store %arg13[%c0_19, %c0_20, %c0_21], %27 {strides = array<i32>} : memref<2x16x64xf32, #tpu.memory_space<vmem>>, vector<2x16x64xf32>,
    } else {
    }
    return
  }
  func.func @transform_0(%arg0: i32, %arg1: i32) -> (i32, i32, i32) {
    %c0_i32 = arith.constant 0 : i32
    %c0_i32_0 = arith.constant 0 : i32
    %c0_i32_1 = arith.constant 0 : i32
    return %arg0, %c0_i32, %c0_i32_0 : i32, i32, i32
  }
  func.func @transform_1(%arg0: i32, %arg1: i32) -> (i32, i32) {
    %c0_i32 = arith.constant 0 : i32
    %c0_i32_0 = arith.constant 0 : i32
    %c0_i32_1 = arith.constant 0 : i32
    return %c0_i32, %c0_i32_0 : i32, i32
  }
  func.func @transform_2(%arg0: i32, %arg1: i32) -> (i32, i32) {
    %c0_i32 = arith.constant 0 : i32
    %c0_i32_0 = arith.constant 0 : i32
    %c0_i32_1 = arith.constant 0 : i32
    return %c0_i32, %c0_i32_0 : i32, i32
  }
  func.func @transform_3(%arg0: i32, %arg1: i32) -> (i32, i32) {
    %c0_i32 = arith.constant 0 : i32
    %c0_i32_0 = arith.constant 0 : i32
    %c0_i32_1 = arith.constant 0 : i32
    return %c0_i32, %c0_i32_0 : i32, i32
  }
  func.func @transform_4(%arg0: i32, %arg1: i32) -> (i32, i32) {
    %c0_i32 = arith.constant 0 : i32
    %c0_i32_0 = arith.constant 0 : i32
    %c0_i32_1 = arith.constant 0 : i32
    return %c0_i32, %c0_i32_0 : i32, i32
  }
  func.func @transform_5(%arg0: i32, %arg1: i32) -> (i32, i32) {
    %c0_i32 = arith.constant 0 : i32
    %c0_i32_0 = arith.constant 0 : i32
    %c0_i32_1 = arith.constant 0 : i32
    return %c0_i32, %c0_i32_0 : i32, i32
  }
  func.func @transform_6(%arg0: i32, %arg1: i32) -> (i32, i32) {
    %c0_i32 = arith.constant 0 : i32
    %c0_i32_0 = arith.constant 0 : i32
    %c0_i32_1 = arith.constant 0 : i32
    return %c0_i32, %c0_i32_0 : i32, i32
  }
  func.func @transform_7(%arg0: i32, %arg1: i32) -> (i32, i32) {
    %c0_i32 = arith.constant 0 : i32
    %c0_i32_0 = arith.constant 0 : i32
    return %c0_i32, %arg1 : i32, i32
  }
  func.func @transform_8(%arg0: i32, %arg1: i32) -> (i32, i32) {
    %c0_i32 = arith.constant 0 : i32
    %c0_i32_0 = arith.constant 0 : i32
    return %c0_i32, %arg1 : i32, i32
  }
  func.func @transform_9(%arg0: i32, %arg1: i32) -> (i32, i32) {
    %c0_i32 = arith.constant 0 : i32
    %c0_i32_0 = arith.constant 0 : i32
    return %arg1, %c0_i32 : i32, i32
  }
  func.func @transform_10(%arg0: i32, %arg1: i32) -> (i32, i32) {
    %c0_i32 = arith.constant 0 : i32
    %c0_i32_0 = arith.constant 0 : i32
    %c0_i32_1 = arith.constant 0 : i32
    return %c0_i32, %c0_i32_0 : i32, i32
  }
  func.func @transform_11(%arg0: i32, %arg1: i32) -> (i32, i32, i32) {
    %c0_i32 = arith.constant 0 : i32
    %c0_i32_0 = arith.constant 0 : i32
    %c0_i32_1 = arith.constant 0 : i32
    return %arg0, %c0_i32, %c0_i32_0 : i32, i32, i32
  }
}

module attributes {stable_mosaic.version = 11 : i64} {
  func.func @_vit_block_kernel(%arg0: i32, %arg1: i32, %arg2: memref<2x16x64xf32, #tpu.memory_space<vmem>>, %arg3: memref<1x64xf32, #tpu.memory_space<vmem>>, %arg4: memref<1x64xf32, #tpu.memory_space<vmem>>, %arg5: memref<64x192xbf16, #tpu.memory_space<vmem>>, %arg6: memref<1x192xf32, #tpu.memory_space<vmem>>, %arg7: memref<1x64xf32, #tpu.memory_space<vmem>>, %arg8: memref<1x64xf32, #tpu.memory_space<vmem>>, %arg9: memref<64x128xbf16, #tpu.memory_space<vmem>>, %arg10: memref<1x128xf32, #tpu.memory_space<vmem>>, %arg11: memref<128x64xbf16, #tpu.memory_space<vmem>>, %arg12: memref<1x64xf32, #tpu.memory_space<vmem>>, %arg13: memref<2x16x64xf32, #tpu.memory_space<vmem>>, %arg14: memref<32x64xf32, #tpu.memory_space<vmem>>, %arg15: memref<32x64xbf16, #tpu.memory_space<vmem>>, %arg16: memref<32x64xf32, #tpu.memory_space<vmem>>) attributes {dimension_semantics = [#tpu.dimension_semantics<parallel>, #tpu.dimension_semantics<arbitrary>], iteration_bounds = array<i64: 1, 2>, scalar_prefetch = 0 : i64, scratch_operands = 3 : i64, tpu.core_type = #tpu.core_type<tc>, window_params = [{transform_indices = @transform_0, window_bounds = array<i64: 2, 16, 64>}, {pipeline_mode = #tpu.pipeline_mode<synchronous>, transform_indices = @transform_1, window_bounds = array<i64: 1, 64>}, {pipeline_mode = #tpu.pipeline_mode<synchronous>, transform_indices = @transform_2, window_bounds = array<i64: 1, 64>}, {pipeline_mode = #tpu.pipeline_mode<synchronous>, transform_indices = @transform_3, window_bounds = array<i64: 64, 192>}, {pipeline_mode = #tpu.pipeline_mode<synchronous>, transform_indices = @transform_4, window_bounds = array<i64: 1, 192>}, {pipeline_mode = #tpu.pipeline_mode<synchronous>, transform_indices = @transform_5, window_bounds = array<i64: 1, 64>}, {pipeline_mode = #tpu.pipeline_mode<synchronous>, transform_indices = @transform_6, window_bounds = array<i64: 1, 64>}, {transform_indices = @transform_7, window_bounds = array<i64: 64, 128>}, {transform_indices = @transform_8, window_bounds = array<i64: 1, 128>}, {transform_indices = @transform_9, window_bounds = array<i64: 128, 64>}, {pipeline_mode = #tpu.pipeline_mode<synchronous>, transform_indices = @transform_10, window_bounds = array<i64: 1, 64>}, {transform_indices = @transform_11, window_bounds = array<i64: 2, 16, 64>}]} {
    %c0_i32 = arith.constant 0 : i32
    %0 = arith.cmpi eq, %arg1, %c0_i32 : i32
    %1 = arith.extui %0 : i1 to i32
    %c0_i32_0 = arith.constant 0 : i32
    %2 = arith.cmpi ne, %1, %c0_i32_0 : i32
    scf.if %2 {
      %c0_17 = arith.constant 0 : index
      %c0_18 = arith.constant 0 : index
      %c0_19 = arith.constant 0 : index
      %26 = vector.load %arg2[%c0_17, %c0_18, %c0_19] : memref<2x16x64xf32, #tpu.memory_space<vmem>>, vector<2x16x64xf32>
      %27 = vector.shape_cast %26 : vector<2x16x64xf32> to vector<32x64xf32>
      %cst_20 = arith.constant dense<0.000000e+00> : vector<32xf32>
      %28 = vector.multi_reduction <add>, %27, %cst_20 [1] : vector<32x64xf32> to vector<32xf32>
      %29 = vector.shape_cast %28 : vector<32xf32> to vector<32x1xf32>
      %cst_21 = arith.constant 6.400000e+01 : f32
      %30 = vector.broadcast %cst_21 : f32 to vector<32x1xf32>
      %31 = arith.divf %29, %30 : vector<32x1xf32>
      %32 = vector.broadcast %31 : vector<32x1xf32> to vector<32x64xf32>
      %33 = arith.subf %27, %32 : vector<32x64xf32>
      %34 = vector.broadcast %31 : vector<32x1xf32> to vector<32x64xf32>
      %35 = arith.subf %27, %34 : vector<32x64xf32>
      %36 = arith.mulf %33, %35 : vector<32x64xf32>
      %cst_22 = arith.constant dense<0.000000e+00> : vector<32xf32>
      %37 = vector.multi_reduction <add>, %36, %cst_22 [1] : vector<32x64xf32> to vector<32xf32>
      %38 = vector.shape_cast %37 : vector<32xf32> to vector<32x1xf32>
      %cst_23 = arith.constant 6.400000e+01 : f32
      %39 = vector.broadcast %cst_23 : f32 to vector<32x1xf32>
      %40 = arith.divf %38, %39 : vector<32x1xf32>
      %41 = vector.broadcast %31 : vector<32x1xf32> to vector<32x64xf32>
      %42 = arith.subf %27, %41 : vector<32x64xf32>
      %cst_24 = arith.constant 9.99999974E-6 : f32
      %43 = vector.broadcast %cst_24 : f32 to vector<32x1xf32>
      %44 = arith.addf %40, %43 : vector<32x1xf32>
      %45 = math.rsqrt %44 : vector<32x1xf32>
      %46 = vector.broadcast %45 : vector<32x1xf32> to vector<32x64xf32>
      %47 = arith.mulf %42, %46 : vector<32x64xf32>
      %c0_25 = arith.constant 0 : index
      %c0_26 = arith.constant 0 : index
      %48 = vector.load %arg3[%c0_25, %c0_26] : memref<1x64xf32, #tpu.memory_space<vmem>>, vector<1x64xf32>
      %49 = vector.broadcast %48 : vector<1x64xf32> to vector<32x64xf32>
      %50 = arith.mulf %47, %49 : vector<32x64xf32>
      %c0_27 = arith.constant 0 : index
      %c0_28 = arith.constant 0 : index
      %51 = vector.load %arg4[%c0_27, %c0_28] : memref<1x64xf32, #tpu.memory_space<vmem>>, vector<1x64xf32>
      %52 = vector.broadcast %51 : vector<1x64xf32> to vector<32x64xf32>
      %53 = arith.addf %50, %52 : vector<32x64xf32>
      %54 = arith.truncf %53 : vector<32x64xf32> to vector<32x64xbf16>
      %c0_29 = arith.constant 0 : index
      %c0_30 = arith.constant 0 : index
      %55 = vector.load %arg5[%c0_29, %c0_30] : memref<64x192xbf16, #tpu.memory_space<vmem>>, vector<64x192xbf16>
      %cst_31 = arith.constant dense<0.000000e+00> : vector<32x192xf32>
      %56 = tpu.matmul %54, %55, %cst_31 {dimension_numbers = #tpu.dot_dimension_numbers<[1], [0], [0], [1], [0, 0, 1, 1], [], []>} : vector<32x64xbf16>, vector<64x192xbf16>, vector<32x192xf32> -> vector<32x192xf32>
      %c0_32 = arith.constant 0 : index
      %c0_33 = arith.constant 0 : index
      %57 = vector.load %arg6[%c0_32, %c0_33] : memref<1x192xf32, #tpu.memory_space<vmem>>, vector<1x192xf32>
      %58 = vector.broadcast %57 : vector<1x192xf32> to vector<32x192xf32>
      %59 = arith.addf %56, %58 : vector<32x192xf32>
      %60 = arith.truncf %59 : vector<32x192xf32> to vector<32x192xbf16>
      %61 = tpu.iota {dimensions = array<i32: 1>} : vector<1x16xi32>
      %c12_i32 = arith.constant 12 : i32
      %62 = vector.broadcast %c12_i32 : i32 to vector<1x16xi32>
      %63 = arith.cmpi slt, %61, %62 : vector<1x16xi32>
      %cst_34 = arith.constant 0.000000e+00 : f32
      %cst_35 = arith.constant -1.000000e+30 : f32
      %64 = vector.broadcast %cst_34 : f32 to vector<1x16xf32>
      %65 = vector.broadcast %cst_35 : f32 to vector<1x16xf32>
      %66 = arith.select %63, %64, %65 : vector<1x16xi1>, vector<1x16xf32>
      %67 = vector.extract_strided_slice %60 {offsets = [0, 0], sizes = [16, 16], strides = [1, 1]} : vector<32x192xbf16> to vector<16x16xbf16>
      %68 = vector.extract_strided_slice %60 {offsets = [0, 64], sizes = [16, 16], strides = [1, 1]} : vector<32x192xbf16> to vector<16x16xbf16>
      %69 = vector.extract_strided_slice %60 {offsets = [0, 128], sizes = [16, 16], strides = [1, 1]} : vector<32x192xbf16> to vector<16x16xbf16>
      %cst_36 = arith.constant dense<0.000000e+00> : vector<16x16xf32>
      %70 = tpu.matmul %67, %68, %cst_36 {dimension_numbers = #tpu.dot_dimension_numbers<[1], [1], [0], [0], [0, 0, 1, 0], [], []>} : vector<16x16xbf16>, vector<16x16xbf16>, vector<16x16xf32> -> vector<16x16xf32>
      %cst_37 = arith.constant 2.500000e-01 : f32
      %71 = vector.broadcast %cst_37 : f32 to vector<16x16xf32>
      %72 = arith.mulf %70, %71 : vector<16x16xf32>
      %73 = vector.broadcast %66 : vector<1x16xf32> to vector<16x16xf32>
      %74 = arith.addf %72, %73 : vector<16x16xf32>
      %cst_38 = arith.constant dense<0xFF800000> : vector<16xf32>
      %75 = vector.multi_reduction <maximumf>, %74, %cst_38 [1] : vector<16x16xf32> to vector<16xf32>
      %76 = vector.shape_cast %75 : vector<16xf32> to vector<16x1xf32>
      %77 = vector.broadcast %76 : vector<16x1xf32> to vector<16x16xf32>
      %78 = arith.subf %74, %77 : vector<16x16xf32>
      %79 = math.exp %78 : vector<16x16xf32>
      %cst_39 = arith.constant dense<0.000000e+00> : vector<16xf32>
      %80 = vector.multi_reduction <add>, %79, %cst_39 [1] : vector<16x16xf32> to vector<16xf32>
      %81 = vector.shape_cast %80 : vector<16xf32> to vector<16x1xf32>
      %82 = tpu.reciprocal %81 {approx = true} : vector<16x1xf32> -> vector<16x1xf32>
      %83 = vector.broadcast %82 : vector<16x1xf32> to vector<16x16xf32>
      %84 = arith.mulf %79, %83 : vector<16x16xf32>
      %85 = arith.truncf %84 : vector<16x16xf32> to vector<16x16xbf16>
      %cst_40 = arith.constant dense<0.000000e+00> : vector<16x16xf32>
      %86 = tpu.matmul %85, %69, %cst_40 {dimension_numbers = #tpu.dot_dimension_numbers<[1], [0], [0], [1], [0, 0, 1, 1], [], []>} : vector<16x16xbf16>, vector<16x16xbf16>, vector<16x16xf32> -> vector<16x16xf32>
      %87 = vector.extract_strided_slice %60 {offsets = [0, 16], sizes = [16, 16], strides = [1, 1]} : vector<32x192xbf16> to vector<16x16xbf16>
      %88 = vector.extract_strided_slice %60 {offsets = [0, 80], sizes = [16, 16], strides = [1, 1]} : vector<32x192xbf16> to vector<16x16xbf16>
      %89 = vector.extract_strided_slice %60 {offsets = [0, 144], sizes = [16, 16], strides = [1, 1]} : vector<32x192xbf16> to vector<16x16xbf16>
      %cst_41 = arith.constant dense<0.000000e+00> : vector<16x16xf32>
      %90 = tpu.matmul %87, %88, %cst_41 {dimension_numbers = #tpu.dot_dimension_numbers<[1], [1], [0], [0], [0, 0, 1, 0], [], []>} : vector<16x16xbf16>, vector<16x16xbf16>, vector<16x16xf32> -> vector<16x16xf32>
      %cst_42 = arith.constant 2.500000e-01 : f32
      %91 = vector.broadcast %cst_42 : f32 to vector<16x16xf32>
      %92 = arith.mulf %90, %91 : vector<16x16xf32>
      %93 = vector.broadcast %66 : vector<1x16xf32> to vector<16x16xf32>
      %94 = arith.addf %92, %93 : vector<16x16xf32>
      %cst_43 = arith.constant dense<0xFF800000> : vector<16xf32>
      %95 = vector.multi_reduction <maximumf>, %94, %cst_43 [1] : vector<16x16xf32> to vector<16xf32>
      %96 = vector.shape_cast %95 : vector<16xf32> to vector<16x1xf32>
      %97 = vector.broadcast %96 : vector<16x1xf32> to vector<16x16xf32>
      %98 = arith.subf %94, %97 : vector<16x16xf32>
      %99 = math.exp %98 : vector<16x16xf32>
      %cst_44 = arith.constant dense<0.000000e+00> : vector<16xf32>
      %100 = vector.multi_reduction <add>, %99, %cst_44 [1] : vector<16x16xf32> to vector<16xf32>
      %101 = vector.shape_cast %100 : vector<16xf32> to vector<16x1xf32>
      %102 = tpu.reciprocal %101 {approx = true} : vector<16x1xf32> -> vector<16x1xf32>
      %103 = vector.broadcast %102 : vector<16x1xf32> to vector<16x16xf32>
      %104 = arith.mulf %99, %103 : vector<16x16xf32>
      %105 = arith.truncf %104 : vector<16x16xf32> to vector<16x16xbf16>
      %cst_45 = arith.constant dense<0.000000e+00> : vector<16x16xf32>
      %106 = tpu.matmul %105, %89, %cst_45 {dimension_numbers = #tpu.dot_dimension_numbers<[1], [0], [0], [1], [0, 0, 1, 1], [], []>} : vector<16x16xbf16>, vector<16x16xbf16>, vector<16x16xf32> -> vector<16x16xf32>
      %107 = vector.extract_strided_slice %60 {offsets = [0, 32], sizes = [16, 16], strides = [1, 1]} : vector<32x192xbf16> to vector<16x16xbf16>
      %108 = vector.extract_strided_slice %60 {offsets = [0, 96], sizes = [16, 16], strides = [1, 1]} : vector<32x192xbf16> to vector<16x16xbf16>
      %109 = vector.extract_strided_slice %60 {offsets = [0, 160], sizes = [16, 16], strides = [1, 1]} : vector<32x192xbf16> to vector<16x16xbf16>
      %cst_46 = arith.constant dense<0.000000e+00> : vector<16x16xf32>
      %110 = tpu.matmul %107, %108, %cst_46 {dimension_numbers = #tpu.dot_dimension_numbers<[1], [1], [0], [0], [0, 0, 1, 0], [], []>} : vector<16x16xbf16>, vector<16x16xbf16>, vector<16x16xf32> -> vector<16x16xf32>
      %cst_47 = arith.constant 2.500000e-01 : f32
      %111 = vector.broadcast %cst_47 : f32 to vector<16x16xf32>
      %112 = arith.mulf %110, %111 : vector<16x16xf32>
      %113 = vector.broadcast %66 : vector<1x16xf32> to vector<16x16xf32>
      %114 = arith.addf %112, %113 : vector<16x16xf32>
      %cst_48 = arith.constant dense<0xFF800000> : vector<16xf32>
      %115 = vector.multi_reduction <maximumf>, %114, %cst_48 [1] : vector<16x16xf32> to vector<16xf32>
      %116 = vector.shape_cast %115 : vector<16xf32> to vector<16x1xf32>
      %117 = vector.broadcast %116 : vector<16x1xf32> to vector<16x16xf32>
      %118 = arith.subf %114, %117 : vector<16x16xf32>
      %119 = math.exp %118 : vector<16x16xf32>
      %cst_49 = arith.constant dense<0.000000e+00> : vector<16xf32>
      %120 = vector.multi_reduction <add>, %119, %cst_49 [1] : vector<16x16xf32> to vector<16xf32>
      %121 = vector.shape_cast %120 : vector<16xf32> to vector<16x1xf32>
      %122 = tpu.reciprocal %121 {approx = true} : vector<16x1xf32> -> vector<16x1xf32>
      %123 = vector.broadcast %122 : vector<16x1xf32> to vector<16x16xf32>
      %124 = arith.mulf %119, %123 : vector<16x16xf32>
      %125 = arith.truncf %124 : vector<16x16xf32> to vector<16x16xbf16>
      %cst_50 = arith.constant dense<0.000000e+00> : vector<16x16xf32>
      %126 = tpu.matmul %125, %109, %cst_50 {dimension_numbers = #tpu.dot_dimension_numbers<[1], [0], [0], [1], [0, 0, 1, 1], [], []>} : vector<16x16xbf16>, vector<16x16xbf16>, vector<16x16xf32> -> vector<16x16xf32>
      %127 = vector.extract_strided_slice %60 {offsets = [0, 48], sizes = [16, 16], strides = [1, 1]} : vector<32x192xbf16> to vector<16x16xbf16>
      %128 = vector.extract_strided_slice %60 {offsets = [0, 112], sizes = [16, 16], strides = [1, 1]} : vector<32x192xbf16> to vector<16x16xbf16>
      %129 = vector.extract_strided_slice %60 {offsets = [0, 176], sizes = [16, 16], strides = [1, 1]} : vector<32x192xbf16> to vector<16x16xbf16>
      %cst_51 = arith.constant dense<0.000000e+00> : vector<16x16xf32>
      %130 = tpu.matmul %127, %128, %cst_51 {dimension_numbers = #tpu.dot_dimension_numbers<[1], [1], [0], [0], [0, 0, 1, 0], [], []>} : vector<16x16xbf16>, vector<16x16xbf16>, vector<16x16xf32> -> vector<16x16xf32>
      %cst_52 = arith.constant 2.500000e-01 : f32
      %131 = vector.broadcast %cst_52 : f32 to vector<16x16xf32>
      %132 = arith.mulf %130, %131 : vector<16x16xf32>
      %133 = vector.broadcast %66 : vector<1x16xf32> to vector<16x16xf32>
      %134 = arith.addf %132, %133 : vector<16x16xf32>
      %cst_53 = arith.constant dense<0xFF800000> : vector<16xf32>
      %135 = vector.multi_reduction <maximumf>, %134, %cst_53 [1] : vector<16x16xf32> to vector<16xf32>
      %136 = vector.shape_cast %135 : vector<16xf32> to vector<16x1xf32>
      %137 = vector.broadcast %136 : vector<16x1xf32> to vector<16x16xf32>
      %138 = arith.subf %134, %137 : vector<16x16xf32>
      %139 = math.exp %138 : vector<16x16xf32>
      %cst_54 = arith.constant dense<0.000000e+00> : vector<16xf32>
      %140 = vector.multi_reduction <add>, %139, %cst_54 [1] : vector<16x16xf32> to vector<16xf32>
      %141 = vector.shape_cast %140 : vector<16xf32> to vector<16x1xf32>
      %142 = tpu.reciprocal %141 {approx = true} : vector<16x1xf32> -> vector<16x1xf32>
      %143 = vector.broadcast %142 : vector<16x1xf32> to vector<16x16xf32>
      %144 = arith.mulf %139, %143 : vector<16x16xf32>
      %145 = arith.truncf %144 : vector<16x16xf32> to vector<16x16xbf16>
      %cst_55 = arith.constant dense<0.000000e+00> : vector<16x16xf32>
      %146 = tpu.matmul %145, %129, %cst_55 {dimension_numbers = #tpu.dot_dimension_numbers<[1], [0], [0], [1], [0, 0, 1, 1], [], []>} : vector<16x16xbf16>, vector<16x16xbf16>, vector<16x16xf32> -> vector<16x16xf32>
      %147 = tpu.concatenate %86, %106, %126, %146 in 1 : vector<16x16xf32>, vector<16x16xf32>, vector<16x16xf32>, vector<16x16xf32> -> vector<16x64xf32>
      %c0_56 = arith.constant 0 : index
      %c0_57 = arith.constant 0 : index
      %148 = vector.load %arg14[%c0_56, %c0_57] : memref<32x64xf32, #tpu.memory_space<vmem>>, vector<16x64xf32>
      tpu.vector_store %arg14[%c0_56, %c0_57], %147 {strides = array<i32>} : memref<32x64xf32, #tpu.memory_space<vmem>>, vector<16x64xf32>,
      %149 = vector.extract_strided_slice %60 {offsets = [16, 0], sizes = [16, 16], strides = [1, 1]} : vector<32x192xbf16> to vector<16x16xbf16>
      %150 = vector.extract_strided_slice %60 {offsets = [16, 64], sizes = [16, 16], strides = [1, 1]} : vector<32x192xbf16> to vector<16x16xbf16>
      %151 = vector.extract_strided_slice %60 {offsets = [16, 128], sizes = [16, 16], strides = [1, 1]} : vector<32x192xbf16> to vector<16x16xbf16>
      %cst_58 = arith.constant dense<0.000000e+00> : vector<16x16xf32>
      %152 = tpu.matmul %149, %150, %cst_58 {dimension_numbers = #tpu.dot_dimension_numbers<[1], [1], [0], [0], [0, 0, 1, 0], [], []>} : vector<16x16xbf16>, vector<16x16xbf16>, vector<16x16xf32> -> vector<16x16xf32>
      %cst_59 = arith.constant 2.500000e-01 : f32
      %153 = vector.broadcast %cst_59 : f32 to vector<16x16xf32>
      %154 = arith.mulf %152, %153 : vector<16x16xf32>
      %155 = vector.broadcast %66 : vector<1x16xf32> to vector<16x16xf32>
      %156 = arith.addf %154, %155 : vector<16x16xf32>
      %cst_60 = arith.constant dense<0xFF800000> : vector<16xf32>
      %157 = vector.multi_reduction <maximumf>, %156, %cst_60 [1] : vector<16x16xf32> to vector<16xf32>
      %158 = vector.shape_cast %157 : vector<16xf32> to vector<16x1xf32>
      %159 = vector.broadcast %158 : vector<16x1xf32> to vector<16x16xf32>
      %160 = arith.subf %156, %159 : vector<16x16xf32>
      %161 = math.exp %160 : vector<16x16xf32>
      %cst_61 = arith.constant dense<0.000000e+00> : vector<16xf32>
      %162 = vector.multi_reduction <add>, %161, %cst_61 [1] : vector<16x16xf32> to vector<16xf32>
      %163 = vector.shape_cast %162 : vector<16xf32> to vector<16x1xf32>
      %164 = tpu.reciprocal %163 {approx = true} : vector<16x1xf32> -> vector<16x1xf32>
      %165 = vector.broadcast %164 : vector<16x1xf32> to vector<16x16xf32>
      %166 = arith.mulf %161, %165 : vector<16x16xf32>
      %167 = arith.truncf %166 : vector<16x16xf32> to vector<16x16xbf16>
      %cst_62 = arith.constant dense<0.000000e+00> : vector<16x16xf32>
      %168 = tpu.matmul %167, %151, %cst_62 {dimension_numbers = #tpu.dot_dimension_numbers<[1], [0], [0], [1], [0, 0, 1, 1], [], []>} : vector<16x16xbf16>, vector<16x16xbf16>, vector<16x16xf32> -> vector<16x16xf32>
      %169 = vector.extract_strided_slice %60 {offsets = [16, 16], sizes = [16, 16], strides = [1, 1]} : vector<32x192xbf16> to vector<16x16xbf16>
      %170 = vector.extract_strided_slice %60 {offsets = [16, 80], sizes = [16, 16], strides = [1, 1]} : vector<32x192xbf16> to vector<16x16xbf16>
      %171 = vector.extract_strided_slice %60 {offsets = [16, 144], sizes = [16, 16], strides = [1, 1]} : vector<32x192xbf16> to vector<16x16xbf16>
      %cst_63 = arith.constant dense<0.000000e+00> : vector<16x16xf32>
      %172 = tpu.matmul %169, %170, %cst_63 {dimension_numbers = #tpu.dot_dimension_numbers<[1], [1], [0], [0], [0, 0, 1, 0], [], []>} : vector<16x16xbf16>, vector<16x16xbf16>, vector<16x16xf32> -> vector<16x16xf32>
      %cst_64 = arith.constant 2.500000e-01 : f32
      %173 = vector.broadcast %cst_64 : f32 to vector<16x16xf32>
      %174 = arith.mulf %172, %173 : vector<16x16xf32>
      %175 = vector.broadcast %66 : vector<1x16xf32> to vector<16x16xf32>
      %176 = arith.addf %174, %175 : vector<16x16xf32>
      %cst_65 = arith.constant dense<0xFF800000> : vector<16xf32>
      %177 = vector.multi_reduction <maximumf>, %176, %cst_65 [1] : vector<16x16xf32> to vector<16xf32>
      %178 = vector.shape_cast %177 : vector<16xf32> to vector<16x1xf32>
      %179 = vector.broadcast %178 : vector<16x1xf32> to vector<16x16xf32>
      %180 = arith.subf %176, %179 : vector<16x16xf32>
      %181 = math.exp %180 : vector<16x16xf32>
      %cst_66 = arith.constant dense<0.000000e+00> : vector<16xf32>
      %182 = vector.multi_reduction <add>, %181, %cst_66 [1] : vector<16x16xf32> to vector<16xf32>
      %183 = vector.shape_cast %182 : vector<16xf32> to vector<16x1xf32>
      %184 = tpu.reciprocal %183 {approx = true} : vector<16x1xf32> -> vector<16x1xf32>
      %185 = vector.broadcast %184 : vector<16x1xf32> to vector<16x16xf32>
      %186 = arith.mulf %181, %185 : vector<16x16xf32>
      %187 = arith.truncf %186 : vector<16x16xf32> to vector<16x16xbf16>
      %cst_67 = arith.constant dense<0.000000e+00> : vector<16x16xf32>
      %188 = tpu.matmul %187, %171, %cst_67 {dimension_numbers = #tpu.dot_dimension_numbers<[1], [0], [0], [1], [0, 0, 1, 1], [], []>} : vector<16x16xbf16>, vector<16x16xbf16>, vector<16x16xf32> -> vector<16x16xf32>
      %189 = vector.extract_strided_slice %60 {offsets = [16, 32], sizes = [16, 16], strides = [1, 1]} : vector<32x192xbf16> to vector<16x16xbf16>
      %190 = vector.extract_strided_slice %60 {offsets = [16, 96], sizes = [16, 16], strides = [1, 1]} : vector<32x192xbf16> to vector<16x16xbf16>
      %191 = vector.extract_strided_slice %60 {offsets = [16, 160], sizes = [16, 16], strides = [1, 1]} : vector<32x192xbf16> to vector<16x16xbf16>
      %cst_68 = arith.constant dense<0.000000e+00> : vector<16x16xf32>
      %192 = tpu.matmul %189, %190, %cst_68 {dimension_numbers = #tpu.dot_dimension_numbers<[1], [1], [0], [0], [0, 0, 1, 0], [], []>} : vector<16x16xbf16>, vector<16x16xbf16>, vector<16x16xf32> -> vector<16x16xf32>
      %cst_69 = arith.constant 2.500000e-01 : f32
      %193 = vector.broadcast %cst_69 : f32 to vector<16x16xf32>
      %194 = arith.mulf %192, %193 : vector<16x16xf32>
      %195 = vector.broadcast %66 : vector<1x16xf32> to vector<16x16xf32>
      %196 = arith.addf %194, %195 : vector<16x16xf32>
      %cst_70 = arith.constant dense<0xFF800000> : vector<16xf32>
      %197 = vector.multi_reduction <maximumf>, %196, %cst_70 [1] : vector<16x16xf32> to vector<16xf32>
      %198 = vector.shape_cast %197 : vector<16xf32> to vector<16x1xf32>
      %199 = vector.broadcast %198 : vector<16x1xf32> to vector<16x16xf32>
      %200 = arith.subf %196, %199 : vector<16x16xf32>
      %201 = math.exp %200 : vector<16x16xf32>
      %cst_71 = arith.constant dense<0.000000e+00> : vector<16xf32>
      %202 = vector.multi_reduction <add>, %201, %cst_71 [1] : vector<16x16xf32> to vector<16xf32>
      %203 = vector.shape_cast %202 : vector<16xf32> to vector<16x1xf32>
      %204 = tpu.reciprocal %203 {approx = true} : vector<16x1xf32> -> vector<16x1xf32>
      %205 = vector.broadcast %204 : vector<16x1xf32> to vector<16x16xf32>
      %206 = arith.mulf %201, %205 : vector<16x16xf32>
      %207 = arith.truncf %206 : vector<16x16xf32> to vector<16x16xbf16>
      %cst_72 = arith.constant dense<0.000000e+00> : vector<16x16xf32>
      %208 = tpu.matmul %207, %191, %cst_72 {dimension_numbers = #tpu.dot_dimension_numbers<[1], [0], [0], [1], [0, 0, 1, 1], [], []>} : vector<16x16xbf16>, vector<16x16xbf16>, vector<16x16xf32> -> vector<16x16xf32>
      %209 = vector.extract_strided_slice %60 {offsets = [16, 48], sizes = [16, 16], strides = [1, 1]} : vector<32x192xbf16> to vector<16x16xbf16>
      %210 = vector.extract_strided_slice %60 {offsets = [16, 112], sizes = [16, 16], strides = [1, 1]} : vector<32x192xbf16> to vector<16x16xbf16>
      %211 = vector.extract_strided_slice %60 {offsets = [16, 176], sizes = [16, 16], strides = [1, 1]} : vector<32x192xbf16> to vector<16x16xbf16>
      %cst_73 = arith.constant dense<0.000000e+00> : vector<16x16xf32>
      %212 = tpu.matmul %209, %210, %cst_73 {dimension_numbers = #tpu.dot_dimension_numbers<[1], [1], [0], [0], [0, 0, 1, 0], [], []>} : vector<16x16xbf16>, vector<16x16xbf16>, vector<16x16xf32> -> vector<16x16xf32>
      %cst_74 = arith.constant 2.500000e-01 : f32
      %213 = vector.broadcast %cst_74 : f32 to vector<16x16xf32>
      %214 = arith.mulf %212, %213 : vector<16x16xf32>
      %215 = vector.broadcast %66 : vector<1x16xf32> to vector<16x16xf32>
      %216 = arith.addf %214, %215 : vector<16x16xf32>
      %cst_75 = arith.constant dense<0xFF800000> : vector<16xf32>
      %217 = vector.multi_reduction <maximumf>, %216, %cst_75 [1] : vector<16x16xf32> to vector<16xf32>
      %218 = vector.shape_cast %217 : vector<16xf32> to vector<16x1xf32>
      %219 = vector.broadcast %218 : vector<16x1xf32> to vector<16x16xf32>
      %220 = arith.subf %216, %219 : vector<16x16xf32>
      %221 = math.exp %220 : vector<16x16xf32>
      %cst_76 = arith.constant dense<0.000000e+00> : vector<16xf32>
      %222 = vector.multi_reduction <add>, %221, %cst_76 [1] : vector<16x16xf32> to vector<16xf32>
      %223 = vector.shape_cast %222 : vector<16xf32> to vector<16x1xf32>
      %224 = tpu.reciprocal %223 {approx = true} : vector<16x1xf32> -> vector<16x1xf32>
      %225 = vector.broadcast %224 : vector<16x1xf32> to vector<16x16xf32>
      %226 = arith.mulf %221, %225 : vector<16x16xf32>
      %227 = arith.truncf %226 : vector<16x16xf32> to vector<16x16xbf16>
      %cst_77 = arith.constant dense<0.000000e+00> : vector<16x16xf32>
      %228 = tpu.matmul %227, %211, %cst_77 {dimension_numbers = #tpu.dot_dimension_numbers<[1], [0], [0], [1], [0, 0, 1, 1], [], []>} : vector<16x16xbf16>, vector<16x16xbf16>, vector<16x16xf32> -> vector<16x16xf32>
      %229 = tpu.concatenate %168, %188, %208, %228 in 1 : vector<16x16xf32>, vector<16x16xf32>, vector<16x16xf32>, vector<16x16xf32> -> vector<16x64xf32>
      %c16 = arith.constant 16 : index
      %c0_78 = arith.constant 0 : index
      %230 = vector.load %arg14[%c16, %c0_78] : memref<32x64xf32, #tpu.memory_space<vmem>>, vector<16x64xf32>
      tpu.vector_store %arg14[%c16, %c0_78], %229 {strides = array<i32>} : memref<32x64xf32, #tpu.memory_space<vmem>>, vector<16x64xf32>,
      %c0_79 = arith.constant 0 : index
      %c0_80 = arith.constant 0 : index
      %231 = vector.load %arg14[%c0_79, %c0_80] : memref<32x64xf32, #tpu.memory_space<vmem>>, vector<32x64xf32>
      %232 = arith.addf %27, %231 : vector<32x64xf32>
      %cst_81 = arith.constant dense<0.000000e+00> : vector<32xf32>
      %233 = vector.multi_reduction <add>, %232, %cst_81 [1] : vector<32x64xf32> to vector<32xf32>
      %234 = vector.shape_cast %233 : vector<32xf32> to vector<32x1xf32>
      %cst_82 = arith.constant 6.400000e+01 : f32
      %235 = vector.broadcast %cst_82 : f32 to vector<32x1xf32>
      %236 = arith.divf %234, %235 : vector<32x1xf32>
      %237 = vector.broadcast %236 : vector<32x1xf32> to vector<32x64xf32>
      %238 = arith.subf %232, %237 : vector<32x64xf32>
      %239 = vector.broadcast %236 : vector<32x1xf32> to vector<32x64xf32>
      %240 = arith.subf %232, %239 : vector<32x64xf32>
      %241 = arith.mulf %238, %240 : vector<32x64xf32>
      %cst_83 = arith.constant dense<0.000000e+00> : vector<32xf32>
      %242 = vector.multi_reduction <add>, %241, %cst_83 [1] : vector<32x64xf32> to vector<32xf32>
      %243 = vector.shape_cast %242 : vector<32xf32> to vector<32x1xf32>
      %cst_84 = arith.constant 6.400000e+01 : f32
      %244 = vector.broadcast %cst_84 : f32 to vector<32x1xf32>
      %245 = arith.divf %243, %244 : vector<32x1xf32>
      %246 = vector.broadcast %236 : vector<32x1xf32> to vector<32x64xf32>
      %247 = arith.subf %232, %246 : vector<32x64xf32>
      %cst_85 = arith.constant 9.99999974E-6 : f32
      %248 = vector.broadcast %cst_85 : f32 to vector<32x1xf32>
      %249 = arith.addf %245, %248 : vector<32x1xf32>
      %250 = math.rsqrt %249 : vector<32x1xf32>
      %251 = vector.broadcast %250 : vector<32x1xf32> to vector<32x64xf32>
      %252 = arith.mulf %247, %251 : vector<32x64xf32>
      %c0_86 = arith.constant 0 : index
      %c0_87 = arith.constant 0 : index
      %253 = vector.load %arg7[%c0_86, %c0_87] : memref<1x64xf32, #tpu.memory_space<vmem>>, vector<1x64xf32>
      %254 = vector.broadcast %253 : vector<1x64xf32> to vector<32x64xf32>
      %255 = arith.mulf %252, %254 : vector<32x64xf32>
      %c0_88 = arith.constant 0 : index
      %c0_89 = arith.constant 0 : index
      %256 = vector.load %arg8[%c0_88, %c0_89] : memref<1x64xf32, #tpu.memory_space<vmem>>, vector<1x64xf32>
      %257 = vector.broadcast %256 : vector<1x64xf32> to vector<32x64xf32>
      %258 = arith.addf %255, %257 : vector<32x64xf32>
      %259 = arith.truncf %258 : vector<32x64xf32> to vector<32x64xbf16>
      %c0_90 = arith.constant 0 : index
      %c0_91 = arith.constant 0 : index
      %260 = vector.load %arg15[%c0_90, %c0_91] : memref<32x64xbf16, #tpu.memory_space<vmem>>, vector<32x64xbf16>
      tpu.vector_store %arg15[%c0_90, %c0_91], %259 {strides = array<i32>} : memref<32x64xbf16, #tpu.memory_space<vmem>>, vector<32x64xbf16>,
      %c0_92 = arith.constant 0 : index
      %c0_93 = arith.constant 0 : index
      %261 = vector.load %arg12[%c0_92, %c0_93] : memref<1x64xf32, #tpu.memory_space<vmem>>, vector<1x64xf32>
      %262 = vector.broadcast %261 : vector<1x64xf32> to vector<32x64xf32>
      %263 = arith.addf %232, %262 : vector<32x64xf32>
      %c0_94 = arith.constant 0 : index
      %c0_95 = arith.constant 0 : index
      %264 = vector.load %arg16[%c0_94, %c0_95] : memref<32x64xf32, #tpu.memory_space<vmem>>, vector<32x64xf32>
      tpu.vector_store %arg16[%c0_94, %c0_95], %263 {strides = array<i32>} : memref<32x64xf32, #tpu.memory_space<vmem>>, vector<32x64xf32>,
    } else {
    }
    %c0 = arith.constant 0 : index
    %c0_1 = arith.constant 0 : index
    %3 = vector.load %arg15[%c0, %c0_1] : memref<32x64xbf16, #tpu.memory_space<vmem>>, vector<32x64xbf16>
    %c0_2 = arith.constant 0 : index
    %c0_3 = arith.constant 0 : index
    %4 = vector.load %arg9[%c0_2, %c0_3] : memref<64x128xbf16, #tpu.memory_space<vmem>>, vector<64x128xbf16>
    %cst = arith.constant dense<0.000000e+00> : vector<32x128xf32>
    %5 = tpu.matmul %3, %4, %cst {dimension_numbers = #tpu.dot_dimension_numbers<[1], [0], [0], [1], [0, 0, 1, 1], [], []>} : vector<32x64xbf16>, vector<64x128xbf16>, vector<32x128xf32> -> vector<32x128xf32>
    %c0_4 = arith.constant 0 : index
    %c0_5 = arith.constant 0 : index
    %6 = vector.load %arg10[%c0_4, %c0_5] : memref<1x128xf32, #tpu.memory_space<vmem>>, vector<1x128xf32>
    %7 = vector.broadcast %6 : vector<1x128xf32> to vector<32x128xf32>
    %8 = arith.addf %5, %7 : vector<32x128xf32>
    %cst_6 = arith.constant 5.000000e-01 : f32
    %9 = vector.broadcast %cst_6 : f32 to vector<32x128xf32>
    %10 = arith.mulf %9, %8 : vector<32x128xf32>
    %cst_7 = arith.constant 0.707106769 : f32
    %11 = vector.broadcast %cst_7 : f32 to vector<32x128xf32>
    %12 = arith.mulf %8, %11 : vector<32x128xf32>
    %13 = math.erf %12 : vector<32x128xf32>
    %cst_8 = arith.constant 1.000000e+00 : f32
    %14 = vector.broadcast %cst_8 : f32 to vector<32x128xf32>
    %15 = arith.addf %14, %13 : vector<32x128xf32>
    %16 = arith.mulf %10, %15 : vector<32x128xf32>
    %c0_9 = arith.constant 0 : index
    %c0_10 = arith.constant 0 : index
    %17 = vector.load %arg16[%c0_9, %c0_10] : memref<32x64xf32, #tpu.memory_space<vmem>>, vector<32x64xf32>
    %18 = arith.truncf %16 : vector<32x128xf32> to vector<32x128xbf16>
    %c0_11 = arith.constant 0 : index
    %c0_12 = arith.constant 0 : index
    %19 = vector.load %arg11[%c0_11, %c0_12] : memref<128x64xbf16, #tpu.memory_space<vmem>>, vector<128x64xbf16>
    %cst_13 = arith.constant dense<0.000000e+00> : vector<32x64xf32>
    %20 = tpu.matmul %18, %19, %cst_13 {dimension_numbers = #tpu.dot_dimension_numbers<[1], [0], [0], [1], [0, 0, 1, 1], [], []>} : vector<32x128xbf16>, vector<128x64xbf16>, vector<32x64xf32> -> vector<32x64xf32>
    %21 = arith.addf %17, %20 : vector<32x64xf32>
    %c0_14 = arith.constant 0 : index
    %c0_15 = arith.constant 0 : index
    %22 = vector.load %arg16[%c0_14, %c0_15] : memref<32x64xf32, #tpu.memory_space<vmem>>, vector<32x64xf32>
    tpu.vector_store %arg16[%c0_14, %c0_15], %21 {strides = array<i32>} : memref<32x64xf32, #tpu.memory_space<vmem>>, vector<32x64xf32>,
    %c1_i32 = arith.constant 1 : i32
    %23 = arith.cmpi eq, %arg1, %c1_i32 : i32
    %24 = arith.extui %23 : i1 to i32
    %c0_i32_16 = arith.constant 0 : i32
    %25 = arith.cmpi ne, %24, %c0_i32_16 : i32
    scf.if %25 {
      %c0_17 = arith.constant 0 : index
      %c0_18 = arith.constant 0 : index
      %26 = vector.load %arg16[%c0_17, %c0_18] : memref<32x64xf32, #tpu.memory_space<vmem>>, vector<32x64xf32>
      %27 = vector.shape_cast %26 : vector<32x64xf32> to vector<2x16x64xf32>
      %c0_19 = arith.constant 0 : index
      %c0_20 = arith.constant 0 : index
      %c0_21 = arith.constant 0 : index
      %28 = vector.load %arg13[%c0_19, %c0_20, %c0_21] : memref<2x16x64xf32, #tpu.memory_space<vmem>>, vector<2x16x64xf32>
      tpu.vector_store %arg13[%c0_19, %c0_20, %c0_21], %27 {strides = array<i32>} : memref<2x16x64xf32, #tpu.memory_space<vmem>>, vector<2x16x64xf32>,
    } else {
    }
    return
  }
  func.func @transform_0(%arg0: i32, %arg1: i32) -> (i32, i32, i32) {
    %c0_i32 = arith.constant 0 : i32
    %c0_i32_0 = arith.constant 0 : i32
    %c0_i32_1 = arith.constant 0 : i32
    return %arg0, %c0_i32, %c0_i32_0 : i32, i32, i32
  }
  func.func @transform_1(%arg0: i32, %arg1: i32) -> (i32, i32) {
    %c0_i32 = arith.constant 0 : i32
    %c0_i32_0 = arith.constant 0 : i32
    %c0_i32_1 = arith.constant 0 : i32
    return %c0_i32, %c0_i32_0 : i32, i32
  }
  func.func @transform_2(%arg0: i32, %arg1: i32) -> (i32, i32) {
    %c0_i32 = arith.constant 0 : i32
    %c0_i32_0 = arith.constant 0 : i32
    %c0_i32_1 = arith.constant 0 : i32
    return %c0_i32, %c0_i32_0 : i32, i32
  }
  func.func @transform_3(%arg0: i32, %arg1: i32) -> (i32, i32) {
    %c0_i32 = arith.constant 0 : i32
    %c0_i32_0 = arith.constant 0 : i32
    %c0_i32_1 = arith.constant 0 : i32
    return %c0_i32, %c0_i32_0 : i32, i32
  }
  func.func @transform_4(%arg0: i32, %arg1: i32) -> (i32, i32) {
    %c0_i32 = arith.constant 0 : i32
    %c0_i32_0 = arith.constant 0 : i32
    %c0_i32_1 = arith.constant 0 : i32
    return %c0_i32, %c0_i32_0 : i32, i32
  }
  func.func @transform_5(%arg0: i32, %arg1: i32) -> (i32, i32) {
    %c0_i32 = arith.constant 0 : i32
    %c0_i32_0 = arith.constant 0 : i32
    %c0_i32_1 = arith.constant 0 : i32
    return %c0_i32, %c0_i32_0 : i32, i32
  }
  func.func @transform_6(%arg0: i32, %arg1: i32) -> (i32, i32) {
    %c0_i32 = arith.constant 0 : i32
    %c0_i32_0 = arith.constant 0 : i32
    %c0_i32_1 = arith.constant 0 : i32
    return %c0_i32, %c0_i32_0 : i32, i32
  }
  func.func @transform_7(%arg0: i32, %arg1: i32) -> (i32, i32) {
    %c0_i32 = arith.constant 0 : i32
    %c0_i32_0 = arith.constant 0 : i32
    return %c0_i32, %arg1 : i32, i32
  }
  func.func @transform_8(%arg0: i32, %arg1: i32) -> (i32, i32) {
    %c0_i32 = arith.constant 0 : i32
    %c0_i32_0 = arith.constant 0 : i32
    return %c0_i32, %arg1 : i32, i32
  }
  func.func @transform_9(%arg0: i32, %arg1: i32) -> (i32, i32) {
    %c0_i32 = arith.constant 0 : i32
    %c0_i32_0 = arith.constant 0 : i32
    return %arg1, %c0_i32 : i32, i32
  }
  func.func @transform_10(%arg0: i32, %arg1: i32) -> (i32, i32) {
    %c0_i32 = arith.constant 0 : i32
    %c0_i32_0 = arith.constant 0 : i32
    %c0_i32_1 = arith.constant 0 : i32
    return %c0_i32, %c0_i32_0 : i32, i32
  }
  func.func @transform_11(%arg0: i32, %arg1: i32) -> (i32, i32, i32) {
    %c0_i32 = arith.constant 0 : i32
    %c0_i32_0 = arith.constant 0 : i32
    %c0_i32_1 = arith.constant 0 : i32
    return %arg0, %c0_i32, %c0_i32_0 : i32, i32, i32
  }
}

</mosaic_0001>

<llo_original>
// kernel: tpu_custom_call.1
$region0: #{tpu_custom_call.1}
  #allocation0 [shape = 'u32[]', space=smem, size = 0x4, offset = 0x4, fixed_abs, tag = 'smem constant byte address 0x4 - core index']
  #allocation1 [shape = 'u32[144,128]{1,0:T(1,128)}', space=vmem, size = 0x12000, scoped, tag = 'internal scratch']
  #allocation2 [shape = 'f32[32,64]{1,0:T(8,128)}', space=vmem, size = 0x4000, scoped, tag = 'scratch operand']
  #allocation3 [shape = 'bf16[32,64]{1,0:T(16,128)(2,1)}', space=vmem, size = 0x2000, scoped, tag = 'scratch operand']
  #allocation4 [shape = 'f32[32,64]{1,0:T(8,128)}', space=vmem, size = 0x4000, scoped, tag = 'scratch operand']
  %s0 = inlined_call_operand.vmem [shape: f32[2,16,64], index: 0, kind: input, shape index: {}]
  %s1 = inlined_call_operand.vmem [shape: f32[1,64], index: 1, kind: input, shape index: {}]
  %s2 = inlined_call_operand.vmem [shape: f32[1,64], index: 2, kind: input, shape index: {}]
  %s3 = inlined_call_operand.vmem [shape: bf16[64,192], index: 3, kind: input, shape index: {}]
  %s4 = inlined_call_operand.vmem [shape: f32[1,192], index: 4, kind: input, shape index: {}]
  %s5 = inlined_call_operand.vmem [shape: f32[1,64], index: 5, kind: input, shape index: {}]
  %s6 = inlined_call_operand.vmem [shape: f32[1,64], index: 6, kind: input, shape index: {}]
  %s7 = inlined_call_operand.vmem [shape: bf16[64,256], index: 7, kind: input, shape index: {}]
  %s8 = inlined_call_operand.vmem [shape: f32[1,256], index: 8, kind: input, shape index: {}]
  %s9 = inlined_call_operand.vmem [shape: bf16[256,64], index: 9, kind: input, shape index: {}]
  %s10 = inlined_call_operand.vmem [shape: f32[1,64], index: 10, kind: input, shape index: {}]
  %s11 = inlined_call_operand.hbm [shape: f32[2,16,64], index: 11, kind: output, shape index: {}]
  %s12 = sld [smem:[#allocation0]]
  $region126: #{tpu_custom_call.1} parent=0
    _
  %s14 = ssub.s32 1, %s12
  %s15 = scalar_select 0, %s14, %s12
  $region1: #{tpu_custom_call.1} parent=0
    #allocation5 [shape = 'u8[32768]{0}', space=vmem, size = 0x8000, scoped, tag = 'input window, operand 7']
    #allocation6 [shape = 'u8[16384]{0}', space=vmem, size = 0x4000, scoped, tag = 'output window, operand 0, single buffered']
    #allocation7 [shape = 's32[2]{0}', space=sflag, size = 0x8, scoped, tag = 'scoped memory for tpu_custom_call.1']
    %16 = vsyncpa [#allocation7], 0
    loop: start=0, step=1, limit=4
    $region2: #{tpu_custom_call.1} parent=1 // loop_pre_header
      _
    $region3: #{tpu_custom_call.1} parent=1 // loop_header
      %s18 = sphi 0, %s22
      %p19 = scmp.ge.s32.totalorder %s18, 4
      %s25 = sphi 0, %s37
      %s26 = sphi 0, %s33
      %s27 = sphi 0, %s25
      %s28 = sphi 0, %s26
      %s29 = sphi 0, %s27
      %s30 = sphi 0, %s28
      %s40 = sphi 0, %s42
      %s43 = sphi 0, %s40
      %s44 = sphi 0, %s43
      %s60 = sphi 0, %s44
      %s64 = sphi 0, %s64
      %s66 = sphi 0, %s64
      %s67 = sphi 0, %s66
      %s81 = sphi 0, %s67
      %s85 = sphi 0, %s85
      %s87 = sphi 0, %s85
      %s88 = sphi 0, %s87
      %s102 = sphi 0, %s88
      %s106 = sphi 0, %s106
      %s108 = sphi 0, %s106
      %s109 = sphi 0, %s108
      %s123 = sphi 0, %s109
      %s127 = sphi 0, %s127
      %s129 = sphi 0, %s127
      %s130 = sphi 0, %s129
      %s144 = sphi 0, %s130
      %s148 = sphi 0, %s148
      %s150 = sphi 0, %s148
      %s151 = sphi 0, %s150
      %s165 = sphi 0, %s151
      %s169 = sphi 0, %s169
      %s171 = sphi 0, %s169
      %s172 = sphi 0, %s171
      %s186 = sphi 0, %s172
      %s192 = sphi 0, %s194
      %s195 = sphi 0, %s192
      %s196 = sphi 0, %s195
      %s212 = sphi 0, %s196
      %s218 = sphi 0, %s220
      %s221 = sphi 0, %s218
      %s222 = sphi 0, %s221
      %s238 = sphi 0, %s222
      %s244 = sphi 0, %s246
      %s247 = sphi 0, %s244
      %s248 = sphi 0, %s247
      %s264 = sphi 0, %s248
      %s268 = sphi 0, %s268
      %s270 = sphi 0, %s268
      %s271 = sphi 0, %s270
      %s285 = sphi 0, %s271
      %s291 = sphi 0, %s293
      %s294 = sphi 0, %s291
      %s295 = sphi 0, %s294
      %s311 = sphi 0, %s295
    $region4: #{tpu_custom_call.1} parent=1 // loop_header_branch
      %21 = sbr.rel (%p19) target = $region8
    $region5: #{tpu_custom_call.1} parent=1 // loop_body
      %s23 = ssub.s32 %s18, 1
      %s24 = ssub.s32 %s18, 2
      %s31 = sadd.s32 1, %s26
      %p32 = scmp.ge.s32.totalorder %s31, 2
      %s33 = scalar_select %p32, 0, %s31
      %s34 = sadd.s32 1, %s25
      %s35 = scalar_select %p32, %s34, %s25
      %p36 = scmp.ge.s32.totalorder %s35, 1
      %s37 = scalar_select %p36, 0, %s35
      %s38 = ssub.s32 %s25, %s37
      %p39 = scmp.eq.s32.totalorder %s38, 0
      %s41 = sadd.s32 %s40, 1
      %s42 = scalar_select %p39, %s40, %s41
      %p45 = pneg %p39
      %p46 = scmp.eq.s32.totalorder %s18, 1
      %p47 = por %p45, %p46
      %p48 = scmp.ne.s32.totalorder %s40, %s43
      %p49 = scmp.eq.s32.totalorder %s18, 0
      %p50 = por %p48, %p49
      %p51 = scmp.ne.s32.totalorder %s40, %s43
      %p52 = scmp.eq.s32.totalorder %s23, 1
      %p53 = por %p51, %p52
      %p54 = scmp.ne.s32.totalorder %s43, %s44
      %p55 = scmp.eq.s32.totalorder %s23, 0
      %p56 = por %p54, %p55
      %p57 = scmp.ne.s32.totalorder %s43, %s44
      %p58 = scmp.eq.s32.totalorder %s24, 1
      %p59 = por %p57, %p58
      %p61 = scmp.ne.s32.totalorder %s44, %s60
      %p62 = scmp.eq.s32.totalorder %s24, 0
      %p63 = por %p61, %p62
      %s65 = sadd.s32 %s64, 1
      %p68 = scmp.eq.s32.totalorder %s18, 1
      %p69 = scmp.ne.s32.totalorder %s64, %s66
      %p70 = scmp.eq.s32.totalorder %s18, 0
      %p71 = por %p69, %p70
      %p72 = scmp.ne.s32.totalorder %s64, %s66
      %p73 = scmp.eq.s32.totalorder %s23, 1
      %p74 = por %p72, %p73
      %p75 = scmp.ne.s32.totalorder %s66, %s67
      %p76 = scmp.eq.s32.totalorder %s23, 0
      %p77 = por %p75, %p76
      %p78 = scmp.ne.s32.totalorder %s66, %s67
      %p79 = scmp.eq.s32.totalorder %s24, 1
      %p80 = por %p78, %p79
      %p82 = scmp.ne.s32.totalorder %s67, %s81
      %p83 = scmp.eq.s32.totalorder %s24, 0
      %p84 = por %p82, %p83
      %s86 = sadd.s32 %s85, 1
      %p89 = scmp.eq.s32.totalorder %s18, 1
      %p90 = scmp.ne.s32.totalorder %s85, %s87
      %p91 = scmp.eq.s32.totalorder %s18, 0
      %p92 = por %p90, %p91
      %p93 = scmp.ne.s32.totalorder %s85, %s87
      %p94 = scmp.eq.s32.totalorder %s23, 1
      %p95 = por %p93, %p94
      %p96 = scmp.ne.s32.totalorder %s87, %s88
      %p97 = scmp.eq.s32.totalorder %s23, 0
      %p98 = por %p96, %p97
      %p99 = scmp.ne.s32.totalorder %s87, %s88
      %p100 = scmp.eq.s32.totalorder %s24, 1
      %p101 = por %p99, %p100
      %p103 = scmp.ne.s32.totalorder %s88, %s102
      %p104 = scmp.eq.s32.totalorder %s24, 0
      %p105 = por %p103, %p104
      %s107 = sadd.s32 %s106, 1
      %p110 = scmp.eq.s32.totalorder %s18, 1
      %p111 = scmp.ne.s32.totalorder %s106, %s108
      %p112 = scmp.eq.s32.totalorder %s18, 0
      %p113 = por %p111, %p112
      %p114 = scmp.ne.s32.totalorder %s106, %s108
      %p115 = scmp.eq.s32.totalorder %s23, 1
      %p116 = por %p114, %p115
      %p117 = scmp.ne.s32.totalorder %s108, %s109
      %p118 = scmp.eq.s32.totalorder %s23, 0
      %p119 = por %p117, %p118
      %p120 = scmp.ne.s32.totalorder %s108, %s109
      %p121 = scmp.eq.s32.totalorder %s24, 1
      %p122 = por %p120, %p121
      %p124 = scmp.ne.s32.totalorder %s109, %s123
      %p125 = scmp.eq.s32.totalorder %s24, 0
      %p126 = por %p124, %p125
      %s128 = sadd.s32 %s127, 1
      %p131 = scmp.eq.s32.totalorder %s18, 1
      %p132 = scmp.ne.s32.totalorder %s127, %s129
      %p133 = scmp.eq.s32.totalorder %s18, 0
      %p134 = por %p132, %p133
      %p135 = scmp.ne.s32.totalorder %s127, %s129
      %p136 = scmp.eq.s32.totalorder %s23, 1
      %p137 = por %p135, %p136
      %p138 = scmp.ne.s32.totalorder %s129, %s130
      %p139 = scmp.eq.s32.totalorder %s23, 0
      %p140 = por %p138, %p139
      %p141 = scmp.ne.s32.totalorder %s129, %s130
      %p142 = scmp.eq.s32.totalorder %s24, 1
      %p143 = por %p141, %p142
      %p145 = scmp.ne.s32.totalorder %s130, %s144
      %p146 = scmp.eq.s32.totalorder %s24, 0
      %p147 = por %p145, %p146
      %s149 = sadd.s32 %s148, 1
      %p152 = scmp.eq.s32.totalorder %s18, 1
      %p153 = scmp.ne.s32.totalorder %s148, %s150
      %p154 = scmp.eq.s32.totalorder %s18, 0
      %p155 = por %p153, %p154
      %p156 = scmp.ne.s32.totalorder %s148, %s150
      %p157 = scmp.eq.s32.totalorder %s23, 1
      %p158 = por %p156, %p157
      %p159 = scmp.ne.s32.totalorder %s150, %s151
      %p160 = scmp.eq.s32.totalorder %s23, 0
      %p161 = por %p159, %p160
      %p162 = scmp.ne.s32.totalorder %s150, %s151
      %p163 = scmp.eq.s32.totalorder %s24, 1
      %p164 = por %p162, %p163
      %p166 = scmp.ne.s32.totalorder %s151, %s165
      %p167 = scmp.eq.s32.totalorder %s24, 0
      %p168 = por %p166, %p167
      %s170 = sadd.s32 %s169, 1
      %p173 = scmp.eq.s32.totalorder %s18, 1
      %p174 = scmp.ne.s32.totalorder %s169, %s171
      %p175 = scmp.eq.s32.totalorder %s18, 0
      %p176 = por %p174, %p175
      %p177 = scmp.ne.s32.totalorder %s169, %s171
      %p178 = scmp.eq.s32.totalorder %s23, 1
      %p179 = por %p177, %p178
      %p180 = scmp.ne.s32.totalorder %s171, %s172
      %p181 = scmp.eq.s32.totalorder %s23, 0
      %p182 = por %p180, %p181
      %p183 = scmp.ne.s32.totalorder %s171, %s172
      %p184 = scmp.eq.s32.totalorder %s24, 1
      %p185 = por %p183, %p184
      %p187 = scmp.ne.s32.totalorder %s172, %s186
      %p188 = scmp.eq.s32.totalorder %s24, 0
      %p189 = por %p187, %p188
      %s190 = ssub.s32 %s26, %s33
      %p191 = scmp.eq.s32.totalorder %s190, 0
      %s193 = sadd.s32 %s192, 1
      %s194 = scalar_select %p191, %s192, %s193
      %p197 = pneg %p191
      %p198 = scmp.eq.s32.totalorder %s18, 1
      %p199 = por %p197, %p198
      %p200 = scmp.ne.s32.totalorder %s192, %s195
      %p201 = scmp.eq.s32.totalorder %s18, 0
      %p202 = por %p200, %p201
      %p203 = scmp.ne.s32.totalorder %s192, %s195
      %p204 = scmp.eq.s32.totalorder %s23, 1
      %p205 = por %p203, %p204
      %p206 = scmp.ne.s32.totalorder %s195, %s196
      %p207 = scmp.eq.s32.totalorder %s23, 0
      %p208 = por %p206, %p207
      %p209 = scmp.ne.s32.totalorder %s195, %s196
      %p210 = scmp.eq.s32.totalorder %s24, 1
      %p211 = por %p209, %p210
      %p213 = scmp.ne.s32.totalorder %s196, %s212
      %p214 = scmp.eq.s32.totalorder %s24, 0
      %p215 = por %p213, %p214
      %s216 = ssub.s32 %s26, %s33
      %p217 = scmp.eq.s32.totalorder %s216, 0
      %s219 = sadd.s32 %s218, 1
      %s220 = scalar_select %p217, %s218, %s219
      %p223 = pneg %p217
      %p224 = scmp.eq.s32.totalorder %s18, 1
      %p225 = por %p223, %p224
      %p226 = scmp.ne.s32.totalorder %s218, %s221
      %p227 = scmp.eq.s32.totalorder %s18, 0
      %p228 = por %p226, %p227
      %p229 = scmp.ne.s32.totalorder %s218, %s221
      %p230 = scmp.eq.s32.totalorder %s23, 1
      %p231 = por %p229, %p230
      %p232 = scmp.ne.s32.totalorder %s221, %s222
      %p233 = scmp.eq.s32.totalorder %s23, 0
      %p234 = por %p232, %p233
      %p235 = scmp.ne.s32.totalorder %s221, %s222
      %p236 = scmp.eq.s32.totalorder %s24, 1
      %p237 = por %p235, %p236
      %p239 = scmp.ne.s32.totalorder %s222, %s238
      %p240 = scmp.eq.s32.totalorder %s24, 0
      %p241 = por %p239, %p240
      %s242 = ssub.s32 %s26, %s33
      %p243 = scmp.eq.s32.totalorder %s242, 0
      %s245 = sadd.s32 %s244, 1
      %s246 = scalar_select %p243, %s244, %s245
      %p249 = pneg %p243
      %p250 = scmp.eq.s32.totalorder %s18, 1
      %p251 = por %p249, %p250
      %p252 = scmp.ne.s32.totalorder %s244, %s247
      %p253 = scmp.eq.s32.totalorder %s18, 0
      %p254 = por %p252, %p253
      %p255 = scmp.ne.s32.totalorder %s244, %s247
      %p256 = scmp.eq.s32.totalorder %s23, 1
      %p257 = por %p255, %p256
      %p258 = scmp.ne.s32.totalorder %s247, %s248
      %p259 = scmp.eq.s32.totalorder %s23, 0
      %p260 = por %p258, %p259
      %p261 = scmp.ne.s32.totalorder %s247, %s248
      %p262 = scmp.eq.s32.totalorder %s24, 1
      %p263 = por %p261, %p262
      %p265 = scmp.ne.s32.totalorder %s248, %s264
      %p266 = scmp.eq.s32.totalorder %s24, 0
      %p267 = por %p265, %p266
      %s269 = sadd.s32 %s268, 1
      %p272 = scmp.eq.s32.totalorder %s18, 1
      %p273 = scmp.ne.s32.totalorder %s268, %s270
      %p274 = scmp.eq.s32.totalorder %s18, 0
      %p275 = por %p273, %p274
      %p276 = scmp.ne.s32.totalorder %s268, %s270
      %p277 = scmp.eq.s32.totalorder %s23, 1
      %p278 = por %p276, %p277
      %p279 = scmp.ne.s32.totalorder %s270, %s271
      %p280 = scmp.eq.s32.totalorder %s23, 0
      %p281 = por %p279, %p280
      %p282 = scmp.ne.s32.totalorder %s270, %s271
      %p283 = scmp.eq.s32.totalorder %s24, 1
      %p284 = por %p282, %p283
      %p286 = scmp.ne.s32.totalorder %s271, %s285
      %p287 = scmp.eq.s32.totalorder %s24, 0
      %p288 = por %p286, %p287
      %s289 = ssub.s32 %s25, %s37
      %p290 = scmp.eq.s32.totalorder %s289, 0
      %s292 = sadd.s32 %s291, 1
      %s293 = scalar_select %p290, %s291, %s292
      %p296 = pneg %p290
      %p297 = scmp.eq.s32.totalorder %s18, 1
      %p298 = por %p296, %p297
      %p299 = scmp.ne.s32.totalorder %s291, %s294
      %p300 = scmp.eq.s32.totalorder %s18, 0
      %p301 = por %p299, %p300
      %p302 = scmp.ne.s32.totalorder %s291, %s294
      %p303 = scmp.eq.s32.totalorder %s23, 1
      %p304 = por %p302, %p303
      %p305 = scmp.ne.s32.totalorder %s294, %s295
      %p306 = scmp.eq.s32.totalorder %s23, 0
      %p307 = por %p305, %p306
      %p308 = scmp.ne.s32.totalorder %s294, %s295
      %p309 = scmp.eq.s32.totalorder %s24, 1
      %p310 = por %p308, %p309
      %p312 = scmp.ne.s32.totalorder %s295, %s311
      %p313 = scmp.eq.s32.totalorder %s24, 0
      %p314 = por %p312, %p313
      %p315 = scmp.le.s32.totalorder 1, %s18
      %p316 = scmp.lt.s32.totalorder %s18, 3
      %p317 = pnand %p315, %p316
      %p318 = pneg %p317
      // Predicated region
      $region9: #{tpu_custom_call.1} parent=5 // pred_check
        _
      $region10: #{tpu_custom_call.1} parent=5 // pred_check_branch
        %320 = sbr.rel (%p317) target = $region12
      $region11: #{tpu_custom_call.1} parent=5 // pred_region
        %s321 = ssub.s32 %s18, 1
        // Predicated region
        $region13: #{tpu_custom_call.1} parent=11 // pred_check
          %p322 = pneg %p56
        $region14: #{tpu_custom_call.1} parent=11 // pred_check_branch
          %324 = sbr.rel (%p322) target = $region16
        $region15: #{tpu_custom_call.1} parent=11 // pred_region
          %s325 = smul.u32 2, %s27
          %p326 = scmp.lt.s32.totalorder %s325, 1
          %s327 = scalar_select %p326, %s325, 1
          %s328 = smul.addr %s327, 2
          %s329 = smul.addr %s328, 8
          %s330 = scalar_lea.vmem %s0, %s329
          %s331 = smul.u32 2, %s27
        $region16: #{tpu_custom_call.1} parent=11 // pred_fallthru
          _
        // Predicated region
        $region17: #{tpu_custom_call.1} parent=11 // pred_check
          %p332 = pneg %p77
        $region18: #{tpu_custom_call.1} parent=11 // pred_check_branch
          %334 = sbr.rel (%p332) target = $region20
        $region19: #{tpu_custom_call.1} parent=11 // pred_region
          _
        $region20: #{tpu_custom_call.1} parent=11 // pred_fallthru
          _
        // Predicated region
        $region21: #{tpu_custom_call.1} parent=11 // pred_check
          %p335 = pneg %p98
        $region22: #{tpu_custom_call.1} parent=11 // pred_check_branch
          %337 = sbr.rel (%p335) target = $region24
        $region23: #{tpu_custom_call.1} parent=11 // pred_region
          _
        $region24: #{tpu_custom_call.1} parent=11 // pred_fallthru
          _
        // Predicated region
        $region25: #{tpu_custom_call.1} parent=11 // pred_check
          %p338 = pneg %p119
        $region26: #{tpu_custom_call.1} parent=11 // pred_check_branch
          %340 = sbr.rel (%p338) target = $region28
        $region27: #{tpu_custom_call.1} parent=11 // pred_region
          _
        $region28: #{tpu_custom_call.1} parent=11 // pred_fallthru
          _
        // Predicated region
        $region29: #{tpu_custom_call.1} parent=11 // pred_check
          %p341 = pneg %p140
        $region30: #{tpu_custom_call.1} parent=11 // pred_check_branch
          %343 = sbr.rel (%p341) target = $region32
        $region31: #{tpu_custom_call.1} parent=11 // pred_region
          _
        $region32: #{tpu_custom_call.1} parent=11 // pred_fallthru
          _
        // Predicated region
        $region33: #{tpu_custom_call.1} parent=11 // pred_check
          %p344 = pneg %p161
        $region34: #{tpu_custom_call.1} parent=11 // pred_check_branch
          %346 = sbr.rel (%p344) target = $region36
        $region35: #{tpu_custom_call.1} parent=11 // pred_region
          _
        $region36: #{tpu_custom_call.1} parent=11 // pred_fallthru
          _
        // Predicated region
        $region37: #{tpu_custom_call.1} parent=11 // pred_check
          %p347 = pneg %p182
        $region38: #{tpu_custom_call.1} parent=11 // pred_check_branch
          %349 = sbr.rel (%p347) target = $region40
        $region39: #{tpu_custom_call.1} parent=11 // pred_region
          _
        $region40: #{tpu_custom_call.1} parent=11 // pred_fallthru
          _
        // Predicated region
        $region41: #{tpu_custom_call.1} parent=11 // pred_check
          %p350 = pneg %p281
        $region42: #{tpu_custom_call.1} parent=11 // pred_check_branch
          %352 = sbr.rel (%p350) target = $region44
        $region43: #{tpu_custom_call.1} parent=11 // pred_region
          _
        $region44: #{tpu_custom_call.1} parent=11 // pred_fallthru
          _
      $region12: #{tpu_custom_call.1} parent=5 // pred_fallthru
        _
      %p353 = scmp.lt.s32.totalorder %s18, 2
      // Predicated region
      $region45: #{tpu_custom_call.1} parent=5 // pred_check
        %p354 = pneg %p353
      $region46: #{tpu_custom_call.1} parent=5 // pred_check_branch
        %356 = sbr.rel (%p354) target = $region48
      $region47: #{tpu_custom_call.1} parent=5 // pred_region
        // Predicated region
        $region49: #{tpu_custom_call.1} parent=47 // pred_check
          %p357 = pneg %p202
        $region50: #{tpu_custom_call.1} parent=47 // pred_check_branch
          %359 = sbr.rel (%p357) target = $region52
        $region51: #{tpu_custom_call.1} parent=47 // pred_region
          %s360 = sand.u32 %s192, 1
          %s361 = sand.u32 %s192, 1
          %s362 = smul.addr %s361, 32
          %s363 = scalar_lea.vmem [#allocation5], %s362
          %s364 = smul.addr %s26, 4
          %s365 = scalar_lea.vmem %s7, %s364
          // Predicated region
          $region53: #{tpu_custom_call.1} parent=51 // pred_check
            _
          $region54: #{tpu_custom_call.1} parent=51 // pred_check_branch
            %367 = sbr.rel (0) target = $region56
          $region55: #{tpu_custom_call.1} parent=51 // pred_region
            // Predicated region
            $region57: #{tpu_custom_call.1} parent=55 // pred_check
              _
            $region58: #{tpu_custom_call.1} parent=55 // pred_check_branch
              %369 = sbr.rel target = $region60
            $region59: #{tpu_custom_call.1} parent=55 // pred_region
              // Predicated region
              $region72: #{tpu_custom_call.1} parent=59 // pred_check
                _
              $region73: #{tpu_custom_call.1} parent=59 // pred_check_branch
                %398 = sbr.rel (0) target = $region75
              $region74: #{tpu_custom_call.1} parent=59 // pred_region
                loop: start=0, step=1, limit=1
                $region76: #{tpu_custom_call.1} parent=74 // loop_pre_header
                  _
                $region77: #{tpu_custom_call.1} parent=74 // loop_header
                  %s400 = sphi 0, %s404
                  %p401 = scmp.ge.s32.totalorder %s400, 1
                  %s405 = sphi %s365, %s365
                  %s406 = sphi %s363, %s363
                $region78: #{tpu_custom_call.1} parent=74 // loop_header_branch
                  %403 = sbr.rel (%p401) target = $region82
                $region79: #{tpu_custom_call.1} parent=74 // loop_body
                  _
                $region80: #{tpu_custom_call.1} parent=74 // loop_footer
                  %s404 = sadd.s32 1, %s400
                $region81: #{tpu_custom_call.1} parent=74 // loop_footer_branch
                  %399 = sbr.rel target = $region77
                $region82: #{tpu_custom_call.1} parent=74 // loop_exit
                  _
                loop: start=0, step=1, limit=1
                $region83: #{tpu_custom_call.1} parent=74 // loop_pre_header
                  _
                $region84: #{tpu_custom_call.1} parent=74 // loop_header
                  %s409 = sphi 0, %s413
                  %p410 = scmp.ge.s32.totalorder %s409, 1
                  %s414 = sphi %s365, %s365
                  %s415 = sphi %s363, %s363
                $region85: #{tpu_custom_call.1} parent=74 // loop_header_branch
                  %412 = sbr.rel (%p410) target = $region89
                $region86: #{tpu_custom_call.1} parent=74 // loop_body
                  %v416 = vld [vmem:[%s414] sm:$0xf]
                  %417 = vst [vmem:[%s415] sm:$0xf] %v416
                  %v418 = vld [vmem:[%s414 + $0x8] sm:$0xf]
                  %419 = vst [vmem:[%s415 + $0x4] sm:$0xf] %v418
                  %v420 = vld [vmem:[%s414 + $0x10] sm:$0xf]
                  %421 = vst [vmem:[%s415 + $0x8] sm:$0xf] %v420
                  %v422 = vld [vmem:[%s414 + $0x18] sm:$0xf]
                  %423 = vst [vmem:[%s415 + $0xc] sm:$0xf] %v422
                  %v424 = vld [vmem:[%s414 + $0x20] sm:$0xf]
                  %425 = vst [vmem:[%s415 + $0x10] sm:$0xf] %v424
                  %v426 = vld [vmem:[%s414 + $0x28] sm:$0xf]
                  %427 = vst [vmem:[%s415 + $0x14] sm:$0xf] %v426
                  %v428 = vld [vmem:[%s414 + $0x30] sm:$0xf]
                  %429 = vst [vmem:[%s415 + $0x18] sm:$0xf] %v428
                  %v430 = vld [vmem:[%s414 + $0x38] sm:$0xf]
                  %431 = vst [vmem:[%s415 + $0x1c] sm:$0xf] %v430
                $region87: #{tpu_custom_call.1} parent=74 // loop_footer
                  %s413 = sadd.s32 1, %s409
                $region88: #{tpu_custom_call.1} parent=74 // loop_footer_branch
                  %408 = sbr.rel target = $region84
                $region89: #{tpu_custom_call.1} parent=74 // loop_exit
                  _
              $region75: #{tpu_custom_call.1} parent=59 // pred_fallthru
                _
            $region60: #{tpu_custom_call.1} parent=55 // pred_fallthru
              _
            // Predicated region
            $region61: #{tpu_custom_call.1} parent=55 // pred_check
              _
            $region62: #{tpu_custom_call.1} parent=55 // pred_check_branch
              %371 = sbr.rel (0) target = $region64
            $region63: #{tpu_custom_call.1} parent=55 // pred_region
              loop: start=0, step=1, limit=1
              $region65: #{tpu_custom_call.1} parent=63 // loop_pre_header
                _
              $region66: #{tpu_custom_call.1} parent=63 // loop_header
                %s374 = sphi 0, %s378
                %p375 = scmp.ge.s32.totalorder %s374, 1
                %s379 = sphi %s365, %s365
                %s380 = sphi %s363, %s363
              $region67: #{tpu_custom_call.1} parent=63 // loop_header_branch
                %377 = sbr.rel (%p375) target = $region71
              $region68: #{tpu_custom_call.1} parent=63 // loop_body
                %v381 = vld [vmem:[%s379] sm:$0xf]
                %382 = vst [vmem:[%s380] sm:$0xf] %v381
                %v383 = vld [vmem:[%s379 + $0x8] sm:$0xf]
                %384 = vst [vmem:[%s380 + $0x4] sm:$0xf] %v383
                %v385 = vld [vmem:[%s379 + $0x10] sm:$0xf]
                %386 = vst [vmem:[%s380 + $0x8] sm:$0xf] %v385
                %v387 = vld [vmem:[%s379 + $0x18] sm:$0xf]
                %388 = vst [vmem:[%s380 + $0xc] sm:$0xf] %v387
                %v389 = vld [vmem:[%s379 + $0x20] sm:$0xf]
                %390 = vst [vmem:[%s380 + $0x10] sm:$0xf] %v389
                %v391 = vld [vmem:[%s379 + $0x28] sm:$0xf]
                %392 = vst [vmem:[%s380 + $0x14] sm:$0xf] %v391
                %v393 = vld [vmem:[%s379 + $0x30] sm:$0xf]
                %394 = vst [vmem:[%s380 + $0x18] sm:$0xf] %v393
                %v395 = vld [vmem:[%s379 + $0x38] sm:$0xf]
                %396 = vst [vmem:[%s380 + $0x1c] sm:$0xf] %v395
              $region69: #{tpu_custom_call.1} parent=63 // loop_footer
                %s378 = sadd.s32 1, %s374
              $region70: #{tpu_custom_call.1} parent=63 // loop_footer_branch
                %373 = sbr.rel target = $region66
              $region71: #{tpu_custom_call.1} parent=63 // loop_exit
                _
            $region64: #{tpu_custom_call.1} parent=55 // pred_fallthru
              _
          $region56: #{tpu_custom_call.1} parent=51 // pred_fallthru
            _
          %432 = vnop
        $region52: #{tpu_custom_call.1} parent=47 // pred_fallthru
          _
        // Predicated region
        $region90: #{tpu_custom_call.1} parent=47 // pred_check
          %p433 = pneg %p228
        $region91: #{tpu_custom_call.1} parent=47 // pred_check_branch
          %435 = sbr.rel (%p433) target = $region93
        $region92: #{tpu_custom_call.1} parent=47 // pred_region
          %p436 = scmp.lt.s32.totalorder %s26, 1
          %s437 = scalar_select %p436, %s26, 1
          %s438 = scalar_lea.vmem %s8, %s437
        $region93: #{tpu_custom_call.1} parent=47 // pred_fallthru
          _
        // Predicated region
        $region94: #{tpu_custom_call.1} parent=47 // pred_check
          %p439 = pneg %p254
        $region95: #{tpu_custom_call.1} parent=47 // pred_check_branch
          %441 = sbr.rel (%p439) target = $region97
        $region96: #{tpu_custom_call.1} parent=47 // pred_region
          %s442 = smul.u32 16, %s26
          %p443 = scmp.lt.s32.totalorder %s442, 31
          %s444 = scalar_select %p443, %s442, 31
          %s445 = smul.addr %s444, 4
          %s446 = scalar_lea.vmem %s9, %s445
          %s447 = smul.u32 16, %s26
        $region97: #{tpu_custom_call.1} parent=47 // pred_fallthru
          _
      $region48: #{tpu_custom_call.1} parent=5 // pred_fallthru
        _
      %p448 = scmp.le.s32.totalorder 1, %s18
      %p449 = scmp.lt.s32.totalorder %s18, 3
      %p450 = pnand %p448, %p449
      %p451 = pneg %p450
      // Predicated region
      $region98: #{tpu_custom_call.1} parent=5 // pred_check
        _
      $region99: #{tpu_custom_call.1} parent=5 // pred_check_branch
        %453 = sbr.rel (%p450) target = $region101
      $region100: #{tpu_custom_call.1} parent=5 // pred_region
        %s454 = ssub.s32 %s18, 1
        %s455 = sand.u32 %s195, 1
        %s456 = sand.u32 %s195, 1
        %s457 = smul.addr %s456, 32
        %s458 = scalar_lea.vmem [#allocation5], %s457
        // Predicated region
        $region102: #{tpu_custom_call.1} parent=100 // pred_check
          %p459 = pneg %p208
        $region103: #{tpu_custom_call.1} parent=100 // pred_check_branch
          %461 = sbr.rel (%p459) target = $region105
        $region104: #{tpu_custom_call.1} parent=100 // pred_region
          _
        $region105: #{tpu_custom_call.1} parent=100 // pred_fallthru
          _
        %s462 = smul.u32 2, %s27
        %p463 = scmp.lt.s32.totalorder %s462, 1
        %s464 = scalar_select %p463, %s462, 1
        %s465 = smul.addr %s464, 2
        %s466 = smul.addr %s465, 8
        %s467 = scalar_lea.vmem %s0, %s466
        %p468 = pneg %p56
        %p469 = pneg %p53
        %p470 = pneg %p77
        %p471 = pneg %p74
        %p472 = pneg %p98
        %p473 = pneg %p95
        %p474 = pneg %p119
        %p475 = pneg %p116
        %p476 = pneg %p140
        %p477 = pneg %p137
        %p478 = pneg %p161
        %p479 = pneg %p158
        %p480 = pneg %p182
        %p481 = pneg %p179
        %s482 = sand.u32 %s195, 1
        %s483 = sand.u32 %s195, 1
        %s484 = smul.addr %s483, 32
        %s485 = scalar_lea.vmem [#allocation5], %s484
        %p486 = pneg %p208
        %p487 = pneg %p205
        %p488 = scmp.lt.s32.totalorder %s28, 1
        %s489 = scalar_select %p488, %s28, 1
        %s490 = scalar_lea.vmem %s8, %s489
        %p491 = pneg %p234
        %p492 = pneg %p231
        %s493 = smul.u32 16, %s28
        %p494 = scmp.lt.s32.totalorder %s493, 31
        %s495 = scalar_select %p494, %s493, 31
        %s496 = smul.addr %s495, 4
        %s497 = scalar_lea.vmem %s9, %s496
        %p498 = pneg %p260
        %p499 = pneg %p257
        %p500 = pneg %p281
        %p501 = pneg %p278
        %p502 = pneg %p307
        %p503 = pneg %p304
        %s504 = smul.u32 2, %s27
        %p505 = scmp.lt.s32.totalorder %s504, 1
        %s506 = scalar_select %p505, %s504, 1
        %s507 = smul.addr %s506, 2
        %s508 = smul.addr %s507, 8
        %s509 = scalar_lea.vmem %s0, %s508
        %s510 = smul.u32 2, %s27
        %p511 = scmp.lt.s32.totalorder %s28, 1
        %s512 = scalar_select %p511, %s28, 1
        %s513 = scalar_lea.vmem %s8, %s512
        %s514 = smul.u32 16, %s28
        %p515 = scmp.lt.s32.totalorder %s514, 31
        %s516 = scalar_select %p515, %s514, 31
        %s517 = smul.addr %s516, 4
        %s518 = scalar_lea.vmem %s9, %s517
        %s519 = smul.u32 16, %s28
        %s520 = smul.u32 2, %s27
        %p522 = scmp.eq.s32.totalorder %s28, 0
        // Predicated region
        $region106: #{tpu_custom_call.1} parent=100 // pred_check
          %p523 = pneg %p522
        $region107: #{tpu_custom_call.1} parent=100 // pred_check_branch
          %525 = sbr.rel (%p523) target = $region109
        $region108: #{tpu_custom_call.1} parent=100 // pred_region
          %v526 = vld [vmem:[%s509] sm:$0xff]
          %v527 = vld [vmem:[%s509 + $0x8] sm:$0xff]
          %v528 = vld [vmem:[%s509 + $0x10] sm:$0xff]
          %v529 = vld [vmem:[%s509 + $0x18] sm:$0xff]
          %vm530 = vcmask 523264
          %v531 = vsel %vm530, %v526, 0.0
          %532 = vadd.xlane.f32.xlu0 %v531
          %v533 = vpop.xlane.xlu0 %532
          %v534 = vsel %vm530, %v527, 0.0
          %535 = vadd.xlane.f32.xlu0 %v534
          %v536 = vpop.xlane.xlu0 %535
          %v537 = vsel %vm530, %v528, 0.0
          %538 = vadd.xlane.f32.xlu0 %v537
          %v539 = vpop.xlane.xlu0 %538
          %v540 = vsel %vm530, %v529, 0.0
          %541 = vadd.xlane.f32.xlu0 %v540
          %v542 = vpop.xlane.xlu0 %541
          %v543 = vrcp.pop 64.0
          %v544 = vmul.f32 %v533, %v543
          %v545 = vmul.f32 %v536, %v543
          %v546 = vmul.f32 %v539, %v543
          %v547 = vmul.f32 %v542, %v543
          %v548 = vsub.f32 %v526, %v544
          %v549 = vsub.f32 %v527, %v545
          %v550 = vsub.f32 %v528, %v546
          %v551 = vsub.f32 %v529, %v547
          %v552 = vmul.f32 %v548, %v548
          %v553 = vmul.f32 %v549, %v549
          %v554 = vmul.f32 %v550, %v550
          %v555 = vmul.f32 %v551, %v551
          %v556 = vsel %vm530, %v552, 0.0
          %557 = vadd.xlane.f32.xlu0 %v556
          %v558 = vpop.xlane.xlu0 %557
          %v559 = vsel %vm530, %v553, 0.0
          %560 = vadd.xlane.f32.xlu0 %v559
          %v561 = vpop.xlane.xlu0 %560
          %v562 = vsel %vm530, %v554, 0.0
          %563 = vadd.xlane.f32.xlu0 %v562
          %v564 = vpop.xlane.xlu0 %563
          %v565 = vsel %vm530, %v555, 0.0
          %566 = vadd.xlane.f32.xlu0 %v565
          %v567 = vpop.xlane.xlu0 %566
          %v568 = vmul.f32 %v558, %v543
          %v569 = vmul.f32 %v561, %v543
          %v570 = vmul.f32 %v564, %v543
          %v571 = vmul.f32 %v567, %v543
          %v572 = vadd.f32 %v568, 1e-05
          %v573 = vadd.f32 %v569, 1e-05
          %v574 = vadd.f32 %v570, 1e-05
          %v575 = vadd.f32 %v571, 1e-05
          %v576 = vrsqrt.pop %v572
          %v577 = vrsqrt.pop %v573
          %v578 = vrsqrt.pop %v574
          %v579 = vrsqrt.pop %v575
          %v580 = vmul.f32 %v548, %v576
          %v581 = vmul.f32 %v549, %v577
          %v582 = vmul.f32 %v550, %v578
          %v583 = vmul.f32 %v551, %v579
          %v584 = vld [vmem:[%s1] sm:$0x1]
          %v586 = vlaneseq
          %v587 = vshrl.u32 %v586, 7
          %v588 = vsub.s32 0, %v587
          %v589 = vrot.slane %v584, %v588
          %v591 = vmul.f32 %v580, %v589
          %v592 = vmul.f32 %v581, %v589
          %v593 = vmul.f32 %v582, %v589
          %v594 = vmul.f32 %v583, %v589
          %v595 = vld [vmem:[%s2] sm:$0x1]
          %v597 = vlaneseq
          %v598 = vshrl.u32 %v597, 7
          %v599 = vsub.s32 0, %v598
          %v600 = vrot.slane %v595, %v599
          %v602 = vadd.f32 %v591, %v600
          %v603 = vadd.f32 %v592, %v600
          %v604 = vadd.f32 %v593, %v600
          %v605 = vadd.f32 %v594, %v600
          %v606 = vpack.c.bf16 %v603, %v602
          %v607 = vpack.c.bf16 %v605, %v604
          %v608 = vld [vmem:[%s3] sm:$0xff]
          %v609 = vld [vmem:[%s3 + $0x8] sm:$0xff]
          %v610 = vld [vmem:[%s3 + $0x10] sm:$0xff]
          %v611 = vld [vmem:[%s3 + $0x18] sm:$0xff]
          %v612 = vld [vmem:[%s3 + $0x20] sm:$0xff]
          %v613 = vld [vmem:[%s3 + $0x28] sm:$0xff]
          %v614 = vld [vmem:[%s3 + $0x30] sm:$0xff]
          %v615 = vld [vmem:[%s3 + $0x38] sm:$0xff]
          %v616 = vld [vmem:[%s4] sm:$0x3]
          %v618 = vlaneseq
          %v619 = vshrl.u32 %v618, 7
          %v620 = vsub.s32 0, %v619
          %v621 = vrot.slane %v616, %v620
          %v622 = vlaneseq
          %v623 = vshrl.u32 %v622, 7
          %v624 = vsub.s32 1, %v623
          %v625 = vrot.slane %v616, %v624
          %v636 = vunpack.c.l.b16 %v608
          %v637 = vunpack.c.h.b16 %v608
          %v638 = vunpack.c.l.b16 %v609
          %v639 = vunpack.c.h.b16 %v609
          %v640 = vunpack.c.l.b16 %v610
          %v641 = vunpack.c.h.b16 %v610
          %v642 = vunpack.c.l.b16 %v611
          %v643 = vunpack.c.h.b16 %v611
          %v644 = vunpack.c.l.b16 %v612
          %v645 = vunpack.c.h.b16 %v612
          %v646 = vunpack.c.l.b16 %v613
          %v647 = vunpack.c.h.b16 %v613
          %v648 = vunpack.c.l.b16 %v614
          %v649 = vunpack.c.h.b16 %v614
          %v650 = vunpack.c.l.b16 %v615
          %v651 = vunpack.c.h.b16 %v615
          %v652 = vpack.c.b16 %v638, %v636
          %v653 = vpack.c.b16 %v639, %v637
          %v654 = vpack.c.b16 %v642, %v640
          %v655 = vpack.c.b16 %v643, %v641
          %v656 = vpack.c.b16 %v646, %v644
          %v657 = vpack.c.b16 %v647, %v645
          %v658 = vpack.c.b16 %v650, %v648
          %v659 = vpack.c.b16 %v651, %v649
          %v669 = vsel %vm530, %v606, 0
          %v672 = vsel %vm530, %v607, 0
          %674 = vmatprep.subr.bf16.mxu0 %v653
          %675 = vmatpush1.bf16.msra.mxu0 %v652
          %676 = vmatprep.subr.bf16.mxu0 %v655
          %677 = vmatpush1.bf16.msra.mxu0 %v654
          %678 = vmatprep.subr.bf16.mxu0 %v657
          %679 = vmatpush1.bf16.msra.mxu0 %v656
          %680 = vmatprep.subr.bf16.mxu0 %v659
          %681 = vmatpush1.bf16.msra.mxu0 %v658
          %682 = vmatprep.subr.bf16.mxu0 0
          %683 = vmatpush1.bf16.msra.mxu0 0
          %684 = vmatprep.subr.bf16.mxu0 0
          %685 = vmatpush1.bf16.msra.mxu0 0
          %686 = vmatprep.subr.bf16.mxu0 0
          %687 = vmatpush1.bf16.msra.mxu0 0
          %688 = vmatprep.subr.bf16.mxu0 0
          %689 = vmatpush1.bf16.msra.mxu0 0
          %690 = vmatprep.subr.bf16.mxu0 0
          %691 = vmatpush1.bf16.msra.mxu0 0
          %692 = vmatprep.subr.bf16.mxu0 0
          %693 = vmatpush1.bf16.msra.mxu0 0
          %694 = vmatprep.subr.bf16.mxu0 0
          %695 = vmatpush1.bf16.msra.mxu0 0
          %696 = vmatprep.subr.bf16.mxu0 0
          %697 = vmatpush1.bf16.msra.mxu0 0
          %698 = vmatprep.subr.bf16.mxu0 0
          %699 = vmatpush1.bf16.msra.mxu0 0
          %700 = vmatprep.subr.bf16.mxu0 0
          %701 = vmatpush1.bf16.msra.mxu0 0
          %702 = vmatprep.subr.bf16.mxu0 0
          %703 = vmatpush1.bf16.msra.mxu0 0
          %704 = vmatprep.subr.bf16.mxu0 0
          %705 = vmatpush1.bf16.msra.mxu0 0
          %706 = vmatprep.mubr.bf16.mxu0 0
          %707 = vmatmul.mubr.bf16.gmra.mrb[0].mxu0 %v669
          %v708 = vpop.f32.mrb[0].mxu0
          %v709 = vadd.f32 %v621, %v708
          %v710 = vpop.f32.mrb[0].mxu0
          %v711 = vadd.f32 %v625, %v710
          %v712 = vpop.f32.mrb[0].mxu0
          %v713 = vadd.f32 %v621, %v712
          %v714 = vpop.f32.mrb[0].mxu0
          %v715 = vadd.f32 %v625, %v714
          %716 = vmatprep.mubr.bf16.mxu0 0
          %717 = vmatmul.mubr.bf16.gmra.mrb[0].mxu0 %v672
          %v718 = vpop.f32.mrb[0].mxu0
          %v719 = vadd.f32 %v621, %v718
          %v720 = vpop.f32.mrb[0].mxu0
          %v721 = vadd.f32 %v625, %v720
          %v722 = vpop.f32.mrb[0].mxu0
          %v723 = vadd.f32 %v621, %v722
          %v724 = vpop.f32.mrb[0].mxu0
          %v725 = vadd.f32 %v625, %v724
          %726 = vdwg.mxu0
          %v727 = vpack.c.bf16 %v713, %v709
          %v728 = vpack.c.bf16 %v715, %v711
          %v729 = vpack.c.bf16 %v723, %v719
          %v730 = vpack.c.bf16 %v725, %v721
          %v731 = vlaneseq
          %v732 = vand.u32 %v731, 127
          %vm733 = vcmp.lt.s32.totalorder %v732, 12
          %v734 = vsel %vm733, 0.0, -1e+30
          %736 = vrot.lane.b32.xlu0 %v727, 64
          %v737 = vpop.permute.xlu0 %736
          %vm738 = vcmask 130048
          %v740 = vsel %vm738, %v727, 0
          %v743 = vsel %vm738, %v737, 0
          %745 = vmatprep.subr.bf16.mxu0 0
          %746 = vmatpush1.bf16.xpose.msra.mxu0 %v743
          %747 = vmatprep.subr.bf16.mxu0 0
          %748 = vmatpush1.bf16.xpose.msra.mxu0 0
          %749 = vmatprep.subr.bf16.mxu0 0
          %750 = vmatpush1.bf16.xpose.msra.mxu0 0
          %751 = vmatprep.subr.bf16.mxu0 0
          %752 = vmatpush1.bf16.xpose.msra.mxu0 0
          %753 = vmatprep.subr.bf16.mxu0 0
          %754 = vmatpush1.bf16.xpose.msra.mxu0 0
          %755 = vmatprep.subr.bf16.mxu0 0
          %756 = vmatpush1.bf16.xpose.msra.mxu0 0
          %757 = vmatprep.subr.bf16.mxu0 0
          %758 = vmatpush1.bf16.xpose.msra.mxu0 0
          %759 = vmatprep.subr.bf16.mxu0 0
          %760 = vmatpush1.bf16.xpose.msra.mxu0 0
          %761 = vmatprep.subr.bf16.mxu0 0
          %762 = vmatpush1.bf16.xpose.msra.mxu0 0
          %763 = vmatprep.subr.bf16.mxu0 0
          %764 = vmatpush1.bf16.xpose.msra.mxu0 0
          %765 = vmatprep.subr.bf16.mxu0 0
          %766 = vmatpush1.bf16.xpose.msra.mxu0 0
          %767 = vmatprep.subr.bf16.mxu0 0
          %768 = vmatpush1.bf16.xpose.msra.mxu0 0
          %769 = vmatprep.subr.bf16.mxu0 0
          %770 = vmatpush1.bf16.xpose.msra.mxu0 0
          %771 = vmatprep.subr.bf16.mxu0 0
          %772 = vmatpush1.bf16.xpose.msra.mxu0 0
          %773 = vmatprep.subr.bf16.mxu0 0
          %774 = vmatpush1.bf16.xpose.msra.mxu0 0
          %775 = vmatprep.subr.bf16.mxu0 0
          %776 = vmatpush1.bf16.xpose.msra.mxu0 0
          %777 = vmatprep.mubr.bf16.mxu0 0
          %778 = vmatmul.mubr.bf16.gmra.mrb[0].mxu0 %v740
          %v779 = vpop.f32.mrb[0].mxu0
          %v780 = vadd.f32 0.0, %v779
          %v781 = vpop.f32.mrb[0].mxu0
          %v782 = vpop.f32.mrb[0].mxu0
          %v783 = vadd.f32 0.0, %v782
          %v784 = vpop.f32.mrb[0].mxu0
          %785 = vdwg.mxu0
          %v786 = vmul.f32 %v780, 0.25
          %v787 = vmul.f32 %v783, 0.25
          %v788 = vadd.f32 %v786, %v734
          %v789 = vadd.f32 %v787, %v734
          %v790 = vsel %vm738, %v788, -inf
          %791 = vmax.xlane.f32.xlu0 %v790
          %v792 = vpop.xlane.xlu0 %791
          %v793 = vsel %vm738, %v789, -inf
          %794 = vmax.xlane.f32.xlu0 %v793
          %v795 = vpop.xlane.xlu0 %794
          %v796 = vsub.f32 %v788, %v792
          %v797 = vsub.f32 %v789, %v795
          %v798 = vmul.f32 %v796, 1.442695
          %v799 = vpow.pop %v798
          %v800 = vmul.f32 %v797, 1.442695
          %v801 = vpow.pop %v800
          %v802 = vsel %vm738, %v799, 0.0
          %803 = vadd.xlane.f32.xlu0 %v802
          %v804 = vpop.xlane.xlu0 %803
          %v805 = vsel %vm738, %v801, 0.0
          %806 = vadd.xlane.f32.xlu0 %v805
          %v807 = vpop.xlane.xlu0 %806
          %v808 = vrcp.pop %v804
          %v809 = vrcp.pop %v807
          %v810 = vmul.f32 %v799, %v808
          %v811 = vmul.f32 %v801, %v809
          %v812 = vpack.c.bf16 %v811, %v810
          %v814 = vsel %vm738, %v812, 0
          %816 = vmatprep.subr.bf16.mxu0 0
          %817 = vmatpush1.bf16.msra.mxu0 %v728
          %818 = vmatprep.subr.bf16.mxu0 0
          %819 = vmatpush1.bf16.msra.mxu0 0
          %820 = vmatprep.subr.bf16.mxu0 0
          %821 = vmatpush1.bf16.msra.mxu0 0
          %822 = vmatprep.subr.bf16.mxu0 0
          %823 = vmatpush1.bf16.msra.mxu0 0
          %824 = vmatprep.subr.bf16.mxu0 0
          %825 = vmatpush1.bf16.msra.mxu0 0
          %826 = vmatprep.subr.bf16.mxu0 0
          %827 = vmatpush1.bf16.msra.mxu0 0
          %828 = vmatprep.subr.bf16.mxu0 0
          %829 = vmatpush1.bf16.msra.mxu0 0
          %830 = vmatprep.subr.bf16.mxu0 0
          %831 = vmatpush1.bf16.msra.mxu0 0
          %832 = vmatprep.subr.bf16.mxu0 0
          %833 = vmatpush1.bf16.msra.mxu0 0
          %834 = vmatprep.subr.bf16.mxu0 0
          %835 = vmatpush1.bf16.msra.mxu0 0
          %836 = vmatprep.subr.bf16.mxu0 0
          %837 = vmatpush1.bf16.msra.mxu0 0
          %838 = vmatprep.subr.bf16.mxu0 0
          %839 = vmatpush1.bf16.msra.mxu0 0
          %840 = vmatprep.subr.bf16.mxu0 0
          %841 = vmatpush1.bf16.msra.mxu0 0
          %842 = vmatprep.subr.bf16.mxu0 0
          %843 = vmatpush1.bf16.msra.mxu0 0
          %844 = vmatprep.subr.bf16.mxu0 0
          %845 = vmatpush1.bf16.msra.mxu0 0
          %846 = vmatprep.subr.bf16.mxu0 0
          %847 = vmatpush1.bf16.msra.mxu0 0
          %848 = vmatprep.mubr.bf16.mxu0 0
          %849 = vmatmul.mubr.bf16.gmra.mrb[0].mxu0 %v814
          %v850 = vpop.f32.mrb[0].mxu0
          %v851 = vadd.f32 0.0, %v850
          %v852 = vpop.f32.mrb[0].mxu0
          %v853 = vpop.f32.mrb[0].mxu0
          %v854 = vadd.f32 0.0, %v853
          %v855 = vpop.f32.mrb[0].mxu0
          %856 = vdwg.mxu0
          %857 = vrot.lane.b32.xlu0 %v727, 112
          %v858 = vpop.permute.xlu0 %857
          %859 = vrot.lane.b32.xlu0 %v727, 48
          %v860 = vpop.permute.xlu0 %859
          %v862 = vsel %vm738, %v858, 0
          %v865 = vsel %vm738, %v860, 0
          %867 = vmatprep.subr.bf16.mxu0 0
          %868 = vmatpush1.bf16.xpose.msra.mxu0 %v865
          %869 = vmatprep.subr.bf16.mxu0 0
          %870 = vmatpush1.bf16.xpose.msra.mxu0 0
          %871 = vmatprep.subr.bf16.mxu0 0
          %872 = vmatpush1.bf16.xpose.msra.mxu0 0
          %873 = vmatprep.subr.bf16.mxu0 0
          %874 = vmatpush1.bf16.xpose.msra.mxu0 0
          %875 = vmatprep.subr.bf16.mxu0 0
          %876 = vmatpush1.bf16.xpose.msra.mxu0 0
          %877 = vmatprep.subr.bf16.mxu0 0
          %878 = vmatpush1.bf16.xpose.msra.mxu0 0
          %879 = vmatprep.subr.bf16.mxu0 0
          %880 = vmatpush1.bf16.xpose.msra.mxu0 0
          %881 = vmatprep.subr.bf16.mxu0 0
          %882 = vmatpush1.bf16.xpose.msra.mxu0 0
          %883 = vmatprep.subr.bf16.mxu0 0
          %884 = vmatpush1.bf16.xpose.msra.mxu0 0
          %885 = vmatprep.subr.bf16.mxu0 0
          %886 = vmatpush1.bf16.xpose.msra.mxu0 0
          %887 = vmatprep.subr.bf16.mxu0 0
          %888 = vmatpush1.bf16.xpose.msra.mxu0 0
          %889 = vmatprep.subr.bf16.mxu0 0
          %890 = vmatpush1.bf16.xpose.msra.mxu0 0
          %891 = vmatprep.subr.bf16.mxu0 0
          %892 = vmatpush1.bf16.xpose.msra.mxu0 0
          %893 = vmatprep.subr.bf16.mxu0 0
          %894 = vmatpush1.bf16.xpose.msra.mxu0 0
          %895 = vmatprep.subr.bf16.mxu0 0
          %896 = vmatpush1.bf16.xpose.msra.mxu0 0
          %897 = vmatprep.subr.bf16.mxu0 0
          %898 = vmatpush1.bf16.xpose.msra.mxu0 0
          %899 = vmatprep.mubr.bf16.mxu0 0
          %900 = vmatmul.mubr.bf16.gmra.mrb[0].mxu0 %v862
          %v901 = vpop.f32.mrb[0].mxu0
          %v902 = vadd.f32 0.0, %v901
          %v903 = vpop.f32.mrb[0].mxu0
          %v904 = vpop.f32.mrb[0].mxu0
          %v905 = vadd.f32 0.0, %v904
          %v906 = vpop.f32.mrb[0].mxu0
          %907 = vdwg.mxu0
          %v908 = vmul.f32 %v902, 0.25
          %v909 = vmul.f32 %v905, 0.25
          %v910 = vadd.f32 %v908, %v734
          %v911 = vadd.f32 %v909, %v734
          %v912 = vsel %vm738, %v910, -inf
          %913 = vmax.xlane.f32.xlu0 %v912
          %v914 = vpop.xlane.xlu0 %913
          %v915 = vsel %vm738, %v911, -inf
          %916 = vmax.xlane.f32.xlu0 %v915
          %v917 = vpop.xlane.xlu0 %916
          %v918 = vsub.f32 %v910, %v914
          %v919 = vsub.f32 %v911, %v917
          %v920 = vmul.f32 %v918, 1.442695
          %v921 = vpow.pop %v920
          %v922 = vmul.f32 %v919, 1.442695
          %v923 = vpow.pop %v922
          %v924 = vsel %vm738, %v921, 0.0
          %925 = vadd.xlane.f32.xlu0 %v924
          %v926 = vpop.xlane.xlu0 %925
          %v927 = vsel %vm738, %v923, 0.0
          %928 = vadd.xlane.f32.xlu0 %v927
          %v929 = vpop.xlane.xlu0 %928
          %v930 = vrcp.pop %v926
          %v931 = vrcp.pop %v929
          %v932 = vmul.f32 %v921, %v930
          %v933 = vmul.f32 %v923, %v931
          %v934 = vpack.c.bf16 %v933, %v932
          %936 = vrot.lane.b32.xlu0 %v728, 112
          %v937 = vpop.permute.xlu0 %936
          %v940 = vsel %vm738, %v934, 0
          %942 = vmatprep.subr.bf16.mxu0 0
          %943 = vmatpush1.bf16.msra.mxu0 %v937
          %944 = vmatprep.subr.bf16.mxu0 0
          %945 = vmatpush1.bf16.msra.mxu0 0
          %946 = vmatprep.subr.bf16.mxu0 0
          %947 = vmatpush1.bf16.msra.mxu0 0
          %948 = vmatprep.subr.bf16.mxu0 0
          %949 = vmatpush1.bf16.msra.mxu0 0
          %950 = vmatprep.subr.bf16.mxu0 0
          %951 = vmatpush1.bf16.msra.mxu0 0
          %952 = vmatprep.subr.bf16.mxu0 0
          %953 = vmatpush1.bf16.msra.mxu0 0
          %954 = vmatprep.subr.bf16.mxu0 0
          %955 = vmatpush1.bf16.msra.mxu0 0
          %956 = vmatprep.subr.bf16.mxu0 0
          %957 = vmatpush1.bf16.msra.mxu0 0
          %958 = vmatprep.subr.bf16.mxu0 0
          %959 = vmatpush1.bf16.msra.mxu0 0
          %960 = vmatprep.subr.bf16.mxu0 0
          %961 = vmatpush1.bf16.msra.mxu0 0
          %962 = vmatprep.subr.bf16.mxu0 0
          %963 = vmatpush1.bf16.msra.mxu0 0
          %964 = vmatprep.subr.bf16.mxu0 0
          %965 = vmatpush1.bf16.msra.mxu0 0
          %966 = vmatprep.subr.bf16.mxu0 0
          %967 = vmatpush1.bf16.msra.mxu0 0
          %968 = vmatprep.subr.bf16.mxu0 0
          %969 = vmatpush1.bf16.msra.mxu0 0
          %970 = vmatprep.subr.bf16.mxu0 0
          %971 = vmatpush1.bf16.msra.mxu0 0
          %972 = vmatprep.subr.bf16.mxu0 0
          %973 = vmatpush1.bf16.msra.mxu0 0
          %974 = vmatprep.mubr.bf16.mxu0 0
          %975 = vmatmul.mubr.bf16.gmra.mrb[0].mxu0 %v940
          %v976 = vpop.f32.mrb[0].mxu0
          %v977 = vadd.f32 0.0, %v976
          %v978 = vpop.f32.mrb[0].mxu0
          %v979 = vpop.f32.mrb[0].mxu0
          %v980 = vadd.f32 0.0, %v979
          %v981 = vpop.f32.mrb[0].mxu0
          %982 = vdwg.mxu0
          %983 = vrot.lane.b32.xlu0 %v727, 96
          %v984 = vpop.permute.xlu0 %983
          %985 = vrot.lane.b32.xlu0 %v727, 32
          %v986 = vpop.permute.xlu0 %985
          %v988 = vsel %vm738, %v984, 0
          %v991 = vsel %vm738, %v986, 0
          %993 = vmatprep.subr.bf16.mxu0 0
          %994 = vmatpush1.bf16.xpose.msra.mxu0 %v991
          %995 = vmatprep.subr.bf16.mxu0 0
          %996 = vmatpush1.bf16.xpose.msra.mxu0 0
          %997 = vmatprep.subr.bf16.mxu0 0
          %998 = vmatpush1.bf16.xpose.msra.mxu0 0
          %999 = vmatprep.subr.bf16.mxu0 0
          %1000 = vmatpush1.bf16.xpose.msra.mxu0 0
          %1001 = vmatprep.subr.bf16.mxu0 0
          %1002 = vmatpush1.bf16.xpose.msra.mxu0 0
          %1003 = vmatprep.subr.bf16.mxu0 0
          %1004 = vmatpush1.bf16.xpose.msra.mxu0 0
          %1005 = vmatprep.subr.bf16.mxu0 0
          %1006 = vmatpush1.bf16.xpose.msra.mxu0 0
          %1007 = vmatprep.subr.bf16.mxu0 0
          %1008 = vmatpush1.bf16.xpose.msra.mxu0 0
          %1009 = vmatprep.subr.bf16.mxu0 0
          %1010 = vmatpush1.bf16.xpose.msra.mxu0 0
          %1011 = vmatprep.subr.bf16.mxu0 0
          %1012 = vmatpush1.bf16.xpose.msra.mxu0 0
          %1013 = vmatprep.subr.bf16.mxu0 0
          %1014 = vmatpush1.bf16.xpose.msra.mxu0 0
          %1015 = vmatprep.subr.bf16.mxu0 0
          %1016 = vmatpush1.bf16.xpose.msra.mxu0 0
          %1017 = vmatprep.subr.bf16.mxu0 0
          %1018 = vmatpush1.bf16.xpose.msra.mxu0 0
          %1019 = vmatprep.subr.bf16.mxu0 0
          %1020 = vmatpush1.bf16.xpose.msra.mxu0 0
          %1021 = vmatprep.subr.bf16.mxu0 0
          %1022 = vmatpush1.bf16.xpose.msra.mxu0 0
          %1023 = vmatprep.subr.bf16.mxu0 0
          %1024 = vmatpush1.bf16.xpose.msra.mxu0 0
          %1025 = vmatprep.mubr.bf16.mxu0 0
          %1026 = vmatmul.mubr.bf16.gmra.mrb[0].mxu0 %v988
          %v1027 = vpop.f32.mrb[0].mxu0
          %v1028 = vadd.f32 0.0, %v1027
          %v1029 = vpop.f32.mrb[0].mxu0
          %v1030 = vpop.f32.mrb[0].mxu0
          %v1031 = vadd.f32 0.0, %v1030
          %v1032 = vpop.f32.mrb[0].mxu0
          %1033 = vdwg.mxu0
          %v1034 = vmul.f32 %v1028, 0.25
          %v1035 = vmul.f32 %v1031, 0.25
          %v1036 = vadd.f32 %v1034, %v734
          %v1037 = vadd.f32 %v1035, %v734
          %v1038 = vsel %vm738, %v1036, -inf
          %1039 = vmax.xlane.f32.xlu0 %v1038
          %v1040 = vpop.xlane.xlu0 %1039
          %v1041 = vsel %vm738, %v1037, -inf
          %1042 = vmax.xlane.f32.xlu0 %v1041
          %v1043 = vpop.xlane.xlu0 %1042
          %v1044 = vsub.f32 %v1036, %v1040
          %v1045 = vsub.f32 %v1037, %v1043
          %v1046 = vmul.f32 %v1044, 1.442695
          %v1047 = vpow.pop %v1046
          %v1048 = vmul.f32 %v1045, 1.442695
          %v1049 = vpow.pop %v1048
          %v1050 = vsel %vm738, %v1047, 0.0
          %1051 = vadd.xlane.f32.xlu0 %v1050
          %v1052 = vpop.xlane.xlu0 %1051
          %v1053 = vsel %vm738, %v1049, 0.0
          %1054 = vadd.xlane.f32.xlu0 %v1053
          %v1055 = vpop.xlane.xlu0 %1054
          %v1056 = vrcp.pop %v1052
          %v1057 = vrcp.pop %v1055
          %v1058 = vmul.f32 %v1047, %v1056
          %v1059 = vmul.f32 %v1049, %v1057
          %v1060 = vpack.c.bf16 %v1059, %v1058
          %1061 = vrot.lane.b32.xlu0 %v728, 96
          %v1062 = vpop.permute.xlu0 %1061
          %v1065 = vsel %vm738, %v1060, 0
          %1067 = vmatprep.subr.bf16.mxu0 0
          %1068 = vmatpush1.bf16.msra.mxu0 %v1062
          %1069 = vmatprep.subr.bf16.mxu0 0
          %1070 = vmatpush1.bf16.msra.mxu0 0
          %1071 = vmatprep.subr.bf16.mxu0 0
          %1072 = vmatpush1.bf16.msra.mxu0 0
          %1073 = vmatprep.subr.bf16.mxu0 0
          %1074 = vmatpush1.bf16.msra.mxu0 0
          %1075 = vmatprep.subr.bf16.mxu0 0
          %1076 = vmatpush1.bf16.msra.mxu0 0
          %1077 = vmatprep.subr.bf16.mxu0 0
          %1078 = vmatpush1.bf16.msra.mxu0 0
          %1079 = vmatprep.subr.bf16.mxu0 0
          %1080 = vmatpush1.bf16.msra.mxu0 0
          %1081 = vmatprep.subr.bf16.mxu0 0
          %1082 = vmatpush1.bf16.msra.mxu0 0
          %1083 = vmatprep.subr.bf16.mxu0 0
          %1084 = vmatpush1.bf16.msra.mxu0 0
          %1085 = vmatprep.subr.bf16.mxu0 0
          %1086 = vmatpush1.bf16.msra.mxu0 0
          %1087 = vmatprep.subr.bf16.mxu0 0
          %1088 = vmatpush1.bf16.msra.mxu0 0
          %1089 = vmatprep.subr.bf16.mxu0 0
          %1090 = vmatpush1.bf16.msra.mxu0 0
          %1091 = vmatprep.subr.bf16.mxu0 0
          %1092 = vmatpush1.bf16.msra.mxu0 0
          %1093 = vmatprep.subr.bf16.mxu0 0
          %1094 = vmatpush1.bf16.msra.mxu0 0
          %1095 = vmatprep.subr.bf16.mxu0 0
          %1096 = vmatpush1.bf16.msra.mxu0 0
          %1097 = vmatprep.subr.bf16.mxu0 0
          %1098 = vmatpush1.bf16.msra.mxu0 0
          %1099 = vmatprep.mubr.bf16.mxu0 0
          %1100 = vmatmul.mubr.bf16.gmra.mrb[0].mxu0 %v1065
          %v1101 = vpop.f32.mrb[0].mxu0
          %v1102 = vadd.f32 0.0, %v1101
          %v1103 = vpop.f32.mrb[0].mxu0
          %v1104 = vpop.f32.mrb[0].mxu0
          %v1105 = vadd.f32 0.0, %v1104
          %v1106 = vpop.f32.mrb[0].mxu0
          %1107 = vdwg.mxu0
          %1108 = vrot.lane.b32.xlu0 %v727, 80
          %v1109 = vpop.permute.xlu0 %1108
          %1110 = vrot.lane.b32.xlu0 %v727, 16
          %v1111 = vpop.permute.xlu0 %1110
          %v1113 = vsel %vm738, %v1109, 0
          %v1116 = vsel %vm738, %v1111, 0
          %1118 = vmatprep.subr.bf16.mxu0 0
          %1119 = vmatpush1.bf16.xpose.msra.mxu0 %v1116
          %1120 = vmatprep.subr.bf16.mxu0 0
          %1121 = vmatpush1.bf16.xpose.msra.mxu0 0
          %1122 = vmatprep.subr.bf16.mxu0 0
          %1123 = vmatpush1.bf16.xpose.msra.mxu0 0
          %1124 = vmatprep.subr.bf16.mxu0 0
          %1125 = vmatpush1.bf16.xpose.msra.mxu0 0
          %1126 = vmatprep.subr.bf16.mxu0 0
          %1127 = vmatpush1.bf16.xpose.msra.mxu0 0
          %1128 = vmatprep.subr.bf16.mxu0 0
          %1129 = vmatpush1.bf16.xpose.msra.mxu0 0
          %1130 = vmatprep.subr.bf16.mxu0 0
          %1131 = vmatpush1.bf16.xpose.msra.mxu0 0
          %1132 = vmatprep.subr.bf16.mxu0 0
          %1133 = vmatpush1.bf16.xpose.msra.mxu0 0
          %1134 = vmatprep.subr.bf16.mxu0 0
          %1135 = vmatpush1.bf16.xpose.msra.mxu0 0
          %1136 = vmatprep.subr.bf16.mxu0 0
          %1137 = vmatpush1.bf16.xpose.msra.mxu0 0
          %1138 = vmatprep.subr.bf16.mxu0 0
          %1139 = vmatpush1.bf16.xpose.msra.mxu0 0
          %1140 = vmatprep.subr.bf16.mxu0 0
          %1141 = vmatpush1.bf16.xpose.msra.mxu0 0
          %1142 = vmatprep.subr.bf16.mxu0 0
          %1143 = vmatpush1.bf16.xpose.msra.mxu0 0
          %1144 = vmatprep.subr.bf16.mxu0 0
          %1145 = vmatpush1.bf16.xpose.msra.mxu0 0
          %1146 = vmatprep.subr.bf16.mxu0 0
          %1147 = vmatpush1.bf16.xpose.msra.mxu0 0
          %1148 = vmatprep.subr.bf16.mxu0 0
          %1149 = vmatpush1.bf16.xpose.msra.mxu0 0
          %1150 = vmatprep.mubr.bf16.mxu0 0
          %1151 = vmatmul.mubr.bf16.gmra.mrb[0].mxu0 %v1113
          %v1152 = vpop.f32.mrb[0].mxu0
          %v1153 = vadd.f32 0.0, %v1152
          %v1154 = vpop.f32.mrb[0].mxu0
          %v1155 = vpop.f32.mrb[0].mxu0
          %v1156 = vadd.f32 0.0, %v1155
          %v1157 = vpop.f32.mrb[0].mxu0
          %1158 = vdwg.mxu0
          %v1159 = vmul.f32 %v1153, 0.25
          %v1160 = vmul.f32 %v1156, 0.25
          %v1161 = vadd.f32 %v1159, %v734
          %v1162 = vadd.f32 %v1160, %v734
          %v1163 = vsel %vm738, %v1161, -inf
          %1164 = vmax.xlane.f32.xlu0 %v1163
          %v1165 = vpop.xlane.xlu0 %1164
          %v1166 = vsel %vm738, %v1162, -inf
          %1167 = vmax.xlane.f32.xlu0 %v1166
          %v1168 = vpop.xlane.xlu0 %1167
          %v1169 = vsub.f32 %v1161, %v1165
          %v1170 = vsub.f32 %v1162, %v1168
          %v1171 = vmul.f32 %v1169, 1.442695
          %v1172 = vpow.pop %v1171
          %v1173 = vmul.f32 %v1170, 1.442695
          %v1174 = vpow.pop %v1173
          %v1175 = vsel %vm738, %v1172, 0.0
          %1176 = vadd.xlane.f32.xlu0 %v1175
          %v1177 = vpop.xlane.xlu0 %1176
          %v1178 = vsel %vm738, %v1174, 0.0
          %1179 = vadd.xlane.f32.xlu0 %v1178
          %v1180 = vpop.xlane.xlu0 %1179
          %v1181 = vrcp.pop %v1177
          %v1182 = vrcp.pop %v1180
          %v1183 = vmul.f32 %v1172, %v1181
          %v1184 = vmul.f32 %v1174, %v1182
          %v1185 = vpack.c.bf16 %v1184, %v1183
          %1186 = vrot.lane.b32.xlu0 %v728, 80
          %v1187 = vpop.permute.xlu0 %1186
          %v1190 = vsel %vm738, %v1185, 0
          %1192 = vmatprep.subr.bf16.mxu0 0
          %1193 = vmatpush1.bf16.msra.mxu0 %v1187
          %1194 = vmatprep.subr.bf16.mxu0 0
          %1195 = vmatpush1.bf16.msra.mxu0 0
          %1196 = vmatprep.subr.bf16.mxu0 0
          %1197 = vmatpush1.bf16.msra.mxu0 0
          %1198 = vmatprep.subr.bf16.mxu0 0
          %1199 = vmatpush1.bf16.msra.mxu0 0
          %1200 = vmatprep.subr.bf16.mxu0 0
          %1201 = vmatpush1.bf16.msra.mxu0 0
          %1202 = vmatprep.subr.bf16.mxu0 0
          %1203 = vmatpush1.bf16.msra.mxu0 0
          %1204 = vmatprep.subr.bf16.mxu0 0
          %1205 = vmatpush1.bf16.msra.mxu0 0
          %1206 = vmatprep.subr.bf16.mxu0 0
          %1207 = vmatpush1.bf16.msra.mxu0 0
          %1208 = vmatprep.subr.bf16.mxu0 0
          %1209 = vmatpush1.bf16.msra.mxu0 0
          %1210 = vmatprep.subr.bf16.mxu0 0
          %1211 = vmatpush1.bf16.msra.mxu0 0
          %1212 = vmatprep.subr.bf16.mxu0 0
          %1213 = vmatpush1.bf16.msra.mxu0 0
          %1214 = vmatprep.subr.bf16.mxu0 0
          %1215 = vmatpush1.bf16.msra.mxu0 0
          %1216 = vmatprep.subr.bf16.mxu0 0
          %1217 = vmatpush1.bf16.msra.mxu0 0
          %1218 = vmatprep.subr.bf16.mxu0 0
          %1219 = vmatpush1.bf16.msra.mxu0 0
          %1220 = vmatprep.subr.bf16.mxu0 0
          %1221 = vmatpush1.bf16.msra.mxu0 0
          %1222 = vmatprep.subr.bf16.mxu0 0
          %1223 = vmatpush1.bf16.msra.mxu0 0
          %1224 = vmatprep.mubr.bf16.mxu0 0
          %1225 = vmatmul.mubr.bf16.gmra.mrb[0].mxu0 %v1190
          %v1226 = vpop.f32.mrb[0].mxu0
          %v1227 = vadd.f32 0.0, %v1226
          %v1228 = vpop.f32.mrb[0].mxu0
          %v1229 = vpop.f32.mrb[0].mxu0
          %v1230 = vadd.f32 0.0, %v1229
          %v1231 = vpop.f32.mrb[0].mxu0
          %1232 = vdwg.mxu0
          %1235 = vrot.lane.b32.xlu0 %v977, 16
          %v1236 = vpop.permute.xlu0 %1235
          %1237 = vrot.lane.b32.xlu0 %v980, 16
          %v1238 = vpop.permute.xlu0 %1237
          %1243 = vrot.lane.b32.xlu0 %v1102, 32
          %v1244 = vpop.permute.xlu0 %1243
          %1245 = vrot.lane.b32.xlu0 %v1105, 32
          %v1246 = vpop.permute.xlu0 %1245
          %1251 = vrot.lane.b32.xlu0 %v1227, 48
          %v1252 = vpop.permute.xlu0 %1251
          %1253 = vrot.lane.b32.xlu0 %v1230, 48
          %v1254 = vpop.permute.xlu0 %1253
          %v1257 = vsel %vm738, %v851, %v1236
          %v1258 = vsel %vm738, %v854, %v1238
          %vm1259 = vcmask 261120
          %v1260 = vsel %vm1259, %v1257, %v1244
          %v1261 = vsel %vm1259, %v1258, %v1246
          %vm1262 = vcmask 392192
          %v1263 = vsel %vm1262, %v1260, %v1252
          %v1264 = vsel %vm1262, %v1261, %v1254
          %1265 = vst.msk [vmem:[#allocation2] sm:$0xff] %vm530, %v1263
          %1266 = vst.msk [vmem:[#allocation2 + $0x8] sm:$0xff] %vm530, %v1264
          %1268 = vrot.lane.b32.xlu0 %v729, 64
          %v1269 = vpop.permute.xlu0 %1268
          %v1271 = vsel %vm738, %v729, 0
          %v1274 = vsel %vm738, %v1269, 0
          %1276 = vmatprep.subr.bf16.mxu0 0
          %1277 = vmatpush1.bf16.xpose.msra.mxu0 %v1274
          %1278 = vmatprep.subr.bf16.mxu0 0
          %1279 = vmatpush1.bf16.xpose.msra.mxu0 0
          %1280 = vmatprep.subr.bf16.mxu0 0
          %1281 = vmatpush1.bf16.xpose.msra.mxu0 0
          %1282 = vmatprep.subr.bf16.mxu0 0
          %1283 = vmatpush1.bf16.xpose.msra.mxu0 0
          %1284 = vmatprep.subr.bf16.mxu0 0
          %1285 = vmatpush1.bf16.xpose.msra.mxu0 0
          %1286 = vmatprep.subr.bf16.mxu0 0
          %1287 = vmatpush1.bf16.xpose.msra.mxu0 0
          %1288 = vmatprep.subr.bf16.mxu0 0
          %1289 = vmatpush1.bf16.xpose.msra.mxu0 0
          %1290 = vmatprep.subr.bf16.mxu0 0
          %1291 = vmatpush1.bf16.xpose.msra.mxu0 0
          %1292 = vmatprep.subr.bf16.mxu0 0
          %1293 = vmatpush1.bf16.xpose.msra.mxu0 0
          %1294 = vmatprep.subr.bf16.mxu0 0
          %1295 = vmatpush1.bf16.xpose.msra.mxu0 0
          %1296 = vmatprep.subr.bf16.mxu0 0
          %1297 = vmatpush1.bf16.xpose.msra.mxu0 0
          %1298 = vmatprep.subr.bf16.mxu0 0
          %1299 = vmatpush1.bf16.xpose.msra.mxu0 0
          %1300 = vmatprep.subr.bf16.mxu0 0
          %1301 = vmatpush1.bf16.xpose.msra.mxu0 0
          %1302 = vmatprep.subr.bf16.mxu0 0
          %1303 = vmatpush1.bf16.xpose.msra.mxu0 0
          %1304 = vmatprep.subr.bf16.mxu0 0
          %1305 = vmatpush1.bf16.xpose.msra.mxu0 0
          %1306 = vmatprep.subr.bf16.mxu0 0
          %1307 = vmatpush1.bf16.xpose.msra.mxu0 0
          %1308 = vmatprep.mubr.bf16.mxu0 0
          %1309 = vmatmul.mubr.bf16.gmra.mrb[0].mxu0 %v1271
          %v1310 = vpop.f32.mrb[0].mxu0
          %v1311 = vadd.f32 0.0, %v1310
          %v1312 = vpop.f32.mrb[0].mxu0
          %v1313 = vpop.f32.mrb[0].mxu0
          %v1314 = vadd.f32 0.0, %v1313
          %v1315 = vpop.f32.mrb[0].mxu0
          %1316 = vdwg.mxu0
          %v1317 = vmul.f32 %v1311, 0.25
          %v1318 = vmul.f32 %v1314, 0.25
          %v1319 = vadd.f32 %v1317, %v734
          %v1320 = vadd.f32 %v1318, %v734
          %v1321 = vsel %vm738, %v1319, -inf
          %1322 = vmax.xlane.f32.xlu0 %v1321
          %v1323 = vpop.xlane.xlu0 %1322
          %v1324 = vsel %vm738, %v1320, -inf
          %1325 = vmax.xlane.f32.xlu0 %v1324
          %v1326 = vpop.xlane.xlu0 %1325
          %v1327 = vsub.f32 %v1319, %v1323
          %v1328 = vsub.f32 %v1320, %v1326
          %v1329 = vmul.f32 %v1327, 1.442695
          %v1330 = vpow.pop %v1329
          %v1331 = vmul.f32 %v1328, 1.442695
          %v1332 = vpow.pop %v1331
          %v1333 = vsel %vm738, %v1330, 0.0
          %1334 = vadd.xlane.f32.xlu0 %v1333
          %v1335 = vpop.xlane.xlu0 %1334
          %v1336 = vsel %vm738, %v1332, 0.0
          %1337 = vadd.xlane.f32.xlu0 %v1336
          %v1338 = vpop.xlane.xlu0 %1337
          %v1339 = vrcp.pop %v1335
          %v1340 = vrcp.pop %v1338
          %v1341 = vmul.f32 %v1330, %v1339
          %v1342 = vmul.f32 %v1332, %v1340
          %v1343 = vpack.c.bf16 %v1342, %v1341
          %v1345 = vsel %vm738, %v1343, 0
          %1347 = vmatprep.subr.bf16.mxu0 0
          %1348 = vmatpush1.bf16.msra.mxu0 %v730
          %1349 = vmatprep.subr.bf16.mxu0 0
          %1350 = vmatpush1.bf16.msra.mxu0 0
          %1351 = vmatprep.subr.bf16.mxu0 0
          %1352 = vmatpush1.bf16.msra.mxu0 0
          %1353 = vmatprep.subr.bf16.mxu0 0
          %1354 = vmatpush1.bf16.msra.mxu0 0
          %1355 = vmatprep.subr.bf16.mxu0 0
          %1356 = vmatpush1.bf16.msra.mxu0 0
          %1357 = vmatprep.subr.bf16.mxu0 0
          %1358 = vmatpush1.bf16.msra.mxu0 0
          %1359 = vmatprep.subr.bf16.mxu0 0
          %1360 = vmatpush1.bf16.msra.mxu0 0
          %1361 = vmatprep.subr.bf16.mxu0 0
          %1362 = vmatpush1.bf16.msra.mxu0 0
          %1363 = vmatprep.subr.bf16.mxu0 0
          %1364 = vmatpush1.bf16.msra.mxu0 0
          %1365 = vmatprep.subr.bf16.mxu0 0
          %1366 = vmatpush1.bf16.msra.mxu0 0
          %1367 = vmatprep.subr.bf16.mxu0 0
          %1368 = vmatpush1.bf16.msra.mxu0 0
          %1369 = vmatprep.subr.bf16.mxu0 0
          %1370 = vmatpush1.bf16.msra.mxu0 0
          %1371 = vmatprep.subr.bf16.mxu0 0
          %1372 = vmatpush1.bf16.msra.mxu0 0
          %1373 = vmatprep.subr.bf16.mxu0 0
          %1374 = vmatpush1.bf16.msra.mxu0 0
          %1375 = vmatprep.subr.bf16.mxu0 0
          %1376 = vmatpush1.bf16.msra.mxu0 0
          %1377 = vmatprep.subr.bf16.mxu0 0
          %1378 = vmatpush1.bf16.msra.mxu0 0
          %1379 = vmatprep.mubr.bf16.mxu0 0
          %1380 = vmatmul.mubr.bf16.gmra.mrb[0].mxu0 %v1345
          %v1381 = vpop.f32.mrb[0].mxu0
          %v1382 = vadd.f32 0.0, %v1381
          %v1383 = vpop.f32.mrb[0].mxu0
          %v1384 = vpop.f32.mrb[0].mxu0
          %v1385 = vadd.f32 0.0, %v1384
          %v1386 = vpop.f32.mrb[0].mxu0
          %1387 = vdwg.mxu0
          %1388 = vrot.lane.b32.xlu0 %v729, 112
          %v1389 = vpop.permute.xlu0 %1388
          %1390 = vrot.lane.b32.xlu0 %v729, 48
          %v1391 = vpop.permute.xlu0 %1390
          %v1393 = vsel %vm738, %v1389, 0
          %v1396 = vsel %vm738, %v1391, 0
          %1398 = vmatprep.subr.bf16.mxu0 0
          %1399 = vmatpush1.bf16.xpose.msra.mxu0 %v1396
          %1400 = vmatprep.subr.bf16.mxu0 0
          %1401 = vmatpush1.bf16.xpose.msra.mxu0 0
          %1402 = vmatprep.subr.bf16.mxu0 0
          %1403 = vmatpush1.bf16.xpose.msra.mxu0 0
          %1404 = vmatprep.subr.bf16.mxu0 0
          %1405 = vmatpush1.bf16.xpose.msra.mxu0 0
          %1406 = vmatprep.subr.bf16.mxu0 0
          %1407 = vmatpush1.bf16.xpose.msra.mxu0 0
          %1408 = vmatprep.subr.bf16.mxu0 0
          %1409 = vmatpush1.bf16.xpose.msra.mxu0 0
          %1410 = vmatprep.subr.bf16.mxu0 0
          %1411 = vmatpush1.bf16.xpose.msra.mxu0 0
          %1412 = vmatprep.subr.bf16.mxu0 0
          %1413 = vmatpush1.bf16.xpose.msra.mxu0 0
          %1414 = vmatprep.subr.bf16.mxu0 0
          %1415 = vmatpush1.bf16.xpose.msra.mxu0 0
          %1416 = vmatprep.subr.bf16.mxu0 0
          %1417 = vmatpush1.bf16.xpose.msra.mxu0 0
          %1418 = vmatprep.subr.bf16.mxu0 0
          %1419 = vmatpush1.bf16.xpose.msra.mxu0 0
          %1420 = vmatprep.subr.bf16.mxu0 0
          %1421 = vmatpush1.bf16.xpose.msra.mxu0 0
          %1422 = vmatprep.subr.bf16.mxu0 0
          %1423 = vmatpush1.bf16.xpose.msra.mxu0 0
          %1424 = vmatprep.subr.bf16.mxu0 0
          %1425 = vmatpush1.bf16.xpose.msra.mxu0 0
          %1426 = vmatprep.subr.bf16.mxu0 0
          %1427 = vmatpush1.bf16.xpose.msra.mxu0 0
          %1428 = vmatprep.subr.bf16.mxu0 0
          %1429 = vmatpush1.bf16.xpose.msra.mxu0 0
          %1430 = vmatprep.mubr.bf16.mxu0 0
          %1431 = vmatmul.mubr.bf16.gmra.mrb[0].mxu0 %v1393
          %v1432 = vpop.f32.mrb[0].mxu0
          %v1433 = vadd.f32 0.0, %v1432
          %v1434 = vpop.f32.mrb[0].mxu0
          %v1435 = vpop.f32.mrb[0].mxu0
          %v1436 = vadd.f32 0.0, %v1435
          %v1437 = vpop.f32.mrb[0].mxu0
          %1438 = vdwg.mxu0
          %v1439 = vmul.f32 %v1433, 0.25
          %v1440 = vmul.f32 %v1436, 0.25
          %v1441 = vadd.f32 %v1439, %v734
          %v1442 = vadd.f32 %v1440, %v734
          %v1443 = vsel %vm738, %v1441, -inf
          %1444 = vmax.xlane.f32.xlu0 %v1443
          %v1445 = vpop.xlane.xlu0 %1444
          %v1446 = vsel %vm738, %v1442, -inf
          %1447 = vmax.xlane.f32.xlu0 %v1446
          %v1448 = vpop.xlane.xlu0 %1447
          %v1449 = vsub.f32 %v1441, %v1445
          %v1450 = vsub.f32 %v1442, %v1448
          %v1451 = vmul.f32 %v1449, 1.442695
          %v1452 = vpow.pop %v1451
          %v1453 = vmul.f32 %v1450, 1.442695
          %v1454 = vpow.pop %v1453
          %v1455 = vsel %vm738, %v1452, 0.0
          %1456 = vadd.xlane.f32.xlu0 %v1455
          %v1457 = vpop.xlane.xlu0 %1456
          %v1458 = vsel %vm738, %v1454, 0.0
          %1459 = vadd.xlane.f32.xlu0 %v1458
          %v1460 = vpop.xlane.xlu0 %1459
          %v1461 = vrcp.pop %v1457
          %v1462 = vrcp.pop %v1460
          %v1463 = vmul.f32 %v1452, %v1461
          %v1464 = vmul.f32 %v1454, %v1462
          %v1465 = vpack.c.bf16 %v1464, %v1463
          %1467 = vrot.lane.b32.xlu0 %v730, 112
          %v1468 = vpop.permute.xlu0 %1467
          %v1471 = vsel %vm738, %v1465, 0
          %1473 = vmatprep.subr.bf16.mxu0 0
          %1474 = vmatpush1.bf16.msra.mxu0 %v1468
          %1475 = vmatprep.subr.bf16.mxu0 0
          %1476 = vmatpush1.bf16.msra.mxu0 0
          %1477 = vmatprep.subr.bf16.mxu0 0
          %1478 = vmatpush1.bf16.msra.mxu0 0
          %1479 = vmatprep.subr.bf16.mxu0 0
          %1480 = vmatpush1.bf16.msra.mxu0 0
          %1481 = vmatprep.subr.bf16.mxu0 0
          %1482 = vmatpush1.bf16.msra.mxu0 0
          %1483 = vmatprep.subr.bf16.mxu0 0
          %1484 = vmatpush1.bf16.msra.mxu0 0
          %1485 = vmatprep.subr.bf16.mxu0 0
          %1486 = vmatpush1.bf16.msra.mxu0 0
          %1487 = vmatprep.subr.bf16.mxu0 0
          %1488 = vmatpush1.bf16.msra.mxu0 0
          %1489 = vmatprep.subr.bf16.mxu0 0
          %1490 = vmatpush1.bf16.msra.mxu0 0
          %1491 = vmatprep.subr.bf16.mxu0 0
          %1492 = vmatpush1.bf16.msra.mxu0 0
          %1493 = vmatprep.subr.bf16.mxu0 0
          %1494 = vmatpush1.bf16.msra.mxu0 0
          %1495 = vmatprep.subr.bf16.mxu0 0
          %1496 = vmatpush1.bf16.msra.mxu0 0
          %1497 = vmatprep.subr.bf16.mxu0 0
          %1498 = vmatpush1.bf16.msra.mxu0 0
          %1499 = vmatprep.subr.bf16.mxu0 0
          %1500 = vmatpush1.bf16.msra.mxu0 0
          %1501 = vmatprep.subr.bf16.mxu0 0
          %1502 = vmatpush1.bf16.msra.mxu0 0
          %1503 = vmatprep.subr.bf16.mxu0 0
          %1504 = vmatpush1.bf16.msra.mxu0 0
          %1505 = vmatprep.mubr.bf16.mxu0 0
          %1506 = vmatmul.mubr.bf16.gmra.mrb[0].mxu0 %v1471
          %v1507 = vpop.f32.mrb[0].mxu0
          %v1508 = vadd.f32 0.0, %v1507
          %v1509 = vpop.f32.mrb[0].mxu0
          %v1510 = vpop.f32.mrb[0].mxu0
          %v1511 = vadd.f32 0.0, %v1510
          %v1512 = vpop.f32.mrb[0].mxu0
          %1513 = vdwg.mxu0
          %1514 = vrot.lane.b32.xlu0 %v729, 96
          %v1515 = vpop.permute.xlu0 %1514
          %1516 = vrot.lane.b32.xlu0 %v729, 32
          %v1517 = vpop.permute.xlu0 %1516
          %v1519 = vsel %vm738, %v1515, 0
          %v1522 = vsel %vm738, %v1517, 0
          %1524 = vmatprep.subr.bf16.mxu0 0
          %1525 = vmatpush1.bf16.xpose.msra.mxu0 %v1522
          %1526 = vmatprep.subr.bf16.mxu0 0
          %1527 = vmatpush1.bf16.xpose.msra.mxu0 0
          %1528 = vmatprep.subr.bf16.mxu0 0
          %1529 = vmatpush1.bf16.xpose.msra.mxu0 0
          %1530 = vmatprep.subr.bf16.mxu0 0
          %1531 = vmatpush1.bf16.xpose.msra.mxu0 0
          %1532 = vmatprep.subr.bf16.mxu0 0
          %1533 = vmatpush1.bf16.xpose.msra.mxu0 0
          %1534 = vmatprep.subr.bf16.mxu0 0
          %1535 = vmatpush1.bf16.xpose.msra.mxu0 0
          %1536 = vmatprep.subr.bf16.mxu0 0
          %1537 = vmatpush1.bf16.xpose.msra.mxu0 0
          %1538 = vmatprep.subr.bf16.mxu0 0
          %1539 = vmatpush1.bf16.xpose.msra.mxu0 0
          %1540 = vmatprep.subr.bf16.mxu0 0
          %1541 = vmatpush1.bf16.xpose.msra.mxu0 0
          %1542 = vmatprep.subr.bf16.mxu0 0
          %1543 = vmatpush1.bf16.xpose.msra.mxu0 0
          %1544 = vmatprep.subr.bf16.mxu0 0
          %1545 = vmatpush1.bf16.xpose.msra.mxu0 0
          %1546 = vmatprep.subr.bf16.mxu0 0
          %1547 = vmatpush1.bf16.xpose.msra.mxu0 0
          %1548 = vmatprep.subr.bf16.mxu0 0
          %1549 = vmatpush1.bf16.xpose.msra.mxu0 0
          %1550 = vmatprep.subr.bf16.mxu0 0
          %1551 = vmatpush1.bf16.xpose.msra.mxu0 0
          %1552 = vmatprep.subr.bf16.mxu0 0
          %1553 = vmatpush1.bf16.xpose.msra.mxu0 0
          %1554 = vmatprep.subr.bf16.mxu0 0
          %1555 = vmatpush1.bf16.xpose.msra.mxu0 0
          %1556 = vmatprep.mubr.bf16.mxu0 0
          %1557 = vmatmul.mubr.bf16.gmra.mrb[0].mxu0 %v1519
          %v1558 = vpop.f32.mrb[0].mxu0
          %v1559 = vadd.f32 0.0, %v1558
          %v1560 = vpop.f32.mrb[0].mxu0
          %v1561 = vpop.f32.mrb[0].mxu0
          %v1562 = vadd.f32 0.0, %v1561
          %v1563 = vpop.f32.mrb[0].mxu0
          %1564 = vdwg.mxu0
          %v1565 = vmul.f32 %v1559, 0.25
          %v1566 = vmul.f32 %v1562, 0.25
          %v1567 = vadd.f32 %v1565, %v734
          %v1568 = vadd.f32 %v1566, %v734
          %v1569 = vsel %vm738, %v1567, -inf
          %1570 = vmax.xlane.f32.xlu0 %v1569
          %v1571 = vpop.xlane.xlu0 %1570
          %v1572 = vsel %vm738, %v1568, -inf
          %1573 = vmax.xlane.f32.xlu0 %v1572
          %v1574 = vpop.xlane.xlu0 %1573
          %v1575 = vsub.f32 %v1567, %v1571
          %v1576 = vsub.f32 %v1568, %v1574
          %v1577 = vmul.f32 %v1575, 1.442695
          %v1578 = vpow.pop %v1577
          %v1579 = vmul.f32 %v1576, 1.442695
          %v1580 = vpow.pop %v1579
          %v1581 = vsel %vm738, %v1578, 0.0
          %1582 = vadd.xlane.f32.xlu0 %v1581
          %v1583 = vpop.xlane.xlu0 %1582
          %v1584 = vsel %vm738, %v1580, 0.0
          %1585 = vadd.xlane.f32.xlu0 %v1584
          %v1586 = vpop.xlane.xlu0 %1585
          %v1587 = vrcp.pop %v1583
          %v1588 = vrcp.pop %v1586
          %v1589 = vmul.f32 %v1578, %v1587
          %v1590 = vmul.f32 %v1580, %v1588
          %v1591 = vpack.c.bf16 %v1590, %v1589
          %1592 = vrot.lane.b32.xlu0 %v730, 96
          %v1593 = vpop.permute.xlu0 %1592
          %v1596 = vsel %vm738, %v1591, 0
          %1598 = vmatprep.subr.bf16.mxu0 0
          %1599 = vmatpush1.bf16.msra.mxu0 %v1593
          %1600 = vmatprep.subr.bf16.mxu0 0
          %1601 = vmatpush1.bf16.msra.mxu0 0
          %1602 = vmatprep.subr.bf16.mxu0 0
          %1603 = vmatpush1.bf16.msra.mxu0 0
          %1604 = vmatprep.subr.bf16.mxu0 0
          %1605 = vmatpush1.bf16.msra.mxu0 0
          %1606 = vmatprep.subr.bf16.mxu0 0
          %1607 = vmatpush1.bf16.msra.mxu0 0
          %1608 = vmatprep.subr.bf16.mxu0 0
          %1609 = vmatpush1.bf16.msra.mxu0 0
          %1610 = vmatprep.subr.bf16.mxu0 0
          %1611 = vmatpush1.bf16.msra.mxu0 0
          %1612 = vmatprep.subr.bf16.mxu0 0
          %1613 = vmatpush1.bf16.msra.mxu0 0
          %1614 = vmatprep.subr.bf16.mxu0 0
          %1615 = vmatpush1.bf16.msra.mxu0 0
          %1616 = vmatprep.subr.bf16.mxu0 0
          %1617 = vmatpush1.bf16.msra.mxu0 0
          %1618 = vmatprep.subr.bf16.mxu0 0
          %1619 = vmatpush1.bf16.msra.mxu0 0
          %1620 = vmatprep.subr.bf16.mxu0 0
          %1621 = vmatpush1.bf16.msra.mxu0 0
          %1622 = vmatprep.subr.bf16.mxu0 0
          %1623 = vmatpush1.bf16.msra.mxu0 0
          %1624 = vmatprep.subr.bf16.mxu0 0
          %1625 = vmatpush1.bf16.msra.mxu0 0
          %1626 = vmatprep.subr.bf16.mxu0 0
          %1627 = vmatpush1.bf16.msra.mxu0 0
          %1628 = vmatprep.subr.bf16.mxu0 0
          %1629 = vmatpush1.bf16.msra.mxu0 0
          %1630 = vmatprep.mubr.bf16.mxu0 0
          %1631 = vmatmul.mubr.bf16.gmra.mrb[0].mxu0 %v1596
          %v1632 = vpop.f32.mrb[0].mxu0
          %v1633 = vadd.f32 0.0, %v1632
          %v1634 = vpop.f32.mrb[0].mxu0
          %v1635 = vpop.f32.mrb[0].mxu0
          %v1636 = vadd.f32 0.0, %v1635
          %v1637 = vpop.f32.mrb[0].mxu0
          %1638 = vdwg.mxu0
          %1639 = vrot.lane.b32.xlu0 %v729, 80
          %v1640 = vpop.permute.xlu0 %1639
          %1641 = vrot.lane.b32.xlu0 %v729, 16
          %v1642 = vpop.permute.xlu0 %1641
          %v1644 = vsel %vm738, %v1640, 0
          %v1647 = vsel %vm738, %v1642, 0
          %1649 = vmatprep.subr.bf16.mxu0 0
          %1650 = vmatpush1.bf16.xpose.msra.mxu0 %v1647
          %1651 = vmatprep.subr.bf16.mxu0 0
          %1652 = vmatpush1.bf16.xpose.msra.mxu0 0
          %1653 = vmatprep.subr.bf16.mxu0 0
          %1654 = vmatpush1.bf16.xpose.msra.mxu0 0
          %1655 = vmatprep.subr.bf16.mxu0 0
          %1656 = vmatpush1.bf16.xpose.msra.mxu0 0
          %1657 = vmatprep.subr.bf16.mxu0 0
          %1658 = vmatpush1.bf16.xpose.msra.mxu0 0
          %1659 = vmatprep.subr.bf16.mxu0 0
          %1660 = vmatpush1.bf16.xpose.msra.mxu0 0
          %1661 = vmatprep.subr.bf16.mxu0 0
          %1662 = vmatpush1.bf16.xpose.msra.mxu0 0
          %1663 = vmatprep.subr.bf16.mxu0 0
          %1664 = vmatpush1.bf16.xpose.msra.mxu0 0
          %1665 = vmatprep.subr.bf16.mxu0 0
          %1666 = vmatpush1.bf16.xpose.msra.mxu0 0
          %1667 = vmatprep.subr.bf16.mxu0 0
          %1668 = vmatpush1.bf16.xpose.msra.mxu0 0
          %1669 = vmatprep.subr.bf16.mxu0 0
          %1670 = vmatpush1.bf16.xpose.msra.mxu0 0
          %1671 = vmatprep.subr.bf16.mxu0 0
          %1672 = vmatpush1.bf16.xpose.msra.mxu0 0
          %1673 = vmatprep.subr.bf16.mxu0 0
          %1674 = vmatpush1.bf16.xpose.msra.mxu0 0
          %1675 = vmatprep.subr.bf16.mxu0 0
          %1676 = vmatpush1.bf16.xpose.msra.mxu0 0
          %1677 = vmatprep.subr.bf16.mxu0 0
          %1678 = vmatpush1.bf16.xpose.msra.mxu0 0
          %1679 = vmatprep.subr.bf16.mxu0 0
          %1680 = vmatpush1.bf16.xpose.msra.mxu0 0
          %1681 = vmatprep.mubr.bf16.mxu0 0
          %1682 = vmatmul.mubr.bf16.gmra.mrb[0].mxu0 %v1644
          %v1683 = vpop.f32.mrb[0].mxu0
          %v1684 = vadd.f32 0.0, %v1683
          %v1685 = vpop.f32.mrb[0].mxu0
          %v1686 = vpop.f32.mrb[0].mxu0
          %v1687 = vadd.f32 0.0, %v1686
          %v1688 = vpop.f32.mrb[0].mxu0
          %1689 = vdwg.mxu0
          %v1690 = vmul.f32 %v1684, 0.25
          %v1691 = vmul.f32 %v1687, 0.25
          %v1692 = vadd.f32 %v1690, %v734
          %v1693 = vadd.f32 %v1691, %v734
          %v1694 = vsel %vm738, %v1692, -inf
          %1695 = vmax.xlane.f32.xlu0 %v1694
          %v1696 = vpop.xlane.xlu0 %1695
          %v1697 = vsel %vm738, %v1693, -inf
          %1698 = vmax.xlane.f32.xlu0 %v1697
          %v1699 = vpop.xlane.xlu0 %1698
          %v1700 = vsub.f32 %v1692, %v1696
          %v1701 = vsub.f32 %v1693, %v1699
          %v1702 = vmul.f32 %v1700, 1.442695
          %v1703 = vpow.pop %v1702
          %v1704 = vmul.f32 %v1701, 1.442695
          %v1705 = vpow.pop %v1704
          %v1706 = vsel %vm738, %v1703, 0.0
          %1707 = vadd.xlane.f32.xlu0 %v1706
          %v1708 = vpop.xlane.xlu0 %1707
          %v1709 = vsel %vm738, %v1705, 0.0
          %1710 = vadd.xlane.f32.xlu0 %v1709
          %v1711 = vpop.xlane.xlu0 %1710
          %v1712 = vrcp.pop %v1708
          %v1713 = vrcp.pop %v1711
          %v1714 = vmul.f32 %v1703, %v1712
          %v1715 = vmul.f32 %v1705, %v1713
          %v1716 = vpack.c.bf16 %v1715, %v1714
          %1717 = vrot.lane.b32.xlu0 %v730, 80
          %v1718 = vpop.permute.xlu0 %1717
          %v1721 = vsel %vm738, %v1716, 0
          %1723 = vmatprep.subr.bf16.mxu0 0
          %1724 = vmatpush1.bf16.msra.mxu0 %v1718
          %1725 = vmatprep.subr.bf16.mxu0 0
          %1726 = vmatpush1.bf16.msra.mxu0 0
          %1727 = vmatprep.subr.bf16.mxu0 0
          %1728 = vmatpush1.bf16.msra.mxu0 0
          %1729 = vmatprep.subr.bf16.mxu0 0
          %1730 = vmatpush1.bf16.msra.mxu0 0
          %1731 = vmatprep.subr.bf16.mxu0 0
          %1732 = vmatpush1.bf16.msra.mxu0 0
          %1733 = vmatprep.subr.bf16.mxu0 0
          %1734 = vmatpush1.bf16.msra.mxu0 0
          %1735 = vmatprep.subr.bf16.mxu0 0
          %1736 = vmatpush1.bf16.msra.mxu0 0
          %1737 = vmatprep.subr.bf16.mxu0 0
          %1738 = vmatpush1.bf16.msra.mxu0 0
          %1739 = vmatprep.subr.bf16.mxu0 0
          %1740 = vmatpush1.bf16.msra.mxu0 0
          %1741 = vmatprep.subr.bf16.mxu0 0
          %1742 = vmatpush1.bf16.msra.mxu0 0
          %1743 = vmatprep.subr.bf16.mxu0 0
          %1744 = vmatpush1.bf16.msra.mxu0 0
          %1745 = vmatprep.subr.bf16.mxu0 0
          %1746 = vmatpush1.bf16.msra.mxu0 0
          %1747 = vmatprep.subr.bf16.mxu0 0
          %1748 = vmatpush1.bf16.msra.mxu0 0
          %1749 = vmatprep.subr.bf16.mxu0 0
          %1750 = vmatpush1.bf16.msra.mxu0 0
          %1751 = vmatprep.subr.bf16.mxu0 0
          %1752 = vmatpush1.bf16.msra.mxu0 0
          %1753 = vmatprep.subr.bf16.mxu0 0
          %1754 = vmatpush1.bf16.msra.mxu0 0
          %1755 = vmatprep.mubr.bf16.mxu0 0
          %1756 = vmatmul.mubr.bf16.gmra.mrb[0].mxu0 %v1721
          %v1757 = vpop.f32.mrb[0].mxu0
          %v1758 = vadd.f32 0.0, %v1757
          %v1759 = vpop.f32.mrb[0].mxu0
          %v1760 = vpop.f32.mrb[0].mxu0
          %v1761 = vadd.f32 0.0, %v1760
          %v1762 = vpop.f32.mrb[0].mxu0
          %1763 = vdwg.mxu0
          %1766 = vrot.lane.b32.xlu0 %v1508, 16
          %v1767 = vpop.permute.xlu0 %1766
          %1768 = vrot.lane.b32.xlu0 %v1511, 16
          %v1769 = vpop.permute.xlu0 %1768
          %1774 = vrot.lane.b32.xlu0 %v1633, 32
          %v1775 = vpop.permute.xlu0 %1774
          %1776 = vrot.lane.b32.xlu0 %v1636, 32
          %v1777 = vpop.permute.xlu0 %1776
          %1782 = vrot.lane.b32.xlu0 %v1758, 48
          %v1783 = vpop.permute.xlu0 %1782
          %1784 = vrot.lane.b32.xlu0 %v1761, 48
          %v1785 = vpop.permute.xlu0 %1784
          %v1788 = vsel %vm738, %v1382, %v1767
          %v1789 = vsel %vm738, %v1385, %v1769
          %v1790 = vsel %vm1259, %v1788, %v1775
          %v1791 = vsel %vm1259, %v1789, %v1777
          %v1792 = vsel %vm1262, %v1790, %v1783
          %v1793 = vsel %vm1262, %v1791, %v1785
          %1794 = vst.msk [vmem:[#allocation2 + $0x10] sm:$0xff] %vm530, %v1792
          %1795 = vst.msk [vmem:[#allocation2 + $0x18] sm:$0xff] %vm530, %v1793
          %v1796 = vld [vmem:[#allocation2] sm:$0xff]
          %v1797 = vld [vmem:[#allocation2 + $0x8] sm:$0xff]
          %v1798 = vld [vmem:[#allocation2 + $0x10] sm:$0xff]
          %v1799 = vld [vmem:[#allocation2 + $0x18] sm:$0xff]
          %v1800 = vadd.f32 %v526, %v1796
          %v1801 = vadd.f32 %v527, %v1797
          %v1802 = vadd.f32 %v528, %v1798
          %v1803 = vadd.f32 %v529, %v1799
          %v1804 = vsel %vm530, %v1800, 0.0
          %1805 = vadd.xlane.f32.xlu0 %v1804
          %v1806 = vpop.xlane.xlu0 %1805
          %v1807 = vsel %vm530, %v1801, 0.0
          %1808 = vadd.xlane.f32.xlu0 %v1807
          %v1809 = vpop.xlane.xlu0 %1808
          %v1810 = vsel %vm530, %v1802, 0.0
          %1811 = vadd.xlane.f32.xlu0 %v1810
          %v1812 = vpop.xlane.xlu0 %1811
          %v1813 = vsel %vm530, %v1803, 0.0
          %1814 = vadd.xlane.f32.xlu0 %v1813
          %v1815 = vpop.xlane.xlu0 %1814
          %v1816 = vmul.f32 %v1806, %v543
          %v1817 = vmul.f32 %v1809, %v543
          %v1818 = vmul.f32 %v1812, %v543
          %v1819 = vmul.f32 %v1815, %v543
          %v1820 = vsub.f32 %v1800, %v1816
          %v1821 = vsub.f32 %v1801, %v1817
          %v1822 = vsub.f32 %v1802, %v1818
          %v1823 = vsub.f32 %v1803, %v1819
          %v1824 = vmul.f32 %v1820, %v1820
          %v1825 = vmul.f32 %v1821, %v1821
          %v1826 = vmul.f32 %v1822, %v1822
          %v1827 = vmul.f32 %v1823, %v1823
          %v1828 = vsel %vm530, %v1824, 0.0
          %1829 = vadd.xlane.f32.xlu0 %v1828
          %v1830 = vpop.xlane.xlu0 %1829
          %v1831 = vsel %vm530, %v1825, 0.0
          %1832 = vadd.xlane.f32.xlu0 %v1831
          %v1833 = vpop.xlane.xlu0 %1832
          %v1834 = vsel %vm530, %v1826, 0.0
          %1835 = vadd.xlane.f32.xlu0 %v1834
          %v1836 = vpop.xlane.xlu0 %1835
          %v1837 = vsel %vm530, %v1827, 0.0
          %1838 = vadd.xlane.f32.xlu0 %v1837
          %v1839 = vpop.xlane.xlu0 %1838
          %v1840 = vmul.f32 %v1830, %v543
          %v1841 = vmul.f32 %v1833, %v543
          %v1842 = vmul.f32 %v1836, %v543
          %v1843 = vmul.f32 %v1839, %v543
          %v1844 = vadd.f32 %v1840, 1e-05
          %v1845 = vadd.f32 %v1841, 1e-05
          %v1846 = vadd.f32 %v1842, 1e-05
          %v1847 = vadd.f32 %v1843, 1e-05
          %v1848 = vrsqrt.pop %v1844
          %v1849 = vrsqrt.pop %v1845
          %v1850 = vrsqrt.pop %v1846
          %v1851 = vrsqrt.pop %v1847
          %v1852 = vmul.f32 %v1820, %v1848
          %v1853 = vmul.f32 %v1821, %v1849
          %v1854 = vmul.f32 %v1822, %v1850
          %v1855 = vmul.f32 %v1823, %v1851
          %v1856 = vld [vmem:[%s5] sm:$0x1]
          %v1858 = vlaneseq
          %v1859 = vshrl.u32 %v1858, 7
          %v1860 = vsub.s32 0, %v1859
          %v1861 = vrot.slane %v1856, %v1860
          %v1863 = vmul.f32 %v1852, %v1861
          %v1864 = vmul.f32 %v1853, %v1861
          %v1865 = vmul.f32 %v1854, %v1861
          %v1866 = vmul.f32 %v1855, %v1861
          %v1867 = vld [vmem:[%s6] sm:$0x1]
          %v1869 = vlaneseq
          %v1870 = vshrl.u32 %v1869, 7
          %v1871 = vsub.s32 0, %v1870
          %v1872 = vrot.slane %v1867, %v1871
          %v1874 = vadd.f32 %v1863, %v1872
          %v1875 = vadd.f32 %v1864, %v1872
          %v1876 = vadd.f32 %v1865, %v1872
          %v1877 = vadd.f32 %v1866, %v1872
          %v1878 = vpack.c.bf16 %v1875, %v1874
          %v1879 = vpack.c.bf16 %v1877, %v1876
          %1880 = vst.msk [vmem:[#allocation3] sm:$0xff] %vm530, %v1878
          %1881 = vst.msk [vmem:[#allocation3 + $0x8] sm:$0xff] %vm530, %v1879
          %v1882 = vld [vmem:[%s10] sm:$0x1]
          %v1884 = vlaneseq
          %v1885 = vshrl.u32 %v1884, 7
          %v1886 = vsub.s32 0, %v1885
          %v1887 = vrot.slane %v1882, %v1886
          %v1889 = vadd.f32 %v1800, %v1887
          %v1890 = vadd.f32 %v1801, %v1887
          %v1891 = vadd.f32 %v1802, %v1887
          %v1892 = vadd.f32 %v1803, %v1887
          %1893 = vst.msk [vmem:[#allocation4] sm:$0xff] %vm530, %v1889
          %1894 = vst.msk [vmem:[#allocation4 + $0x8] sm:$0xff] %vm530, %v1890
          %1895 = vst.msk [vmem:[#allocation4 + $0x10] sm:$0xff] %vm530, %v1891
          %1896 = vst.msk [vmem:[#allocation4 + $0x18] sm:$0xff] %vm530, %v1892
        $region109: #{tpu_custom_call.1} parent=100 // pred_fallthru
          _
        %v1897 = vld [vmem:[#allocation3] sm:$0xff]
        %v1898 = vld [vmem:[#allocation3 + $0x8] sm:$0xff]
        %v1899 = vld [vmem:[%s458] sm:$0xf]
        %v1900 = vld [vmem:[%s458 + $0x4] sm:$0xf]
        %v1901 = vld [vmem:[%s458 + $0x8] sm:$0xf]
        %v1902 = vld [vmem:[%s458 + $0xc] sm:$0xf]
        %v1903 = vld [vmem:[%s458 + $0x10] sm:$0xf]
        %v1904 = vld [vmem:[%s458 + $0x14] sm:$0xf]
        %v1905 = vld [vmem:[%s458 + $0x18] sm:$0xf]
        %v1906 = vld [vmem:[%s458 + $0x1c] sm:$0xf]
        %v1907 = vld [vmem:[%s513] sm:$0x1]
        %v1909 = vlaneseq
        %v1910 = vshrl.u32 %v1909, 7
        %v1911 = vsub.s32 0, %v1910
        %v1912 = vrot.slane %v1907, %v1911
        %v1922 = vunpack.c.l.b16 %v1899
        %v1923 = vunpack.c.l.b16 %v1900
        %v1924 = vunpack.c.l.b16 %v1901
        %v1925 = vunpack.c.l.b16 %v1902
        %v1926 = vunpack.c.l.b16 %v1903
        %v1927 = vunpack.c.l.b16 %v1904
        %v1928 = vunpack.c.l.b16 %v1905
        %v1929 = vunpack.c.l.b16 %v1906
        %v1930 = vpack.c.b16 %v1923, %v1922
        %v1931 = vpack.c.b16 %v1925, %v1924
        %v1932 = vpack.c.b16 %v1927, %v1926
        %v1933 = vpack.c.b16 %v1929, %v1928
        %vm1938 = vcmask 523264
        %v1940 = vsel %vm1938, %v1897, 0
        %v1943 = vsel %vm1938, %v1898, 0
        %1945 = vmatprep.subr.bf16.mxu0 0
        %1946 = vmatpush1.bf16.msra.mxu0 %v1930
        %1947 = vmatprep.subr.bf16.mxu0 0
        %1948 = vmatpush1.bf16.msra.mxu0 %v1931
        %1949 = vmatprep.subr.bf16.mxu0 0
        %1950 = vmatpush1.bf16.msra.mxu0 %v1932
        %1951 = vmatprep.subr.bf16.mxu0 0
        %1952 = vmatpush1.bf16.msra.mxu0 %v1933
        %1953 = vmatprep.subr.bf16.mxu0 0
        %1954 = vmatpush1.bf16.msra.mxu0 0
        %1955 = vmatprep.subr.bf16.mxu0 0
        %1956 = vmatpush1.bf16.msra.mxu0 0
        %1957 = vmatprep.subr.bf16.mxu0 0
        %1958 = vmatpush1.bf16.msra.mxu0 0
        %1959 = vmatprep.subr.bf16.mxu0 0
        %1960 = vmatpush1.bf16.msra.mxu0 0
        %1961 = vmatprep.subr.bf16.mxu0 0
        %1962 = vmatpush1.bf16.msra.mxu0 0
        %1963 = vmatprep.subr.bf16.mxu0 0
        %1964 = vmatpush1.bf16.msra.mxu0 0
        %1965 = vmatprep.subr.bf16.mxu0 0
        %1966 = vmatpush1.bf16.msra.mxu0 0
        %1967 = vmatprep.subr.bf16.mxu0 0
        %1968 = vmatpush1.bf16.msra.mxu0 0
        %1969 = vmatprep.subr.bf16.mxu0 0
        %1970 = vmatpush1.bf16.msra.mxu0 0
        %1971 = vmatprep.subr.bf16.mxu0 0
        %1972 = vmatpush1.bf16.msra.mxu0 0
        %1973 = vmatprep.subr.bf16.mxu0 0
        %1974 = vmatpush1.bf16.msra.mxu0 0
        %1975 = vmatprep.subr.bf16.mxu0 0
        %1976 = vmatpush1.bf16.msra.mxu0 0
        %1977 = vmatprep.mubr.bf16.mxu0 0
        %1978 = vmatmul.mubr.bf16.gmra.mrb[0].mxu0 %v1940
        %v1979 = vpop.f32.mrb[0].mxu0
        %v1980 = vadd.f32 %v1912, %v1979
        %v1981 = vpop.f32.mrb[0].mxu0
        %v1982 = vpop.f32.mrb[0].mxu0
        %v1983 = vadd.f32 %v1912, %v1982
        %v1984 = vpop.f32.mrb[0].mxu0
        %1985 = vmatprep.mubr.bf16.mxu0 0
        %1986 = vmatmul.mubr.bf16.gmra.mrb[0].mxu0 %v1943
        %v1987 = vpop.f32.mrb[0].mxu0
        %v1988 = vadd.f32 %v1912, %v1987
        %v1989 = vpop.f32.mrb[0].mxu0
        %v1990 = vpop.f32.mrb[0].mxu0
        %v1991 = vadd.f32 %v1912, %v1990
        %v1992 = vpop.f32.mrb[0].mxu0
        %1993 = vdwg.mxu0
        %v1994 = vmul.f32 %v1980, 0.5
        %v1995 = vmul.f32 %v1983, 0.5
        %v1996 = vmul.f32 %v1988, 0.5
        %v1997 = vmul.f32 %v1991, 0.5
        %v1998 = vmul.f32 %v1980, 0.70710677
        %v1999 = vmul.f32 %v1983, 0.70710677
        %v2000 = vmul.f32 %v1988, 0.70710677
        %v2001 = vmul.f32 %v1991, 0.70710677
        %v2002 = verf.f32.pop %v1998
        %v2003 = verf.f32.pop %v1999
        %v2004 = verf.f32.pop %v2000
        %v2005 = verf.f32.pop %v2001
        %v2006 = vadd.f32 %v2002, 1.0
        %v2007 = vadd.f32 %v2003, 1.0
        %v2008 = vadd.f32 %v2004, 1.0
        %v2009 = vadd.f32 %v2005, 1.0
        %v2010 = vmul.f32 %v1994, %v2006
        %v2011 = vmul.f32 %v1995, %v2007
        %v2012 = vmul.f32 %v1996, %v2008
        %v2013 = vmul.f32 %v1997, %v2009
        %v2014 = vld [vmem:[#allocation4] sm:$0xff]
        %v2015 = vld [vmem:[#allocation4 + $0x8] sm:$0xff]
        %v2016 = vld [vmem:[#allocation4 + $0x10] sm:$0xff]
        %v2017 = vld [vmem:[#allocation4 + $0x18] sm:$0xff]
        %v2018 = vpack.c.bf16 %v2011, %v2010
        %v2019 = vpack.c.bf16 %v2013, %v2012
        %v2020 = vld [vmem:[%s518] sm:$0xf]
        %v2021 = vld [vmem:[%s518 + $0x4] sm:$0xf]
        %v2022 = vld [vmem:[%s518 + $0x8] sm:$0xf]
        %v2023 = vld [vmem:[%s518 + $0xc] sm:$0xf]
        %v2024 = vld [vmem:[%s518 + $0x10] sm:$0xf]
        %v2025 = vld [vmem:[%s518 + $0x14] sm:$0xf]
        %v2026 = vld [vmem:[%s518 + $0x18] sm:$0xf]
        %v2027 = vld [vmem:[%s518 + $0x1c] sm:$0xf]
        %v2028 = vld [vmem:[%s518 + $0x20] sm:$0xf]
        %v2029 = vld [vmem:[%s518 + $0x24] sm:$0xf]
        %v2030 = vld [vmem:[%s518 + $0x28] sm:$0xf]
        %v2031 = vld [vmem:[%s518 + $0x2c] sm:$0xf]
        %v2032 = vld [vmem:[%s518 + $0x30] sm:$0xf]
        %v2033 = vld [vmem:[%s518 + $0x34] sm:$0xf]
        %v2034 = vld [vmem:[%s518 + $0x38] sm:$0xf]
        %v2035 = vld [vmem:[%s518 + $0x3c] sm:$0xf]
        %v2052 = vunpack.c.l.b16 %v2020
        %v2053 = vunpack.c.l.b16 %v2021
        %v2054 = vunpack.c.l.b16 %v2022
        %v2055 = vunpack.c.l.b16 %v2023
        %v2056 = vunpack.c.l.b16 %v2024
        %v2057 = vunpack.c.l.b16 %v2025
        %v2058 = vunpack.c.l.b16 %v2026
        %v2059 = vunpack.c.l.b16 %v2027
        %v2060 = vunpack.c.l.b16 %v2028
        %v2061 = vunpack.c.l.b16 %v2029
        %v2062 = vunpack.c.l.b16 %v2030
        %v2063 = vunpack.c.l.b16 %v2031
        %v2064 = vunpack.c.l.b16 %v2032
        %v2065 = vunpack.c.l.b16 %v2033
        %v2066 = vunpack.c.l.b16 %v2034
        %v2067 = vunpack.c.l.b16 %v2035
        %v2068 = vpack.c.b16 %v2053, %v2052
        %v2069 = vpack.c.b16 %v2055, %v2054
        %v2070 = vpack.c.b16 %v2057, %v2056
        %v2071 = vpack.c.b16 %v2059, %v2058
        %v2072 = vpack.c.b16 %v2061, %v2060
        %v2073 = vpack.c.b16 %v2063, %v2062
        %v2074 = vpack.c.b16 %v2065, %v2064
        %v2075 = vpack.c.b16 %v2067, %v2066
        %2084 = vmatprep.subr.bf16.mxu0 0
        %2085 = vmatpush1.bf16.msra.mxu0 %v2068
        %2086 = vmatprep.subr.bf16.mxu0 0
        %2087 = vmatpush1.bf16.msra.mxu0 %v2069
        %2088 = vmatprep.subr.bf16.mxu0 0
        %2089 = vmatpush1.bf16.msra.mxu0 %v2070
        %2090 = vmatprep.subr.bf16.mxu0 0
        %2091 = vmatpush1.bf16.msra.mxu0 %v2071
        %2092 = vmatprep.subr.bf16.mxu0 0
        %2093 = vmatpush1.bf16.msra.mxu0 %v2072
        %2094 = vmatprep.subr.bf16.mxu0 0
        %2095 = vmatpush1.bf16.msra.mxu0 %v2073
        %2096 = vmatprep.subr.bf16.mxu0 0
        %2097 = vmatpush1.bf16.msra.mxu0 %v2074
        %2098 = vmatprep.subr.bf16.mxu0 0
        %2099 = vmatpush1.bf16.msra.mxu0 %v2075
        %2100 = vmatprep.subr.bf16.mxu0 0
        %2101 = vmatpush1.bf16.msra.mxu0 0
        %2102 = vmatprep.subr.bf16.mxu0 0
        %2103 = vmatpush1.bf16.msra.mxu0 0
        %2104 = vmatprep.subr.bf16.mxu0 0
        %2105 = vmatpush1.bf16.msra.mxu0 0
        %2106 = vmatprep.subr.bf16.mxu0 0
        %2107 = vmatpush1.bf16.msra.mxu0 0
        %2108 = vmatprep.subr.bf16.mxu0 0
        %2109 = vmatpush1.bf16.msra.mxu0 0
        %2110 = vmatprep.subr.bf16.mxu0 0
        %2111 = vmatpush1.bf16.msra.mxu0 0
        %2112 = vmatprep.subr.bf16.mxu0 0
        %2113 = vmatpush1.bf16.msra.mxu0 0
        %2114 = vmatprep.subr.bf16.mxu0 0
        %2115 = vmatpush1.bf16.msra.mxu0 0
        %2116 = vmatprep.mubr.bf16.mxu0 0
        %2117 = vmatmul.mubr.bf16.gmra.mrb[0].mxu0 %v2018
        %v2118 = vpop.f32.mrb[0].mxu0
        %v2119 = vadd.f32 0.0, %v2118
        %v2120 = vpop.f32.mrb[0].mxu0
        %v2121 = vpop.f32.mrb[0].mxu0
        %v2122 = vadd.f32 0.0, %v2121
        %v2123 = vpop.f32.mrb[0].mxu0
        %2124 = vmatprep.mubr.bf16.mxu0 0
        %2125 = vmatmul.mubr.bf16.gmra.mrb[0].mxu0 %v2019
        %v2126 = vpop.f32.mrb[0].mxu0
        %v2127 = vadd.f32 0.0, %v2126
        %v2128 = vpop.f32.mrb[0].mxu0
        %v2129 = vpop.f32.mrb[0].mxu0
        %v2130 = vadd.f32 0.0, %v2129
        %v2131 = vpop.f32.mrb[0].mxu0
        %2132 = vdwg.mxu0
        %v2133 = vadd.f32 %v2014, %v2119
        %v2134 = vadd.f32 %v2015, %v2122
        %v2135 = vadd.f32 %v2016, %v2127
        %v2136 = vadd.f32 %v2017, %v2130
        %2137 = vst.msk [vmem:[#allocation4] sm:$0xff] %vm1938, %v2133
        %2138 = vst.msk [vmem:[#allocation4 + $0x8] sm:$0xff] %vm1938, %v2134
        %2139 = vst.msk [vmem:[#allocation4 + $0x10] sm:$0xff] %vm1938, %v2135
        %2140 = vst.msk [vmem:[#allocation4 + $0x18] sm:$0xff] %vm1938, %v2136
        %p2141 = scmp.eq.s32.totalorder %s28, 1
        // Predicated region
        $region110: #{tpu_custom_call.1} parent=100 // pred_check
          %p2142 = pneg %p2141
        $region111: #{tpu_custom_call.1} parent=100 // pred_check_branch
          %2144 = sbr.rel (%p2142) target = $region113
        $region112: #{tpu_custom_call.1} parent=100 // pred_region
          %v2145 = vld [vmem:[#allocation4] sm:$0xff]
          %v2146 = vld [vmem:[#allocation4 + $0x8] sm:$0xff]
          %v2147 = vld [vmem:[#allocation4 + $0x10] sm:$0xff]
          %v2148 = vld [vmem:[#allocation4 + $0x18] sm:$0xff]
          %2149 = vst.msk [vmem:[#allocation6] sm:$0xff] %vm1938, %v2145
          %2150 = vst.msk [vmem:[#allocation6 + $0x8] sm:$0xff] %vm1938, %v2146
          %2151 = vst.msk [vmem:[#allocation6 + $0x10] sm:$0xff] %vm1938, %v2147
          %2152 = vst.msk [vmem:[#allocation6 + $0x18] sm:$0xff] %vm1938, %v2148
        $region113: #{tpu_custom_call.1} parent=100 // pred_fallthru
          _
        // Predicated region
        $region114: #{tpu_custom_call.1} parent=100 // pred_check
          %p2153 = pneg %p304
        $region115: #{tpu_custom_call.1} parent=100 // pred_check_branch
          %2155 = sbr.rel (%p2153) target = $region117
        $region116: #{tpu_custom_call.1} parent=100 // pred_region
          %s2156 = smul.u32 2, %s27
          %s2158 = ssub.s32 512, 512
          %2159 = vsyncadd [#allocation7], %s2158
          %s2160 = smul.addr %s2156, 2
          %s2161 = smul.addr %s2160, 128
          %s2162 = scalar_lea.hbm %s11, %s2161
          %s2163 = sshll.u32 [#allocation6], 4
          %s2164 = int_to_ptr.vmem [resolvable:$true] %s2163
          %2169 = dma.vmem_to_hbm [thread:$0]  %s2164, 512, %s2162, [#allocation7], 128, 128, 8
        $region117: #{tpu_custom_call.1} parent=100 // pred_fallthru
          _
        // Predicated region
        $region118: #{tpu_custom_call.1} parent=100 // pred_check
          %p2170 = pneg %p304
        $region119: #{tpu_custom_call.1} parent=100 // pred_check_branch
          %2172 = sbr.rel (%p2170) target = $region121
        $region120: #{tpu_custom_call.1} parent=100 // pred_region
          %2173 = dma.done [#allocation7], 512
        $region121: #{tpu_custom_call.1} parent=100 // pred_fallthru
          _
      $region101: #{tpu_custom_call.1} parent=5 // pred_fallthru
        _
      %p2174 = scmp.le.s32.totalorder 2, %s18
      // Predicated region
      $region122: #{tpu_custom_call.1} parent=5 // pred_check
        %p2175 = pneg %p2174
      $region123: #{tpu_custom_call.1} parent=5 // pred_check_branch
        %2177 = sbr.rel (%p2175) target = $region125
      $region124: #{tpu_custom_call.1} parent=5 // pred_region
        %s2178 = ssub.s32 %s18, 2
      $region125: #{tpu_custom_call.1} parent=5 // pred_fallthru
        _
    $region6: #{tpu_custom_call.1} parent=1 // loop_footer
      %s22 = sadd.s32 1, %s18
    $region7: #{tpu_custom_call.1} parent=1 // loop_footer_branch
      %17 = sbr.rel target = $region3
    $region8: #{tpu_custom_call.1} parent=1 // loop_exit
      _
    %2179 = vsyncpa [#allocation7], 1
    %s2180 = scalar_lea.sflag [#allocation7], 1
    %2181 = vsyncpa %s2180, 1

// kernel: tpu_custom_call.1
$region0: #{tpu_custom_call.1}
  #allocation0 [shape = 'u32[]', space=smem, size = 0x4, offset = 0x4, fixed_abs, tag = 'smem constant byte address 0x4 - core index']
  #allocation1 [shape = 'u32[144,128]{1,0:T(1,128)}', space=vmem, size = 0x12000, scoped, tag = 'internal scratch']
  #allocation2 [shape = 'f32[32,64]{1,0:T(8,128)}', space=vmem, size = 0x4000, scoped, tag = 'scratch operand']
  #allocation3 [shape = 'bf16[32,64]{1,0:T(16,128)(2,1)}', space=vmem, size = 0x2000, scoped, tag = 'scratch operand']
  #allocation4 [shape = 'f32[32,64]{1,0:T(8,128)}', space=vmem, size = 0x4000, scoped, tag = 'scratch operand']
  %s0 = inlined_call_operand.vmem [shape: f32[2,16,64], index: 0, kind: input, shape index: {}]
  %s1 = inlined_call_operand.vmem [shape: f32[1,64], index: 1, kind: input, shape index: {}]
  %s2 = inlined_call_operand.vmem [shape: f32[1,64], index: 2, kind: input, shape index: {}]
  %s3 = inlined_call_operand.vmem [shape: bf16[64,192], index: 3, kind: input, shape index: {}]
  %s4 = inlined_call_operand.vmem [shape: f32[1,192], index: 4, kind: input, shape index: {}]
  %s5 = inlined_call_operand.vmem [shape: f32[1,64], index: 5, kind: input, shape index: {}]
  %s6 = inlined_call_operand.vmem [shape: f32[1,64], index: 6, kind: input, shape index: {}]
  %s7 = inlined_call_operand.vmem [shape: bf16[64,256], index: 7, kind: input, shape index: {}]
  %s8 = inlined_call_operand.vmem [shape: f32[1,256], index: 8, kind: input, shape index: {}]
  %s9 = inlined_call_operand.vmem [shape: bf16[256,64], index: 9, kind: input, shape index: {}]
  %s10 = inlined_call_operand.vmem [shape: f32[1,64], index: 10, kind: input, shape index: {}]
  %s11 = inlined_call_operand.hbm [shape: f32[2,16,64], index: 11, kind: output, shape index: {}]
  %s12 = sld [smem:[#allocation0]]
  $region126: #{tpu_custom_call.1} parent=0
    _
  %s14 = ssub.s32 1, %s12
  %s15 = scalar_select 0, %s14, %s12
  $region1: #{tpu_custom_call.1} parent=0
    #allocation5 [shape = 'u8[32768]{0}', space=vmem, size = 0x8000, scoped, tag = 'input window, operand 7']
    #allocation6 [shape = 'u8[16384]{0}', space=vmem, size = 0x4000, scoped, tag = 'output window, operand 0, single buffered']
    #allocation7 [shape = 's32[2]{0}', space=sflag, size = 0x8, scoped, tag = 'scoped memory for tpu_custom_call.1']
    %16 = vsyncpa [#allocation7], 0
    loop: start=0, step=1, limit=4
    $region2: #{tpu_custom_call.1} parent=1 // loop_pre_header
      _
    $region3: #{tpu_custom_call.1} parent=1 // loop_header
      %s18 = sphi 0, %s22
      %p19 = scmp.ge.s32.totalorder %s18, 4
      %s25 = sphi 0, %s37
      %s26 = sphi 0, %s33
      %s27 = sphi 0, %s25
      %s28 = sphi 0, %s26
      %s29 = sphi 0, %s27
      %s30 = sphi 0, %s28
      %s40 = sphi 0, %s42
      %s43 = sphi 0, %s40
      %s44 = sphi 0, %s43
      %s60 = sphi 0, %s44
      %s64 = sphi 0, %s64
      %s66 = sphi 0, %s64
      %s67 = sphi 0, %s66
      %s81 = sphi 0, %s67
      %s85 = sphi 0, %s85
      %s87 = sphi 0, %s85
      %s88 = sphi 0, %s87
      %s102 = sphi 0, %s88
      %s106 = sphi 0, %s106
      %s108 = sphi 0, %s106
      %s109 = sphi 0, %s108
      %s123 = sphi 0, %s109
      %s127 = sphi 0, %s127
      %s129 = sphi 0, %s127
      %s130 = sphi 0, %s129
      %s144 = sphi 0, %s130
      %s148 = sphi 0, %s148
      %s150 = sphi 0, %s148
      %s151 = sphi 0, %s150
      %s165 = sphi 0, %s151
      %s169 = sphi 0, %s169
      %s171 = sphi 0, %s169
      %s172 = sphi 0, %s171
      %s186 = sphi 0, %s172
      %s192 = sphi 0, %s194
      %s195 = sphi 0, %s192
      %s196 = sphi 0, %s195
      %s212 = sphi 0, %s196
      %s218 = sphi 0, %s220
      %s221 = sphi 0, %s218
      %s222 = sphi 0, %s221
      %s238 = sphi 0, %s222
      %s244 = sphi 0, %s246
      %s247 = sphi 0, %s244
      %s248 = sphi 0, %s247
      %s264 = sphi 0, %s248
      %s268 = sphi 0, %s268
      %s270 = sphi 0, %s268
      %s271 = sphi 0, %s270
      %s285 = sphi 0, %s271
      %s291 = sphi 0, %s293
      %s294 = sphi 0, %s291
      %s295 = sphi 0, %s294
      %s311 = sphi 0, %s295
    $region4: #{tpu_custom_call.1} parent=1 // loop_header_branch
      %21 = sbr.rel (%p19) target = $region8
    $region5: #{tpu_custom_call.1} parent=1 // loop_body
      %s23 = ssub.s32 %s18, 1
      %s24 = ssub.s32 %s18, 2
      %s31 = sadd.s32 1, %s26
      %p32 = scmp.ge.s32.totalorder %s31, 2
      %s33 = scalar_select %p32, 0, %s31
      %s34 = sadd.s32 1, %s25
      %s35 = scalar_select %p32, %s34, %s25
      %p36 = scmp.ge.s32.totalorder %s35, 1
      %s37 = scalar_select %p36, 0, %s35
      %s38 = ssub.s32 %s25, %s37
      %p39 = scmp.eq.s32.totalorder %s38, 0
      %s41 = sadd.s32 %s40, 1
      %s42 = scalar_select %p39, %s40, %s41
      %p45 = pneg %p39
      %p46 = scmp.eq.s32.totalorder %s18, 1
      %p47 = por %p45, %p46
      %p48 = scmp.ne.s32.totalorder %s40, %s43
      %p49 = scmp.eq.s32.totalorder %s18, 0
      %p50 = por %p48, %p49
      %p51 = scmp.ne.s32.totalorder %s40, %s43
      %p52 = scmp.eq.s32.totalorder %s23, 1
      %p53 = por %p51, %p52
      %p54 = scmp.ne.s32.totalorder %s43, %s44
      %p55 = scmp.eq.s32.totalorder %s23, 0
      %p56 = por %p54, %p55
      %p57 = scmp.ne.s32.totalorder %s43, %s44
      %p58 = scmp.eq.s32.totalorder %s24, 1
      %p59 = por %p57, %p58
      %p61 = scmp.ne.s32.totalorder %s44, %s60
      %p62 = scmp.eq.s32.totalorder %s24, 0
      %p63 = por %p61, %p62
      %s65 = sadd.s32 %s64, 1
      %p68 = scmp.eq.s32.totalorder %s18, 1
      %p69 = scmp.ne.s32.totalorder %s64, %s66
      %p70 = scmp.eq.s32.totalorder %s18, 0
      %p71 = por %p69, %p70
      %p72 = scmp.ne.s32.totalorder %s64, %s66
      %p73 = scmp.eq.s32.totalorder %s23, 1
      %p74 = por %p72, %p73
      %p75 = scmp.ne.s32.totalorder %s66, %s67
      %p76 = scmp.eq.s32.totalorder %s23, 0
      %p77 = por %p75, %p76
      %p78 = scmp.ne.s32.totalorder %s66, %s67
      %p79 = scmp.eq.s32.totalorder %s24, 1
      %p80 = por %p78, %p79
      %p82 = scmp.ne.s32.totalorder %s67, %s81
      %p83 = scmp.eq.s32.totalorder %s24, 0
      %p84 = por %p82, %p83
      %s86 = sadd.s32 %s85, 1
      %p89 = scmp.eq.s32.totalorder %s18, 1
      %p90 = scmp.ne.s32.totalorder %s85, %s87
      %p91 = scmp.eq.s32.totalorder %s18, 0
      %p92 = por %p90, %p91
      %p93 = scmp.ne.s32.totalorder %s85, %s87
      %p94 = scmp.eq.s32.totalorder %s23, 1
      %p95 = por %p93, %p94
      %p96 = scmp.ne.s32.totalorder %s87, %s88
      %p97 = scmp.eq.s32.totalorder %s23, 0
      %p98 = por %p96, %p97
      %p99 = scmp.ne.s32.totalorder %s87, %s88
      %p100 = scmp.eq.s32.totalorder %s24, 1
      %p101 = por %p99, %p100
      %p103 = scmp.ne.s32.totalorder %s88, %s102
      %p104 = scmp.eq.s32.totalorder %s24, 0
      %p105 = por %p103, %p104
      %s107 = sadd.s32 %s106, 1
      %p110 = scmp.eq.s32.totalorder %s18, 1
      %p111 = scmp.ne.s32.totalorder %s106, %s108
      %p112 = scmp.eq.s32.totalorder %s18, 0
      %p113 = por %p111, %p112
      %p114 = scmp.ne.s32.totalorder %s106, %s108
      %p115 = scmp.eq.s32.totalorder %s23, 1
      %p116 = por %p114, %p115
      %p117 = scmp.ne.s32.totalorder %s108, %s109
      %p118 = scmp.eq.s32.totalorder %s23, 0
      %p119 = por %p117, %p118
      %p120 = scmp.ne.s32.totalorder %s108, %s109
      %p121 = scmp.eq.s32.totalorder %s24, 1
      %p122 = por %p120, %p121
      %p124 = scmp.ne.s32.totalorder %s109, %s123
      %p125 = scmp.eq.s32.totalorder %s24, 0
      %p126 = por %p124, %p125
      %s128 = sadd.s32 %s127, 1
      %p131 = scmp.eq.s32.totalorder %s18, 1
      %p132 = scmp.ne.s32.totalorder %s127, %s129
      %p133 = scmp.eq.s32.totalorder %s18, 0
      %p134 = por %p132, %p133
      %p135 = scmp.ne.s32.totalorder %s127, %s129
      %p136 = scmp.eq.s32.totalorder %s23, 1
      %p137 = por %p135, %p136
      %p138 = scmp.ne.s32.totalorder %s129, %s130
      %p139 = scmp.eq.s32.totalorder %s23, 0
      %p140 = por %p138, %p139
      %p141 = scmp.ne.s32.totalorder %s129, %s130
      %p142 = scmp.eq.s32.totalorder %s24, 1
      %p143 = por %p141, %p142
      %p145 = scmp.ne.s32.totalorder %s130, %s144
      %p146 = scmp.eq.s32.totalorder %s24, 0
      %p147 = por %p145, %p146
      %s149 = sadd.s32 %s148, 1
      %p152 = scmp.eq.s32.totalorder %s18, 1
      %p153 = scmp.ne.s32.totalorder %s148, %s150
      %p154 = scmp.eq.s32.totalorder %s18, 0
      %p155 = por %p153, %p154
      %p156 = scmp.ne.s32.totalorder %s148, %s150
      %p157 = scmp.eq.s32.totalorder %s23, 1
      %p158 = por %p156, %p157
      %p159 = scmp.ne.s32.totalorder %s150, %s151
      %p160 = scmp.eq.s32.totalorder %s23, 0
      %p161 = por %p159, %p160
      %p162 = scmp.ne.s32.totalorder %s150, %s151
      %p163 = scmp.eq.s32.totalorder %s24, 1
      %p164 = por %p162, %p163
      %p166 = scmp.ne.s32.totalorder %s151, %s165
      %p167 = scmp.eq.s32.totalorder %s24, 0
      %p168 = por %p166, %p167
      %s170 = sadd.s32 %s169, 1
      %p173 = scmp.eq.s32.totalorder %s18, 1
      %p174 = scmp.ne.s32.totalorder %s169, %s171
      %p175 = scmp.eq.s32.totalorder %s18, 0
      %p176 = por %p174, %p175
      %p177 = scmp.ne.s32.totalorder %s169, %s171
      %p178 = scmp.eq.s32.totalorder %s23, 1
      %p179 = por %p177, %p178
      %p180 = scmp.ne.s32.totalorder %s171, %s172
      %p181 = scmp.eq.s32.totalorder %s23, 0
      %p182 = por %p180, %p181
      %p183 = scmp.ne.s32.totalorder %s171, %s172
      %p184 = scmp.eq.s32.totalorder %s24, 1
      %p185 = por %p183, %p184
      %p187 = scmp.ne.s32.totalorder %s172, %s186
      %p188 = scmp.eq.s32.totalorder %s24, 0
      %p189 = por %p187, %p188
      %s190 = ssub.s32 %s26, %s33
      %p191 = scmp.eq.s32.totalorder %s190, 0
      %s193 = sadd.s32 %s192, 1
      %s194 = scalar_select %p191, %s192, %s193
      %p197 = pneg %p191
      %p198 = scmp.eq.s32.totalorder %s18, 1
      %p199 = por %p197, %p198
      %p200 = scmp.ne.s32.totalorder %s192, %s195
      %p201 = scmp.eq.s32.totalorder %s18, 0
      %p202 = por %p200, %p201
      %p203 = scmp.ne.s32.totalorder %s192, %s195
      %p204 = scmp.eq.s32.totalorder %s23, 1
      %p205 = por %p203, %p204
      %p206 = scmp.ne.s32.totalorder %s195, %s196
      %p207 = scmp.eq.s32.totalorder %s23, 0
      %p208 = por %p206, %p207
      %p209 = scmp.ne.s32.totalorder %s195, %s196
      %p210 = scmp.eq.s32.totalorder %s24, 1
      %p211 = por %p209, %p210
      %p213 = scmp.ne.s32.totalorder %s196, %s212
      %p214 = scmp.eq.s32.totalorder %s24, 0
      %p215 = por %p213, %p214
      %s216 = ssub.s32 %s26, %s33
      %p217 = scmp.eq.s32.totalorder %s216, 0
      %s219 = sadd.s32 %s218, 1
      %s220 = scalar_select %p217, %s218, %s219
      %p223 = pneg %p217
      %p224 = scmp.eq.s32.totalorder %s18, 1
      %p225 = por %p223, %p224
      %p226 = scmp.ne.s32.totalorder %s218, %s221
      %p227 = scmp.eq.s32.totalorder %s18, 0
      %p228 = por %p226, %p227
      %p229 = scmp.ne.s32.totalorder %s218, %s221
      %p230 = scmp.eq.s32.totalorder %s23, 1
      %p231 = por %p229, %p230
      %p232 = scmp.ne.s32.totalorder %s221, %s222
      %p233 = scmp.eq.s32.totalorder %s23, 0
      %p234 = por %p232, %p233
      %p235 = scmp.ne.s32.totalorder %s221, %s222
      %p236 = scmp.eq.s32.totalorder %s24, 1
      %p237 = por %p235, %p236
      %p239 = scmp.ne.s32.totalorder %s222, %s238
      %p240 = scmp.eq.s32.totalorder %s24, 0
      %p241 = por %p239, %p240
      %s242 = ssub.s32 %s26, %s33
      %p243 = scmp.eq.s32.totalorder %s242, 0
      %s245 = sadd.s32 %s244, 1
      %s246 = scalar_select %p243, %s244, %s245
      %p249 = pneg %p243
      %p250 = scmp.eq.s32.totalorder %s18, 1
      %p251 = por %p249, %p250
      %p252 = scmp.ne.s32.totalorder %s244, %s247
      %p253 = scmp.eq.s32.totalorder %s18, 0
      %p254 = por %p252, %p253
      %p255 = scmp.ne.s32.totalorder %s244, %s247
      %p256 = scmp.eq.s32.totalorder %s23, 1
      %p257 = por %p255, %p256
      %p258 = scmp.ne.s32.totalorder %s247, %s248
      %p259 = scmp.eq.s32.totalorder %s23, 0
      %p260 = por %p258, %p259
      %p261 = scmp.ne.s32.totalorder %s247, %s248
      %p262 = scmp.eq.s32.totalorder %s24, 1
      %p263 = por %p261, %p262
      %p265 = scmp.ne.s32.totalorder %s248, %s264
      %p266 = scmp.eq.s32.totalorder %s24, 0
      %p267 = por %p265, %p266
      %s269 = sadd.s32 %s268, 1
      %p272 = scmp.eq.s32.totalorder %s18, 1
      %p273 = scmp.ne.s32.totalorder %s268, %s270
      %p274 = scmp.eq.s32.totalorder %s18, 0
      %p275 = por %p273, %p274
      %p276 = scmp.ne.s32.totalorder %s268, %s270
      %p277 = scmp.eq.s32.totalorder %s23, 1
      %p278 = por %p276, %p277
      %p279 = scmp.ne.s32.totalorder %s270, %s271
      %p280 = scmp.eq.s32.totalorder %s23, 0
      %p281 = por %p279, %p280
      %p282 = scmp.ne.s32.totalorder %s270, %s271
      %p283 = scmp.eq.s32.totalorder %s24, 1
      %p284 = por %p282, %p283
      %p286 = scmp.ne.s32.totalorder %s271, %s285
      %p287 = scmp.eq.s32.totalorder %s24, 0
      %p288 = por %p286, %p287
      %s289 = ssub.s32 %s25, %s37
      %p290 = scmp.eq.s32.totalorder %s289, 0
      %s292 = sadd.s32 %s291, 1
      %s293 = scalar_select %p290, %s291, %s292
      %p296 = pneg %p290
      %p297 = scmp.eq.s32.totalorder %s18, 1
      %p298 = por %p296, %p297
      %p299 = scmp.ne.s32.totalorder %s291, %s294
      %p300 = scmp.eq.s32.totalorder %s18, 0
      %p301 = por %p299, %p300
      %p302 = scmp.ne.s32.totalorder %s291, %s294
      %p303 = scmp.eq.s32.totalorder %s23, 1
      %p304 = por %p302, %p303
      %p305 = scmp.ne.s32.totalorder %s294, %s295
      %p306 = scmp.eq.s32.totalorder %s23, 0
      %p307 = por %p305, %p306
      %p308 = scmp.ne.s32.totalorder %s294, %s295
      %p309 = scmp.eq.s32.totalorder %s24, 1
      %p310 = por %p308, %p309
      %p312 = scmp.ne.s32.totalorder %s295, %s311
      %p313 = scmp.eq.s32.totalorder %s24, 0
      %p314 = por %p312, %p313
      %p315 = scmp.le.s32.totalorder 1, %s18
      %p316 = scmp.lt.s32.totalorder %s18, 3
      %p317 = pnand %p315, %p316
      %p318 = pneg %p317
      // Predicated region
      $region9: #{tpu_custom_call.1} parent=5 // pred_check
        _
      $region10: #{tpu_custom_call.1} parent=5 // pred_check_branch
        %320 = sbr.rel (%p317) target = $region12
      $region11: #{tpu_custom_call.1} parent=5 // pred_region
        %s321 = ssub.s32 %s18, 1
        // Predicated region
        $region13: #{tpu_custom_call.1} parent=11 // pred_check
          %p322 = pneg %p56
        $region14: #{tpu_custom_call.1} parent=11 // pred_check_branch
          %324 = sbr.rel (%p322) target = $region16
        $region15: #{tpu_custom_call.1} parent=11 // pred_region
          %s325 = smul.u32 2, %s27
          %p326 = scmp.lt.s32.totalorder %s325, 1
          %s327 = scalar_select %p326, %s325, 1
          %s328 = smul.addr %s327, 2
          %s329 = smul.addr %s328, 8
          %s330 = scalar_lea.vmem %s0, %s329
          %s331 = smul.u32 2, %s27
        $region16: #{tpu_custom_call.1} parent=11 // pred_fallthru
          _
        // Predicated region
        $region17: #{tpu_custom_call.1} parent=11 // pred_check
          %p332 = pneg %p77
        $region18: #{tpu_custom_call.1} parent=11 // pred_check_branch
          %334 = sbr.rel (%p332) target = $region20
        $region19: #{tpu_custom_call.1} parent=11 // pred_region
          _
        $region20: #{tpu_custom_call.1} parent=11 // pred_fallthru
          _
        // Predicated region
        $region21: #{tpu_custom_call.1} parent=11 // pred_check
          %p335 = pneg %p98
        $region22: #{tpu_custom_call.1} parent=11 // pred_check_branch
          %337 = sbr.rel (%p335) target = $region24
        $region23: #{tpu_custom_call.1} parent=11 // pred_region
          _
        $region24: #{tpu_custom_call.1} parent=11 // pred_fallthru
          _
        // Predicated region
        $region25: #{tpu_custom_call.1} parent=11 // pred_check
          %p338 = pneg %p119
        $region26: #{tpu_custom_call.1} parent=11 // pred_check_branch
          %340 = sbr.rel (%p338) target = $region28
        $region27: #{tpu_custom_call.1} parent=11 // pred_region
          _
        $region28: #{tpu_custom_call.1} parent=11 // pred_fallthru
          _
        // Predicated region
        $region29: #{tpu_custom_call.1} parent=11 // pred_check
          %p341 = pneg %p140
        $region30: #{tpu_custom_call.1} parent=11 // pred_check_branch
          %343 = sbr.rel (%p341) target = $region32
        $region31: #{tpu_custom_call.1} parent=11 // pred_region
          _
        $region32: #{tpu_custom_call.1} parent=11 // pred_fallthru
          _
        // Predicated region
        $region33: #{tpu_custom_call.1} parent=11 // pred_check
          %p344 = pneg %p161
        $region34: #{tpu_custom_call.1} parent=11 // pred_check_branch
          %346 = sbr.rel (%p344) target = $region36
        $region35: #{tpu_custom_call.1} parent=11 // pred_region
          _
        $region36: #{tpu_custom_call.1} parent=11 // pred_fallthru
          _
        // Predicated region
        $region37: #{tpu_custom_call.1} parent=11 // pred_check
          %p347 = pneg %p182
        $region38: #{tpu_custom_call.1} parent=11 // pred_check_branch
          %349 = sbr.rel (%p347) target = $region40
        $region39: #{tpu_custom_call.1} parent=11 // pred_region
          _
        $region40: #{tpu_custom_call.1} parent=11 // pred_fallthru
          _
        // Predicated region
        $region41: #{tpu_custom_call.1} parent=11 // pred_check
          %p350 = pneg %p281
        $region42: #{tpu_custom_call.1} parent=11 // pred_check_branch
          %352 = sbr.rel (%p350) target = $region44
        $region43: #{tpu_custom_call.1} parent=11 // pred_region
          _
        $region44: #{tpu_custom_call.1} parent=11 // pred_fallthru
          _
      $region12: #{tpu_custom_call.1} parent=5 // pred_fallthru
        _
      %p353 = scmp.lt.s32.totalorder %s18, 2
      // Predicated region
      $region45: #{tpu_custom_call.1} parent=5 // pred_check
        %p354 = pneg %p353
      $region46: #{tpu_custom_call.1} parent=5 // pred_check_branch
        %356 = sbr.rel (%p354) target = $region48
      $region47: #{tpu_custom_call.1} parent=5 // pred_region
        // Predicated region
        $region49: #{tpu_custom_call.1} parent=47 // pred_check
          %p357 = pneg %p202
        $region50: #{tpu_custom_call.1} parent=47 // pred_check_branch
          %359 = sbr.rel (%p357) target = $region52
        $region51: #{tpu_custom_call.1} parent=47 // pred_region
          %s360 = sand.u32 %s192, 1
          %s361 = sand.u32 %s192, 1
          %s362 = smul.addr %s361, 32
          %s363 = scalar_lea.vmem [#allocation5], %s362
          %s364 = smul.addr %s26, 4
          %s365 = scalar_lea.vmem %s7, %s364
          // Predicated region
          $region53: #{tpu_custom_call.1} parent=51 // pred_check
            _
          $region54: #{tpu_custom_call.1} parent=51 // pred_check_branch
            %367 = sbr.rel (0) target = $region56
          $region55: #{tpu_custom_call.1} parent=51 // pred_region
            // Predicated region
            $region57: #{tpu_custom_call.1} parent=55 // pred_check
              _
            $region58: #{tpu_custom_call.1} parent=55 // pred_check_branch
              %369 = sbr.rel target = $region60
            $region59: #{tpu_custom_call.1} parent=55 // pred_region
              // Predicated region
              $region72: #{tpu_custom_call.1} parent=59 // pred_check
                _
              $region73: #{tpu_custom_call.1} parent=59 // pred_check_branch
                %398 = sbr.rel (0) target = $region75
              $region74: #{tpu_custom_call.1} parent=59 // pred_region
                loop: start=0, step=1, limit=1
                $region76: #{tpu_custom_call.1} parent=74 // loop_pre_header
                  _
                $region77: #{tpu_custom_call.1} parent=74 // loop_header
                  %s400 = sphi 0, %s404
                  %p401 = scmp.ge.s32.totalorder %s400, 1
                  %s405 = sphi %s365, %s365
                  %s406 = sphi %s363, %s363
                $region78: #{tpu_custom_call.1} parent=74 // loop_header_branch
                  %403 = sbr.rel (%p401) target = $region82
                $region79: #{tpu_custom_call.1} parent=74 // loop_body
                  _
                $region80: #{tpu_custom_call.1} parent=74 // loop_footer
                  %s404 = sadd.s32 1, %s400
                $region81: #{tpu_custom_call.1} parent=74 // loop_footer_branch
                  %399 = sbr.rel target = $region77
                $region82: #{tpu_custom_call.1} parent=74 // loop_exit
                  _
                loop: start=0, step=1, limit=1
                $region83: #{tpu_custom_call.1} parent=74 // loop_pre_header
                  _
                $region84: #{tpu_custom_call.1} parent=74 // loop_header
                  %s409 = sphi 0, %s413
                  %p410 = scmp.ge.s32.totalorder %s409, 1
                  %s414 = sphi %s365, %s365
                  %s415 = sphi %s363, %s363
                $region85: #{tpu_custom_call.1} parent=74 // loop_header_branch
                  %412 = sbr.rel (%p410) target = $region89
                $region86: #{tpu_custom_call.1} parent=74 // loop_body
                  %v416 = vld [vmem:[%s414] sm:$0xf]
                  %417 = vst [vmem:[%s415] sm:$0xf] %v416
                  %v418 = vld [vmem:[%s414 + $0x8] sm:$0xf]
                  %419 = vst [vmem:[%s415 + $0x4] sm:$0xf] %v418
                  %v420 = vld [vmem:[%s414 + $0x10] sm:$0xf]
                  %421 = vst [vmem:[%s415 + $0x8] sm:$0xf] %v420
                  %v422 = vld [vmem:[%s414 + $0x18] sm:$0xf]
                  %423 = vst [vmem:[%s415 + $0xc] sm:$0xf] %v422
                  %v424 = vld [vmem:[%s414 + $0x20] sm:$0xf]
                  %425 = vst [vmem:[%s415 + $0x10] sm:$0xf] %v424
                  %v426 = vld [vmem:[%s414 + $0x28] sm:$0xf]
                  %427 = vst [vmem:[%s415 + $0x14] sm:$0xf] %v426
                  %v428 = vld [vmem:[%s414 + $0x30] sm:$0xf]
                  %429 = vst [vmem:[%s415 + $0x18] sm:$0xf] %v428
                  %v430 = vld [vmem:[%s414 + $0x38] sm:$0xf]
                  %431 = vst [vmem:[%s415 + $0x1c] sm:$0xf] %v430
                $region87: #{tpu_custom_call.1} parent=74 // loop_footer
                  %s413 = sadd.s32 1, %s409
                $region88: #{tpu_custom_call.1} parent=74 // loop_footer_branch
                  %408 = sbr.rel target = $region84
                $region89: #{tpu_custom_call.1} parent=74 // loop_exit
                  _
              $region75: #{tpu_custom_call.1} parent=59 // pred_fallthru
                _
            $region60: #{tpu_custom_call.1} parent=55 // pred_fallthru
              _
            // Predicated region
            $region61: #{tpu_custom_call.1} parent=55 // pred_check
              _
            $region62: #{tpu_custom_call.1} parent=55 // pred_check_branch
              %371 = sbr.rel (0) target = $region64
            $region63: #{tpu_custom_call.1} parent=55 // pred_region
              loop: start=0, step=1, limit=1
              $region65: #{tpu_custom_call.1} parent=63 // loop_pre_header
                _
              $region66: #{tpu_custom_call.1} parent=63 // loop_header
                %s374 = sphi 0, %s378
                %p375 = scmp.ge.s32.totalorder %s374, 1
                %s379 = sphi %s365, %s365
                %s380 = sphi %s363, %s363
              $region67: #{tpu_custom_call.1} parent=63 // loop_header_branch
                %377 = sbr.rel (%p375) target = $region71
              $region68: #{tpu_custom_call.1} parent=63 // loop_body
                %v381 = vld [vmem:[%s379] sm:$0xf]
                %382 = vst [vmem:[%s380] sm:$0xf] %v381
                %v383 = vld [vmem:[%s379 + $0x8] sm:$0xf]
                %384 = vst [vmem:[%s380 + $0x4] sm:$0xf] %v383
                %v385 = vld [vmem:[%s379 + $0x10] sm:$0xf]
                %386 = vst [vmem:[%s380 + $0x8] sm:$0xf] %v385
                %v387 = vld [vmem:[%s379 + $0x18] sm:$0xf]
                %388 = vst [vmem:[%s380 + $0xc] sm:$0xf] %v387
                %v389 = vld [vmem:[%s379 + $0x20] sm:$0xf]
                %390 = vst [vmem:[%s380 + $0x10] sm:$0xf] %v389
                %v391 = vld [vmem:[%s379 + $0x28] sm:$0xf]
                %392 = vst [vmem:[%s380 + $0x14] sm:$0xf] %v391
                %v393 = vld [vmem:[%s379 + $0x30] sm:$0xf]
                %394 = vst [vmem:[%s380 + $0x18] sm:$0xf] %v393
                %v395 = vld [vmem:[%s379 + $0x38] sm:$0xf]
                %396 = vst [vmem:[%s380 + $0x1c] sm:$0xf] %v395
              $region69: #{tpu_custom_call.1} parent=63 // loop_footer
                %s378 = sadd.s32 1, %s374
              $region70: #{tpu_custom_call.1} parent=63 // loop_footer_branch
                %373 = sbr.rel target = $region66
              $region71: #{tpu_custom_call.1} parent=63 // loop_exit
                _
            $region64: #{tpu_custom_call.1} parent=55 // pred_fallthru
              _
          $region56: #{tpu_custom_call.1} parent=51 // pred_fallthru
            _
          %432 = vnop
        $region52: #{tpu_custom_call.1} parent=47 // pred_fallthru
          _
        // Predicated region
        $region90: #{tpu_custom_call.1} parent=47 // pred_check
          %p433 = pneg %p228
        $region91: #{tpu_custom_call.1} parent=47 // pred_check_branch
          %435 = sbr.rel (%p433) target = $region93
        $region92: #{tpu_custom_call.1} parent=47 // pred_region
          %p436 = scmp.lt.s32.totalorder %s26, 1
          %s437 = scalar_select %p436, %s26, 1
          %s438 = scalar_lea.vmem %s8, %s437
        $region93: #{tpu_custom_call.1} parent=47 // pred_fallthru
          _
        // Predicated region
        $region94: #{tpu_custom_call.1} parent=47 // pred_check
          %p439 = pneg %p254
        $region95: #{tpu_custom_call.1} parent=47 // pred_check_branch
          %441 = sbr.rel (%p439) target = $region97
        $region96: #{tpu_custom_call.1} parent=47 // pred_region
          %s442 = smul.u32 16, %s26
          %p443 = scmp.lt.s32.totalorder %s442, 31
          %s444 = scalar_select %p443, %s442, 31
          %s445 = smul.addr %s444, 4
          %s446 = scalar_lea.vmem %s9, %s445
          %s447 = smul.u32 16, %s26
        $region97: #{tpu_custom_call.1} parent=47 // pred_fallthru
          _
      $region48: #{tpu_custom_call.1} parent=5 // pred_fallthru
        _
      %p448 = scmp.le.s32.totalorder 1, %s18
      %p449 = scmp.lt.s32.totalorder %s18, 3
      %p450 = pnand %p448, %p449
      %p451 = pneg %p450
      // Predicated region
      $region98: #{tpu_custom_call.1} parent=5 // pred_check
        _
      $region99: #{tpu_custom_call.1} parent=5 // pred_check_branch
        %453 = sbr.rel (%p450) target = $region101
      $region100: #{tpu_custom_call.1} parent=5 // pred_region
        %s454 = ssub.s32 %s18, 1
        %s455 = sand.u32 %s195, 1
        %s456 = sand.u32 %s195, 1
        %s457 = smul.addr %s456, 32
        %s458 = scalar_lea.vmem [#allocation5], %s457
        // Predicated region
        $region102: #{tpu_custom_call.1} parent=100 // pred_check
          %p459 = pneg %p208
        $region103: #{tpu_custom_call.1} parent=100 // pred_check_branch
          %461 = sbr.rel (%p459) target = $region105
        $region104: #{tpu_custom_call.1} parent=100 // pred_region
          _
        $region105: #{tpu_custom_call.1} parent=100 // pred_fallthru
          _
        %s462 = smul.u32 2, %s27
        %p463 = scmp.lt.s32.totalorder %s462, 1
        %s464 = scalar_select %p463, %s462, 1
        %s465 = smul.addr %s464, 2
        %s466 = smul.addr %s465, 8
        %s467 = scalar_lea.vmem %s0, %s466
        %p468 = pneg %p56
        %p469 = pneg %p53
        %p470 = pneg %p77
        %p471 = pneg %p74
        %p472 = pneg %p98
        %p473 = pneg %p95
        %p474 = pneg %p119
        %p475 = pneg %p116
        %p476 = pneg %p140
        %p477 = pneg %p137
        %p478 = pneg %p161
        %p479 = pneg %p158
        %p480 = pneg %p182
        %p481 = pneg %p179
        %s482 = sand.u32 %s195, 1
        %s483 = sand.u32 %s195, 1
        %s484 = smul.addr %s483, 32
        %s485 = scalar_lea.vmem [#allocation5], %s484
        %p486 = pneg %p208
        %p487 = pneg %p205
        %p488 = scmp.lt.s32.totalorder %s28, 1
        %s489 = scalar_select %p488, %s28, 1
        %s490 = scalar_lea.vmem %s8, %s489
        %p491 = pneg %p234
        %p492 = pneg %p231
        %s493 = smul.u32 16, %s28
        %p494 = scmp.lt.s32.totalorder %s493, 31
        %s495 = scalar_select %p494, %s493, 31
        %s496 = smul.addr %s495, 4
        %s497 = scalar_lea.vmem %s9, %s496
        %p498 = pneg %p260
        %p499 = pneg %p257
        %p500 = pneg %p281
        %p501 = pneg %p278
        %p502 = pneg %p307
        %p503 = pneg %p304
        %s504 = smul.u32 2, %s27
        %p505 = scmp.lt.s32.totalorder %s504, 1
        %s506 = scalar_select %p505, %s504, 1
        %s507 = smul.addr %s506, 2
        %s508 = smul.addr %s507, 8
        %s509 = scalar_lea.vmem %s0, %s508
        %s510 = smul.u32 2, %s27
        %p511 = scmp.lt.s32.totalorder %s28, 1
        %s512 = scalar_select %p511, %s28, 1
        %s513 = scalar_lea.vmem %s8, %s512
        %s514 = smul.u32 16, %s28
        %p515 = scmp.lt.s32.totalorder %s514, 31
        %s516 = scalar_select %p515, %s514, 31
        %s517 = smul.addr %s516, 4
        %s518 = scalar_lea.vmem %s9, %s517
        %s519 = smul.u32 16, %s28
        %s520 = smul.u32 2, %s27
        %p522 = scmp.eq.s32.totalorder %s28, 0
        // Predicated region
        $region106: #{tpu_custom_call.1} parent=100 // pred_check
          %p523 = pneg %p522
        $region107: #{tpu_custom_call.1} parent=100 // pred_check_branch
          %525 = sbr.rel (%p523) target = $region109
        $region108: #{tpu_custom_call.1} parent=100 // pred_region
          %v526 = vld [vmem:[%s509] sm:$0xff]
          %v527 = vld [vmem:[%s509 + $0x8] sm:$0xff]
          %v528 = vld [vmem:[%s509 + $0x10] sm:$0xff]
          %v529 = vld [vmem:[%s509 + $0x18] sm:$0xff]
          %vm530 = vcmask 523264
          %v531 = vsel %vm530, %v526, 0.0
          %532 = vadd.xlane.f32.xlu0 %v531
          %v533 = vpop.xlane.xlu0 %532
          %v534 = vsel %vm530, %v527, 0.0
          %535 = vadd.xlane.f32.xlu0 %v534
          %v536 = vpop.xlane.xlu0 %535
          %v537 = vsel %vm530, %v528, 0.0
          %538 = vadd.xlane.f32.xlu0 %v537
          %v539 = vpop.xlane.xlu0 %538
          %v540 = vsel %vm530, %v529, 0.0
          %541 = vadd.xlane.f32.xlu0 %v540
          %v542 = vpop.xlane.xlu0 %541
          %v543 = vrcp.pop 64.0
          %v544 = vmul.f32 %v533, %v543
          %v545 = vmul.f32 %v536, %v543
          %v546 = vmul.f32 %v539, %v543
          %v547 = vmul.f32 %v542, %v543
          %v548 = vsub.f32 %v526, %v544
          %v549 = vsub.f32 %v527, %v545
          %v550 = vsub.f32 %v528, %v546
          %v551 = vsub.f32 %v529, %v547
          %v552 = vmul.f32 %v548, %v548
          %v553 = vmul.f32 %v549, %v549
          %v554 = vmul.f32 %v550, %v550
          %v555 = vmul.f32 %v551, %v551
          %v556 = vsel %vm530, %v552, 0.0
          %557 = vadd.xlane.f32.xlu0 %v556
          %v558 = vpop.xlane.xlu0 %557
          %v559 = vsel %vm530, %v553, 0.0
          %560 = vadd.xlane.f32.xlu0 %v559
          %v561 = vpop.xlane.xlu0 %560
          %v562 = vsel %vm530, %v554, 0.0
          %563 = vadd.xlane.f32.xlu0 %v562
          %v564 = vpop.xlane.xlu0 %563
          %v565 = vsel %vm530, %v555, 0.0
          %566 = vadd.xlane.f32.xlu0 %v565
          %v567 = vpop.xlane.xlu0 %566
          %v568 = vmul.f32 %v558, %v543
          %v569 = vmul.f32 %v561, %v543
          %v570 = vmul.f32 %v564, %v543
          %v571 = vmul.f32 %v567, %v543
          %v572 = vadd.f32 %v568, 1e-05
          %v573 = vadd.f32 %v569, 1e-05
          %v574 = vadd.f32 %v570, 1e-05
          %v575 = vadd.f32 %v571, 1e-05
          %v576 = vrsqrt.pop %v572
          %v577 = vrsqrt.pop %v573
          %v578 = vrsqrt.pop %v574
          %v579 = vrsqrt.pop %v575
          %v580 = vmul.f32 %v548, %v576
          %v581 = vmul.f32 %v549, %v577
          %v582 = vmul.f32 %v550, %v578
          %v583 = vmul.f32 %v551, %v579
          %v584 = vld [vmem:[%s1] sm:$0x1]
          %v586 = vlaneseq
          %v587 = vshrl.u32 %v586, 7
          %v588 = vsub.s32 0, %v587
          %v589 = vrot.slane %v584, %v588
          %v591 = vmul.f32 %v580, %v589
          %v592 = vmul.f32 %v581, %v589
          %v593 = vmul.f32 %v582, %v589
          %v594 = vmul.f32 %v583, %v589
          %v595 = vld [vmem:[%s2] sm:$0x1]
          %v597 = vlaneseq
          %v598 = vshrl.u32 %v597, 7
          %v599 = vsub.s32 0, %v598
          %v600 = vrot.slane %v595, %v599
          %v602 = vadd.f32 %v591, %v600
          %v603 = vadd.f32 %v592, %v600
          %v604 = vadd.f32 %v593, %v600
          %v605 = vadd.f32 %v594, %v600
          %v606 = vpack.c.bf16 %v603, %v602
          %v607 = vpack.c.bf16 %v605, %v604
          %v608 = vld [vmem:[%s3] sm:$0xff]
          %v609 = vld [vmem:[%s3 + $0x8] sm:$0xff]
          %v610 = vld [vmem:[%s3 + $0x10] sm:$0xff]
          %v611 = vld [vmem:[%s3 + $0x18] sm:$0xff]
          %v612 = vld [vmem:[%s3 + $0x20] sm:$0xff]
          %v613 = vld [vmem:[%s3 + $0x28] sm:$0xff]
          %v614 = vld [vmem:[%s3 + $0x30] sm:$0xff]
          %v615 = vld [vmem:[%s3 + $0x38] sm:$0xff]
          %v616 = vld [vmem:[%s4] sm:$0x3]
          %v618 = vlaneseq
          %v619 = vshrl.u32 %v618, 7
          %v620 = vsub.s32 0, %v619
          %v621 = vrot.slane %v616, %v620
          %v622 = vlaneseq
          %v623 = vshrl.u32 %v622, 7
          %v624 = vsub.s32 1, %v623
          %v625 = vrot.slane %v616, %v624
          %v636 = vunpack.c.l.b16 %v608
          %v637 = vunpack.c.h.b16 %v608
          %v638 = vunpack.c.l.b16 %v609
          %v639 = vunpack.c.h.b16 %v609
          %v640 = vunpack.c.l.b16 %v610
          %v641 = vunpack.c.h.b16 %v610
          %v642 = vunpack.c.l.b16 %v611
          %v643 = vunpack.c.h.b16 %v611
          %v644 = vunpack.c.l.b16 %v612
          %v645 = vunpack.c.h.b16 %v612
          %v646 = vunpack.c.l.b16 %v613
          %v647 = vunpack.c.h.b16 %v613
          %v648 = vunpack.c.l.b16 %v614
          %v649 = vunpack.c.h.b16 %v614
          %v650 = vunpack.c.l.b16 %v615
          %v651 = vunpack.c.h.b16 %v615
          %v652 = vpack.c.b16 %v638, %v636
          %v653 = vpack.c.b16 %v639, %v637
          %v654 = vpack.c.b16 %v642, %v640
          %v655 = vpack.c.b16 %v643, %v641
          %v656 = vpack.c.b16 %v646, %v644
          %v657 = vpack.c.b16 %v647, %v645
          %v658 = vpack.c.b16 %v650, %v648
          %v659 = vpack.c.b16 %v651, %v649
          %v669 = vsel %vm530, %v606, 0
          %v672 = vsel %vm530, %v607, 0
          %674 = vmatprep.subr.bf16.mxu0 %v653
          %675 = vmatpush1.bf16.msra.mxu0 %v652
          %676 = vmatprep.subr.bf16.mxu0 %v655
          %677 = vmatpush1.bf16.msra.mxu0 %v654
          %678 = vmatprep.subr.bf16.mxu0 %v657
          %679 = vmatpush1.bf16.msra.mxu0 %v656
          %680 = vmatprep.subr.bf16.mxu0 %v659
          %681 = vmatpush1.bf16.msra.mxu0 %v658
          %682 = vmatprep.subr.bf16.mxu0 0
          %683 = vmatpush1.bf16.msra.mxu0 0
          %684 = vmatprep.subr.bf16.mxu0 0
          %685 = vmatpush1.bf16.msra.mxu0 0
          %686 = vmatprep.subr.bf16.mxu0 0
          %687 = vmatpush1.bf16.msra.mxu0 0
          %688 = vmatprep.subr.bf16.mxu0 0
          %689 = vmatpush1.bf16.msra.mxu0 0
          %690 = vmatprep.subr.bf16.mxu0 0
          %691 = vmatpush1.bf16.msra.mxu0 0
          %692 = vmatprep.subr.bf16.mxu0 0
          %693 = vmatpush1.bf16.msra.mxu0 0
          %694 = vmatprep.subr.bf16.mxu0 0
          %695 = vmatpush1.bf16.msra.mxu0 0
          %696 = vmatprep.subr.bf16.mxu0 0
          %697 = vmatpush1.bf16.msra.mxu0 0
          %698 = vmatprep.subr.bf16.mxu0 0
          %699 = vmatpush1.bf16.msra.mxu0 0
          %700 = vmatprep.subr.bf16.mxu0 0
          %701 = vmatpush1.bf16.msra.mxu0 0
          %702 = vmatprep.subr.bf16.mxu0 0
          %703 = vmatpush1.bf16.msra.mxu0 0
          %704 = vmatprep.subr.bf16.mxu0 0
          %705 = vmatpush1.bf16.msra.mxu0 0
          %706 = vmatprep.mubr.bf16.mxu0 0
          %707 = vmatmul.mubr.bf16.gmra.mrb[0].mxu0 %v669
          %v708 = vpop.f32.mrb[0].mxu0
          %v709 = vadd.f32 %v621, %v708
          %v710 = vpop.f32.mrb[0].mxu0
          %v711 = vadd.f32 %v625, %v710
          %v712 = vpop.f32.mrb[0].mxu0
          %v713 = vadd.f32 %v621, %v712
          %v714 = vpop.f32.mrb[0].mxu0
          %v715 = vadd.f32 %v625, %v714
          %716 = vmatprep.mubr.bf16.mxu0 0
          %717 = vmatmul.mubr.bf16.gmra.mrb[0].mxu0 %v672
          %v718 = vpop.f32.mrb[0].mxu0
          %v719 = vadd.f32 %v621, %v718
          %v720 = vpop.f32.mrb[0].mxu0
          %v721 = vadd.f32 %v625, %v720
          %v722 = vpop.f32.mrb[0].mxu0
          %v723 = vadd.f32 %v621, %v722
          %v724 = vpop.f32.mrb[0].mxu0
          %v725 = vadd.f32 %v625, %v724
          %726 = vdwg.mxu0
          %v727 = vpack.c.bf16 %v713, %v709
          %v728 = vpack.c.bf16 %v715, %v711
          %v729 = vpack.c.bf16 %v723, %v719
          %v730 = vpack.c.bf16 %v725, %v721
          %v731 = vlaneseq
          %v732 = vand.u32 %v731, 127
          %vm733 = vcmp.lt.s32.totalorder %v732, 12
          %v734 = vsel %vm733, 0.0, -1e+30
          %736 = vrot.lane.b32.xlu0 %v727, 64
          %v737 = vpop.permute.xlu0 %736
          %vm738 = vcmask 130048
          %v740 = vsel %vm738, %v727, 0
          %v743 = vsel %vm738, %v737, 0
          %745 = vmatprep.subr.bf16.mxu0 0
          %746 = vmatpush1.bf16.xpose.msra.mxu0 %v743
          %747 = vmatprep.subr.bf16.mxu0 0
          %748 = vmatpush1.bf16.xpose.msra.mxu0 0
          %749 = vmatprep.subr.bf16.mxu0 0
          %750 = vmatpush1.bf16.xpose.msra.mxu0 0
          %751 = vmatprep.subr.bf16.mxu0 0
          %752 = vmatpush1.bf16.xpose.msra.mxu0 0
          %753 = vmatprep.subr.bf16.mxu0 0
          %754 = vmatpush1.bf16.xpose.msra.mxu0 0
          %755 = vmatprep.subr.bf16.mxu0 0
          %756 = vmatpush1.bf16.xpose.msra.mxu0 0
          %757 = vmatprep.subr.bf16.mxu0 0
          %758 = vmatpush1.bf16.xpose.msra.mxu0 0
          %759 = vmatprep.subr.bf16.mxu0 0
          %760 = vmatpush1.bf16.xpose.msra.mxu0 0
          %761 = vmatprep.subr.bf16.mxu0 0
          %762 = vmatpush1.bf16.xpose.msra.mxu0 0
          %763 = vmatprep.subr.bf16.mxu0 0
          %764 = vmatpush1.bf16.xpose.msra.mxu0 0
          %765 = vmatprep.subr.bf16.mxu0 0
          %766 = vmatpush1.bf16.xpose.msra.mxu0 0
          %767 = vmatprep.subr.bf16.mxu0 0
          %768 = vmatpush1.bf16.xpose.msra.mxu0 0
          %769 = vmatprep.subr.bf16.mxu0 0
          %770 = vmatpush1.bf16.xpose.msra.mxu0 0
          %771 = vmatprep.subr.bf16.mxu0 0
          %772 = vmatpush1.bf16.xpose.msra.mxu0 0
          %773 = vmatprep.subr.bf16.mxu0 0
          %774 = vmatpush1.bf16.xpose.msra.mxu0 0
          %775 = vmatprep.subr.bf16.mxu0 0
          %776 = vmatpush1.bf16.xpose.msra.mxu0 0
          %777 = vmatprep.mubr.bf16.mxu0 0
          %778 = vmatmul.mubr.bf16.gmra.mrb[0].mxu0 %v740
          %v779 = vpop.f32.mrb[0].mxu0
          %v780 = vadd.f32 0.0, %v779
          %v781 = vpop.f32.mrb[0].mxu0
          %v782 = vpop.f32.mrb[0].mxu0
          %v783 = vadd.f32 0.0, %v782
          %v784 = vpop.f32.mrb[0].mxu0
          %785 = vdwg.mxu0
          %v786 = vmul.f32 %v780, 0.25
          %v787 = vmul.f32 %v783, 0.25
          %v788 = vadd.f32 %v786, %v734
          %v789 = vadd.f32 %v787, %v734
          %v790 = vsel %vm738, %v788, -inf
          %791 = vmax.xlane.f32.xlu0 %v790
          %v792 = vpop.xlane.xlu0 %791
          %v793 = vsel %vm738, %v789, -inf
          %794 = vmax.xlane.f32.xlu0 %v793
          %v795 = vpop.xlane.xlu0 %794
          %v796 = vsub.f32 %v788, %v792
          %v797 = vsub.f32 %v789, %v795
          %v798 = vmul.f32 %v796, 1.442695
          %v799 = vpow.pop %v798
          %v800 = vmul.f32 %v797, 1.442695
          %v801 = vpow.pop %v800
          %v802 = vsel %vm738, %v799, 0.0
          %803 = vadd.xlane.f32.xlu0 %v802
          %v804 = vpop.xlane.xlu0 %803
          %v805 = vsel %vm738, %v801, 0.0
          %806 = vadd.xlane.f32.xlu0 %v805
          %v807 = vpop.xlane.xlu0 %806
          %v808 = vrcp.pop %v804
          %v809 = vrcp.pop %v807
          %v810 = vmul.f32 %v799, %v808
          %v811 = vmul.f32 %v801, %v809
          %v812 = vpack.c.bf16 %v811, %v810
          %v814 = vsel %vm738, %v812, 0
          %816 = vmatprep.subr.bf16.mxu0 0
          %817 = vmatpush1.bf16.msra.mxu0 %v728
          %818 = vmatprep.subr.bf16.mxu0 0
          %819 = vmatpush1.bf16.msra.mxu0 0
          %820 = vmatprep.subr.bf16.mxu0 0
          %821 = vmatpush1.bf16.msra.mxu0 0
          %822 = vmatprep.subr.bf16.mxu0 0
          %823 = vmatpush1.bf16.msra.mxu0 0
          %824 = vmatprep.subr.bf16.mxu0 0
          %825 = vmatpush1.bf16.msra.mxu0 0
          %826 = vmatprep.subr.bf16.mxu0 0
          %827 = vmatpush1.bf16.msra.mxu0 0
          %828 = vmatprep.subr.bf16.mxu0 0
          %829 = vmatpush1.bf16.msra.mxu0 0
          %830 = vmatprep.subr.bf16.mxu0 0
          %831 = vmatpush1.bf16.msra.mxu0 0
          %832 = vmatprep.subr.bf16.mxu0 0
          %833 = vmatpush1.bf16.msra.mxu0 0
          %834 = vmatprep.subr.bf16.mxu0 0
          %835 = vmatpush1.bf16.msra.mxu0 0
          %836 = vmatprep.subr.bf16.mxu0 0
          %837 = vmatpush1.bf16.msra.mxu0 0
          %838 = vmatprep.subr.bf16.mxu0 0
          %839 = vmatpush1.bf16.msra.mxu0 0
          %840 = vmatprep.subr.bf16.mxu0 0
          %841 = vmatpush1.bf16.msra.mxu0 0
          %842 = vmatprep.subr.bf16.mxu0 0
          %843 = vmatpush1.bf16.msra.mxu0 0
          %844 = vmatprep.subr.bf16.mxu0 0
          %845 = vmatpush1.bf16.msra.mxu0 0
          %846 = vmatprep.subr.bf16.mxu0 0
          %847 = vmatpush1.bf16.msra.mxu0 0
          %848 = vmatprep.mubr.bf16.mxu0 0
          %849 = vmatmul.mubr.bf16.gmra.mrb[0].mxu0 %v814
          %v850 = vpop.f32.mrb[0].mxu0
          %v851 = vadd.f32 0.0, %v850
          %v852 = vpop.f32.mrb[0].mxu0
          %v853 = vpop.f32.mrb[0].mxu0
          %v854 = vadd.f32 0.0, %v853
          %v855 = vpop.f32.mrb[0].mxu0
          %856 = vdwg.mxu0
          %857 = vrot.lane.b32.xlu0 %v727, 112
          %v858 = vpop.permute.xlu0 %857
          %859 = vrot.lane.b32.xlu0 %v727, 48
          %v860 = vpop.permute.xlu0 %859
          %v862 = vsel %vm738, %v858, 0
          %v865 = vsel %vm738, %v860, 0
          %867 = vmatprep.subr.bf16.mxu0 0
          %868 = vmatpush1.bf16.xpose.msra.mxu0 %v865
          %869 = vmatprep.subr.bf16.mxu0 0
          %870 = vmatpush1.bf16.xpose.msra.mxu0 0
          %871 = vmatprep.subr.bf16.mxu0 0
          %872 = vmatpush1.bf16.xpose.msra.mxu0 0
          %873 = vmatprep.subr.bf16.mxu0 0
          %874 = vmatpush1.bf16.xpose.msra.mxu0 0
          %875 = vmatprep.subr.bf16.mxu0 0
          %876 = vmatpush1.bf16.xpose.msra.mxu0 0
          %877 = vmatprep.subr.bf16.mxu0 0
          %878 = vmatpush1.bf16.xpose.msra.mxu0 0
          %879 = vmatprep.subr.bf16.mxu0 0
          %880 = vmatpush1.bf16.xpose.msra.mxu0 0
          %881 = vmatprep.subr.bf16.mxu0 0
          %882 = vmatpush1.bf16.xpose.msra.mxu0 0
          %883 = vmatprep.subr.bf16.mxu0 0
          %884 = vmatpush1.bf16.xpose.msra.mxu0 0
          %885 = vmatprep.subr.bf16.mxu0 0
          %886 = vmatpush1.bf16.xpose.msra.mxu0 0
          %887 = vmatprep.subr.bf16.mxu0 0
          %888 = vmatpush1.bf16.xpose.msra.mxu0 0
          %889 = vmatprep.subr.bf16.mxu0 0
          %890 = vmatpush1.bf16.xpose.msra.mxu0 0
          %891 = vmatprep.subr.bf16.mxu0 0
          %892 = vmatpush1.bf16.xpose.msra.mxu0 0
          %893 = vmatprep.subr.bf16.mxu0 0
          %894 = vmatpush1.bf16.xpose.msra.mxu0 0
          %895 = vmatprep.subr.bf16.mxu0 0
          %896 = vmatpush1.bf16.xpose.msra.mxu0 0
          %897 = vmatprep.subr.bf16.mxu0 0
          %898 = vmatpush1.bf16.xpose.msra.mxu0 0
          %899 = vmatprep.mubr.bf16.mxu0 0
          %900 = vmatmul.mubr.bf16.gmra.mrb[0].mxu0 %v862
          %v901 = vpop.f32.mrb[0].mxu0
          %v902 = vadd.f32 0.0, %v901
          %v903 = vpop.f32.mrb[0].mxu0
          %v904 = vpop.f32.mrb[0].mxu0
          %v905 = vadd.f32 0.0, %v904
          %v906 = vpop.f32.mrb[0].mxu0
          %907 = vdwg.mxu0
          %v908 = vmul.f32 %v902, 0.25
          %v909 = vmul.f32 %v905, 0.25
          %v910 = vadd.f32 %v908, %v734
          %v911 = vadd.f32 %v909, %v734
          %v912 = vsel %vm738, %v910, -inf
          %913 = vmax.xlane.f32.xlu0 %v912
          %v914 = vpop.xlane.xlu0 %913
          %v915 = vsel %vm738, %v911, -inf
          %916 = vmax.xlane.f32.xlu0 %v915
          %v917 = vpop.xlane.xlu0 %916
          %v918 = vsub.f32 %v910, %v914
          %v919 = vsub.f32 %v911, %v917
          %v920 = vmul.f32 %v918, 1.442695
          %v921 = vpow.pop %v920
          %v922 = vmul.f32 %v919, 1.442695
          %v923 = vpow.pop %v922
          %v924 = vsel %vm738, %v921, 0.0
          %925 = vadd.xlane.f32.xlu0 %v924
          %v926 = vpop.xlane.xlu0 %925
          %v927 = vsel %vm738, %v923, 0.0
          %928 = vadd.xlane.f32.xlu0 %v927
          %v929 = vpop.xlane.xlu0 %928
          %v930 = vrcp.pop %v926
          %v931 = vrcp.pop %v929
          %v932 = vmul.f32 %v921, %v930
          %v933 = vmul.f32 %v923, %v931
          %v934 = vpack.c.bf16 %v933, %v932
          %936 = vrot.lane.b32.xlu0 %v728, 112
          %v937 = vpop.permute.xlu0 %936
          %v940 = vsel %vm738, %v934, 0
          %942 = vmatprep.subr.bf16.mxu0 0
          %943 = vmatpush1.bf16.msra.mxu0 %v937
          %944 = vmatprep.subr.bf16.mxu0 0
          %945 = vmatpush1.bf16.msra.mxu0 0
          %946 = vmatprep.subr.bf16.mxu0 0
          %947 = vmatpush1.bf16.msra.mxu0 0
          %948 = vmatprep.subr.bf16.mxu0 0
          %949 = vmatpush1.bf16.msra.mxu0 0
          %950 = vmatprep.subr.bf16.mxu0 0
          %951 = vmatpush1.bf16.msra.mxu0 0
          %952 = vmatprep.subr.bf16.mxu0 0
          %953 = vmatpush1.bf16.msra.mxu0 0
          %954 = vmatprep.subr.bf16.mxu0 0
          %955 = vmatpush1.bf16.msra.mxu0 0
          %956 = vmatprep.subr.bf16.mxu0 0
          %957 = vmatpush1.bf16.msra.mxu0 0
          %958 = vmatprep.subr.bf16.mxu0 0
          %959 = vmatpush1.bf16.msra.mxu0 0
          %960 = vmatprep.subr.bf16.mxu0 0
          %961 = vmatpush1.bf16.msra.mxu0 0
          %962 = vmatprep.subr.bf16.mxu0 0
          %963 = vmatpush1.bf16.msra.mxu0 0
          %964 = vmatprep.subr.bf16.mxu0 0
          %965 = vmatpush1.bf16.msra.mxu0 0
          %966 = vmatprep.subr.bf16.mxu0 0
          %967 = vmatpush1.bf16.msra.mxu0 0
          %968 = vmatprep.subr.bf16.mxu0 0
          %969 = vmatpush1.bf16.msra.mxu0 0
          %970 = vmatprep.subr.bf16.mxu0 0
          %971 = vmatpush1.bf16.msra.mxu0 0
          %972 = vmatprep.subr.bf16.mxu0 0
          %973 = vmatpush1.bf16.msra.mxu0 0
          %974 = vmatprep.mubr.bf16.mxu0 0
          %975 = vmatmul.mubr.bf16.gmra.mrb[0].mxu0 %v940
          %v976 = vpop.f32.mrb[0].mxu0
          %v977 = vadd.f32 0.0, %v976
          %v978 = vpop.f32.mrb[0].mxu0
          %v979 = vpop.f32.mrb[0].mxu0
          %v980 = vadd.f32 0.0, %v979
          %v981 = vpop.f32.mrb[0].mxu0
          %982 = vdwg.mxu0
          %983 = vrot.lane.b32.xlu0 %v727, 96
          %v984 = vpop.permute.xlu0 %983
          %985 = vrot.lane.b32.xlu0 %v727, 32
          %v986 = vpop.permute.xlu0 %985
          %v988 = vsel %vm738, %v984, 0
          %v991 = vsel %vm738, %v986, 0
          %993 = vmatprep.subr.bf16.mxu0 0
          %994 = vmatpush1.bf16.xpose.msra.mxu0 %v991
          %995 = vmatprep.subr.bf16.mxu0 0
          %996 = vmatpush1.bf16.xpose.msra.mxu0 0
          %997 = vmatprep.subr.bf16.mxu0 0
          %998 = vmatpush1.bf16.xpose.msra.mxu0 0
          %999 = vmatprep.subr.bf16.mxu0 0
          %1000 = vmatpush1.bf16.xpose.msra.mxu0 0
          %1001 = vmatprep.subr.bf16.mxu0 0
          %1002 = vmatpush1.bf16.xpose.msra.mxu0 0
          %1003 = vmatprep.subr.bf16.mxu0 0
          %1004 = vmatpush1.bf16.xpose.msra.mxu0 0
          %1005 = vmatprep.subr.bf16.mxu0 0
          %1006 = vmatpush1.bf16.xpose.msra.mxu0 0
          %1007 = vmatprep.subr.bf16.mxu0 0
          %1008 = vmatpush1.bf16.xpose.msra.mxu0 0
          %1009 = vmatprep.subr.bf16.mxu0 0
          %1010 = vmatpush1.bf16.xpose.msra.mxu0 0
          %1011 = vmatprep.subr.bf16.mxu0 0
          %1012 = vmatpush1.bf16.xpose.msra.mxu0 0
          %1013 = vmatprep.subr.bf16.mxu0 0
          %1014 = vmatpush1.bf16.xpose.msra.mxu0 0
          %1015 = vmatprep.subr.bf16.mxu0 0
          %1016 = vmatpush1.bf16.xpose.msra.mxu0 0
          %1017 = vmatprep.subr.bf16.mxu0 0
          %1018 = vmatpush1.bf16.xpose.msra.mxu0 0
          %1019 = vmatprep.subr.bf16.mxu0 0
          %1020 = vmatpush1.bf16.xpose.msra.mxu0 0
          %1021 = vmatprep.subr.bf16.mxu0 0
          %1022 = vmatpush1.bf16.xpose.msra.mxu0 0
          %1023 = vmatprep.subr.bf16.mxu0 0
          %1024 = vmatpush1.bf16.xpose.msra.mxu0 0
          %1025 = vmatprep.mubr.bf16.mxu0 0
          %1026 = vmatmul.mubr.bf16.gmra.mrb[0].mxu0 %v988
          %v1027 = vpop.f32.mrb[0].mxu0
          %v1028 = vadd.f32 0.0, %v1027
          %v1029 = vpop.f32.mrb[0].mxu0
          %v1030 = vpop.f32.mrb[0].mxu0
          %v1031 = vadd.f32 0.0, %v1030
          %v1032 = vpop.f32.mrb[0].mxu0
          %1033 = vdwg.mxu0
          %v1034 = vmul.f32 %v1028, 0.25
          %v1035 = vmul.f32 %v1031, 0.25
          %v1036 = vadd.f32 %v1034, %v734
          %v1037 = vadd.f32 %v1035, %v734
          %v1038 = vsel %vm738, %v1036, -inf
          %1039 = vmax.xlane.f32.xlu0 %v1038
          %v1040 = vpop.xlane.xlu0 %1039
          %v1041 = vsel %vm738, %v1037, -inf
          %1042 = vmax.xlane.f32.xlu0 %v1041
          %v1043 = vpop.xlane.xlu0 %1042
          %v1044 = vsub.f32 %v1036, %v1040
          %v1045 = vsub.f32 %v1037, %v1043
          %v1046 = vmul.f32 %v1044, 1.442695
          %v1047 = vpow.pop %v1046
          %v1048 = vmul.f32 %v1045, 1.442695
          %v1049 = vpow.pop %v1048
          %v1050 = vsel %vm738, %v1047, 0.0
          %1051 = vadd.xlane.f32.xlu0 %v1050
          %v1052 = vpop.xlane.xlu0 %1051
          %v1053 = vsel %vm738, %v1049, 0.0
          %1054 = vadd.xlane.f32.xlu0 %v1053
          %v1055 = vpop.xlane.xlu0 %1054
          %v1056 = vrcp.pop %v1052
          %v1057 = vrcp.pop %v1055
          %v1058 = vmul.f32 %v1047, %v1056
          %v1059 = vmul.f32 %v1049, %v1057
          %v1060 = vpack.c.bf16 %v1059, %v1058
          %1061 = vrot.lane.b32.xlu0 %v728, 96
          %v1062 = vpop.permute.xlu0 %1061
          %v1065 = vsel %vm738, %v1060, 0
          %1067 = vmatprep.subr.bf16.mxu0 0
          %1068 = vmatpush1.bf16.msra.mxu0 %v1062
          %1069 = vmatprep.subr.bf16.mxu0 0
          %1070 = vmatpush1.bf16.msra.mxu0 0
          %1071 = vmatprep.subr.bf16.mxu0 0
          %1072 = vmatpush1.bf16.msra.mxu0 0
          %1073 = vmatprep.subr.bf16.mxu0 0
          %1074 = vmatpush1.bf16.msra.mxu0 0
          %1075 = vmatprep.subr.bf16.mxu0 0
          %1076 = vmatpush1.bf16.msra.mxu0 0
          %1077 = vmatprep.subr.bf16.mxu0 0
          %1078 = vmatpush1.bf16.msra.mxu0 0
          %1079 = vmatprep.subr.bf16.mxu0 0
          %1080 = vmatpush1.bf16.msra.mxu0 0
          %1081 = vmatprep.subr.bf16.mxu0 0
          %1082 = vmatpush1.bf16.msra.mxu0 0
          %1083 = vmatprep.subr.bf16.mxu0 0
          %1084 = vmatpush1.bf16.msra.mxu0 0
          %1085 = vmatprep.subr.bf16.mxu0 0
          %1086 = vmatpush1.bf16.msra.mxu0 0
          %1087 = vmatprep.subr.bf16.mxu0 0
          %1088 = vmatpush1.bf16.msra.mxu0 0
          %1089 = vmatprep.subr.bf16.mxu0 0
          %1090 = vmatpush1.bf16.msra.mxu0 0
          %1091 = vmatprep.subr.bf16.mxu0 0
          %1092 = vmatpush1.bf16.msra.mxu0 0
          %1093 = vmatprep.subr.bf16.mxu0 0
          %1094 = vmatpush1.bf16.msra.mxu0 0
          %1095 = vmatprep.subr.bf16.mxu0 0
          %1096 = vmatpush1.bf16.msra.mxu0 0
          %1097 = vmatprep.subr.bf16.mxu0 0
          %1098 = vmatpush1.bf16.msra.mxu0 0
          %1099 = vmatprep.mubr.bf16.mxu0 0
          %1100 = vmatmul.mubr.bf16.gmra.mrb[0].mxu0 %v1065
          %v1101 = vpop.f32.mrb[0].mxu0
          %v1102 = vadd.f32 0.0, %v1101
          %v1103 = vpop.f32.mrb[0].mxu0
          %v1104 = vpop.f32.mrb[0].mxu0
          %v1105 = vadd.f32 0.0, %v1104
          %v1106 = vpop.f32.mrb[0].mxu0
          %1107 = vdwg.mxu0
          %1108 = vrot.lane.b32.xlu0 %v727, 80
          %v1109 = vpop.permute.xlu0 %1108
          %1110 = vrot.lane.b32.xlu0 %v727, 16
          %v1111 = vpop.permute.xlu0 %1110
          %v1113 = vsel %vm738, %v1109, 0
          %v1116 = vsel %vm738, %v1111, 0
          %1118 = vmatprep.subr.bf16.mxu0 0
          %1119 = vmatpush1.bf16.xpose.msra.mxu0 %v1116
          %1120 = vmatprep.subr.bf16.mxu0 0
          %1121 = vmatpush1.bf16.xpose.msra.mxu0 0
          %1122 = vmatprep.subr.bf16.mxu0 0
          %1123 = vmatpush1.bf16.xpose.msra.mxu0 0
          %1124 = vmatprep.subr.bf16.mxu0 0
          %1125 = vmatpush1.bf16.xpose.msra.mxu0 0
          %1126 = vmatprep.subr.bf16.mxu0 0
          %1127 = vmatpush1.bf16.xpose.msra.mxu0 0
          %1128 = vmatprep.subr.bf16.mxu0 0
          %1129 = vmatpush1.bf16.xpose.msra.mxu0 0
          %1130 = vmatprep.subr.bf16.mxu0 0
          %1131 = vmatpush1.bf16.xpose.msra.mxu0 0
          %1132 = vmatprep.subr.bf16.mxu0 0
          %1133 = vmatpush1.bf16.xpose.msra.mxu0 0
          %1134 = vmatprep.subr.bf16.mxu0 0
          %1135 = vmatpush1.bf16.xpose.msra.mxu0 0
          %1136 = vmatprep.subr.bf16.mxu0 0
          %1137 = vmatpush1.bf16.xpose.msra.mxu0 0
          %1138 = vmatprep.subr.bf16.mxu0 0
          %1139 = vmatpush1.bf16.xpose.msra.mxu0 0
          %1140 = vmatprep.subr.bf16.mxu0 0
          %1141 = vmatpush1.bf16.xpose.msra.mxu0 0
          %1142 = vmatprep.subr.bf16.mxu0 0
          %1143 = vmatpush1.bf16.xpose.msra.mxu0 0
          %1144 = vmatprep.subr.bf16.mxu0 0
          %1145 = vmatpush1.bf16.xpose.msra.mxu0 0
          %1146 = vmatprep.subr.bf16.mxu0 0
          %1147 = vmatpush1.bf16.xpose.msra.mxu0 0
          %1148 = vmatprep.subr.bf16.mxu0 0
          %1149 = vmatpush1.bf16.xpose.msra.mxu0 0
          %1150 = vmatprep.mubr.bf16.mxu0 0
          %1151 = vmatmul.mubr.bf16.gmra.mrb[0].mxu0 %v1113
          %v1152 = vpop.f32.mrb[0].mxu0
          %v1153 = vadd.f32 0.0, %v1152
          %v1154 = vpop.f32.mrb[0].mxu0
          %v1155 = vpop.f32.mrb[0].mxu0
          %v1156 = vadd.f32 0.0, %v1155
          %v1157 = vpop.f32.mrb[0].mxu0
          %1158 = vdwg.mxu0
          %v1159 = vmul.f32 %v1153, 0.25
          %v1160 = vmul.f32 %v1156, 0.25
          %v1161 = vadd.f32 %v1159, %v734
          %v1162 = vadd.f32 %v1160, %v734
          %v1163 = vsel %vm738, %v1161, -inf
          %1164 = vmax.xlane.f32.xlu0 %v1163
          %v1165 = vpop.xlane.xlu0 %1164
          %v1166 = vsel %vm738, %v1162, -inf
          %1167 = vmax.xlane.f32.xlu0 %v1166
          %v1168 = vpop.xlane.xlu0 %1167
          %v1169 = vsub.f32 %v1161, %v1165
          %v1170 = vsub.f32 %v1162, %v1168
          %v1171 = vmul.f32 %v1169, 1.442695
          %v1172 = vpow.pop %v1171
          %v1173 = vmul.f32 %v1170, 1.442695
          %v1174 = vpow.pop %v1173
          %v1175 = vsel %vm738, %v1172, 0.0
          %1176 = vadd.xlane.f32.xlu0 %v1175
          %v1177 = vpop.xlane.xlu0 %1176
          %v1178 = vsel %vm738, %v1174, 0.0
          %1179 = vadd.xlane.f32.xlu0 %v1178
          %v1180 = vpop.xlane.xlu0 %1179
          %v1181 = vrcp.pop %v1177
          %v1182 = vrcp.pop %v1180
          %v1183 = vmul.f32 %v1172, %v1181
          %v1184 = vmul.f32 %v1174, %v1182
          %v1185 = vpack.c.bf16 %v1184, %v1183
          %1186 = vrot.lane.b32.xlu0 %v728, 80
          %v1187 = vpop.permute.xlu0 %1186
          %v1190 = vsel %vm738, %v1185, 0
          %1192 = vmatprep.subr.bf16.mxu0 0
          %1193 = vmatpush1.bf16.msra.mxu0 %v1187
          %1194 = vmatprep.subr.bf16.mxu0 0
          %1195 = vmatpush1.bf16.msra.mxu0 0
          %1196 = vmatprep.subr.bf16.mxu0 0
          %1197 = vmatpush1.bf16.msra.mxu0 0
          %1198 = vmatprep.subr.bf16.mxu0 0
          %1199 = vmatpush1.bf16.msra.mxu0 0
          %1200 = vmatprep.subr.bf16.mxu0 0
          %1201 = vmatpush1.bf16.msra.mxu0 0
          %1202 = vmatprep.subr.bf16.mxu0 0
          %1203 = vmatpush1.bf16.msra.mxu0 0
          %1204 = vmatprep.subr.bf16.mxu0 0
          %1205 = vmatpush1.bf16.msra.mxu0 0
          %1206 = vmatprep.subr.bf16.mxu0 0
          %1207 = vmatpush1.bf16.msra.mxu0 0
          %1208 = vmatprep.subr.bf16.mxu0 0
          %1209 = vmatpush1.bf16.msra.mxu0 0
          %1210 = vmatprep.subr.bf16.mxu0 0
          %1211 = vmatpush1.bf16.msra.mxu0 0
          %1212 = vmatprep.subr.bf16.mxu0 0
          %1213 = vmatpush1.bf16.msra.mxu0 0
          %1214 = vmatprep.subr.bf16.mxu0 0
          %1215 = vmatpush1.bf16.msra.mxu0 0
          %1216 = vmatprep.subr.bf16.mxu0 0
          %1217 = vmatpush1.bf16.msra.mxu0 0
          %1218 = vmatprep.subr.bf16.mxu0 0
          %1219 = vmatpush1.bf16.msra.mxu0 0
          %1220 = vmatprep.subr.bf16.mxu0 0
          %1221 = vmatpush1.bf16.msra.mxu0 0
          %1222 = vmatprep.subr.bf16.mxu0 0
          %1223 = vmatpush1.bf16.msra.mxu0 0
          %1224 = vmatprep.mubr.bf16.mxu0 0
          %1225 = vmatmul.mubr.bf16.gmra.mrb[0].mxu0 %v1190
          %v1226 = vpop.f32.mrb[0].mxu0
          %v1227 = vadd.f32 0.0, %v1226
          %v1228 = vpop.f32.mrb[0].mxu0
          %v1229 = vpop.f32.mrb[0].mxu0
          %v1230 = vadd.f32 0.0, %v1229
          %v1231 = vpop.f32.mrb[0].mxu0
          %1232 = vdwg.mxu0
          %1235 = vrot.lane.b32.xlu0 %v977, 16
          %v1236 = vpop.permute.xlu0 %1235
          %1237 = vrot.lane.b32.xlu0 %v980, 16
          %v1238 = vpop.permute.xlu0 %1237
          %1243 = vrot.lane.b32.xlu0 %v1102, 32
          %v1244 = vpop.permute.xlu0 %1243
          %1245 = vrot.lane.b32.xlu0 %v1105, 32
          %v1246 = vpop.permute.xlu0 %1245
          %1251 = vrot.lane.b32.xlu0 %v1227, 48
          %v1252 = vpop.permute.xlu0 %1251
          %1253 = vrot.lane.b32.xlu0 %v1230, 48
          %v1254 = vpop.permute.xlu0 %1253
          %v1257 = vsel %vm738, %v851, %v1236
          %v1258 = vsel %vm738, %v854, %v1238
          %vm1259 = vcmask 261120
          %v1260 = vsel %vm1259, %v1257, %v1244
          %v1261 = vsel %vm1259, %v1258, %v1246
          %vm1262 = vcmask 392192
          %v1263 = vsel %vm1262, %v1260, %v1252
          %v1264 = vsel %vm1262, %v1261, %v1254
          %1265 = vst.msk [vmem:[#allocation2] sm:$0xff] %vm530, %v1263
          %1266 = vst.msk [vmem:[#allocation2 + $0x8] sm:$0xff] %vm530, %v1264
          %1268 = vrot.lane.b32.xlu0 %v729, 64
          %v1269 = vpop.permute.xlu0 %1268
          %v1271 = vsel %vm738, %v729, 0
          %v1274 = vsel %vm738, %v1269, 0
          %1276 = vmatprep.subr.bf16.mxu0 0
          %1277 = vmatpush1.bf16.xpose.msra.mxu0 %v1274
          %1278 = vmatprep.subr.bf16.mxu0 0
          %1279 = vmatpush1.bf16.xpose.msra.mxu0 0
          %1280 = vmatprep.subr.bf16.mxu0 0
          %1281 = vmatpush1.bf16.xpose.msra.mxu0 0
          %1282 = vmatprep.subr.bf16.mxu0 0
          %1283 = vmatpush1.bf16.xpose.msra.mxu0 0
          %1284 = vmatprep.subr.bf16.mxu0 0
          %1285 = vmatpush1.bf16.xpose.msra.mxu0 0
          %1286 = vmatprep.subr.bf16.mxu0 0
          %1287 = vmatpush1.bf16.xpose.msra.mxu0 0
          %1288 = vmatprep.subr.bf16.mxu0 0
          %1289 = vmatpush1.bf16.xpose.msra.mxu0 0
          %1290 = vmatprep.subr.bf16.mxu0 0
          %1291 = vmatpush1.bf16.xpose.msra.mxu0 0
          %1292 = vmatprep.subr.bf16.mxu0 0
          %1293 = vmatpush1.bf16.xpose.msra.mxu0 0
          %1294 = vmatprep.subr.bf16.mxu0 0
          %1295 = vmatpush1.bf16.xpose.msra.mxu0 0
          %1296 = vmatprep.subr.bf16.mxu0 0
          %1297 = vmatpush1.bf16.xpose.msra.mxu0 0
          %1298 = vmatprep.subr.bf16.mxu0 0
          %1299 = vmatpush1.bf16.xpose.msra.mxu0 0
          %1300 = vmatprep.subr.bf16.mxu0 0
          %1301 = vmatpush1.bf16.xpose.msra.mxu0 0
          %1302 = vmatprep.subr.bf16.mxu0 0
          %1303 = vmatpush1.bf16.xpose.msra.mxu0 0
          %1304 = vmatprep.subr.bf16.mxu0 0
          %1305 = vmatpush1.bf16.xpose.msra.mxu0 0
          %1306 = vmatprep.subr.bf16.mxu0 0
          %1307 = vmatpush1.bf16.xpose.msra.mxu0 0
          %1308 = vmatprep.mubr.bf16.mxu0 0
          %1309 = vmatmul.mubr.bf16.gmra.mrb[0].mxu0 %v1271
          %v1310 = vpop.f32.mrb[0].mxu0
          %v1311 = vadd.f32 0.0, %v1310
          %v1312 = vpop.f32.mrb[0].mxu0
          %v1313 = vpop.f32.mrb[0].mxu0
          %v1314 = vadd.f32 0.0, %v1313
          %v1315 = vpop.f32.mrb[0].mxu0
          %1316 = vdwg.mxu0
          %v1317 = vmul.f32 %v1311, 0.25
          %v1318 = vmul.f32 %v1314, 0.25
          %v1319 = vadd.f32 %v1317, %v734
          %v1320 = vadd.f32 %v1318, %v734
          %v1321 = vsel %vm738, %v1319, -inf
          %1322 = vmax.xlane.f32.xlu0 %v1321
          %v1323 = vpop.xlane.xlu0 %1322
          %v1324 = vsel %vm738, %v1320, -inf
          %1325 = vmax.xlane.f32.xlu0 %v1324
          %v1326 = vpop.xlane.xlu0 %1325
          %v1327 = vsub.f32 %v1319, %v1323
          %v1328 = vsub.f32 %v1320, %v1326
          %v1329 = vmul.f32 %v1327, 1.442695
          %v1330 = vpow.pop %v1329
          %v1331 = vmul.f32 %v1328, 1.442695
          %v1332 = vpow.pop %v1331
          %v1333 = vsel %vm738, %v1330, 0.0
          %1334 = vadd.xlane.f32.xlu0 %v1333
          %v1335 = vpop.xlane.xlu0 %1334
          %v1336 = vsel %vm738, %v1332, 0.0
          %1337 = vadd.xlane.f32.xlu0 %v1336
          %v1338 = vpop.xlane.xlu0 %1337
          %v1339 = vrcp.pop %v1335
          %v1340 = vrcp.pop %v1338
          %v1341 = vmul.f32 %v1330, %v1339
          %v1342 = vmul.f32 %v1332, %v1340
          %v1343 = vpack.c.bf16 %v1342, %v1341
          %v1345 = vsel %vm738, %v1343, 0
          %1347 = vmatprep.subr.bf16.mxu0 0
          %1348 = vmatpush1.bf16.msra.mxu0 %v730
          %1349 = vmatprep.subr.bf16.mxu0 0
          %1350 = vmatpush1.bf16.msra.mxu0 0
          %1351 = vmatprep.subr.bf16.mxu0 0
          %1352 = vmatpush1.bf16.msra.mxu0 0
          %1353 = vmatprep.subr.bf16.mxu0 0
          %1354 = vmatpush1.bf16.msra.mxu0 0
          %1355 = vmatprep.subr.bf16.mxu0 0
          %1356 = vmatpush1.bf16.msra.mxu0 0
          %1357 = vmatprep.subr.bf16.mxu0 0
          %1358 = vmatpush1.bf16.msra.mxu0 0
          %1359 = vmatprep.subr.bf16.mxu0 0
          %1360 = vmatpush1.bf16.msra.mxu0 0
          %1361 = vmatprep.subr.bf16.mxu0 0
          %1362 = vmatpush1.bf16.msra.mxu0 0
          %1363 = vmatprep.subr.bf16.mxu0 0
          %1364 = vmatpush1.bf16.msra.mxu0 0
          %1365 = vmatprep.subr.bf16.mxu0 0
          %1366 = vmatpush1.bf16.msra.mxu0 0
          %1367 = vmatprep.subr.bf16.mxu0 0
          %1368 = vmatpush1.bf16.msra.mxu0 0
          %1369 = vmatprep.subr.bf16.mxu0 0
          %1370 = vmatpush1.bf16.msra.mxu0 0
          %1371 = vmatprep.subr.bf16.mxu0 0
          %1372 = vmatpush1.bf16.msra.mxu0 0
          %1373 = vmatprep.subr.bf16.mxu0 0
          %1374 = vmatpush1.bf16.msra.mxu0 0
          %1375 = vmatprep.subr.bf16.mxu0 0
          %1376 = vmatpush1.bf16.msra.mxu0 0
          %1377 = vmatprep.subr.bf16.mxu0 0
          %1378 = vmatpush1.bf16.msra.mxu0 0
          %1379 = vmatprep.mubr.bf16.mxu0 0
          %1380 = vmatmul.mubr.bf16.gmra.mrb[0].mxu0 %v1345
          %v1381 = vpop.f32.mrb[0].mxu0
          %v1382 = vadd.f32 0.0, %v1381
          %v1383 = vpop.f32.mrb[0].mxu0
          %v1384 = vpop.f32.mrb[0].mxu0
          %v1385 = vadd.f32 0.0, %v1384
          %v1386 = vpop.f32.mrb[0].mxu0
          %1387 = vdwg.mxu0
          %1388 = vrot.lane.b32.xlu0 %v729, 112
          %v1389 = vpop.permute.xlu0 %1388
          %1390 = vrot.lane.b32.xlu0 %v729, 48
          %v1391 = vpop.permute.xlu0 %1390
          %v1393 = vsel %vm738, %v1389, 0
          %v1396 = vsel %vm738, %v1391, 0
          %1398 = vmatprep.subr.bf16.mxu0 0
          %1399 = vmatpush1.bf16.xpose.msra.mxu0 %v1396
          %1400 = vmatprep.subr.bf16.mxu0 0
          %1401 = vmatpush1.bf16.xpose.msra.mxu0 0
          %1402 = vmatprep.subr.bf16.mxu0 0
          %1403 = vmatpush1.bf16.xpose.msra.mxu0 0
          %1404 = vmatprep.subr.bf16.mxu0 0
          %1405 = vmatpush1.bf16.xpose.msra.mxu0 0
          %1406 = vmatprep.subr.bf16.mxu0 0
          %1407 = vmatpush1.bf16.xpose.msra.mxu0 0
          %1408 = vmatprep.subr.bf16.mxu0 0
          %1409 = vmatpush1.bf16.xpose.msra.mxu0 0
          %1410 = vmatprep.subr.bf16.mxu0 0
          %1411 = vmatpush1.bf16.xpose.msra.mxu0 0
          %1412 = vmatprep.subr.bf16.mxu0 0
          %1413 = vmatpush1.bf16.xpose.msra.mxu0 0
          %1414 = vmatprep.subr.bf16.mxu0 0
          %1415 = vmatpush1.bf16.xpose.msra.mxu0 0
          %1416 = vmatprep.subr.bf16.mxu0 0
          %1417 = vmatpush1.bf16.xpose.msra.mxu0 0
          %1418 = vmatprep.subr.bf16.mxu0 0
          %1419 = vmatpush1.bf16.xpose.msra.mxu0 0
          %1420 = vmatprep.subr.bf16.mxu0 0
          %1421 = vmatpush1.bf16.xpose.msra.mxu0 0
          %1422 = vmatprep.subr.bf16.mxu0 0
          %1423 = vmatpush1.bf16.xpose.msra.mxu0 0
          %1424 = vmatprep.subr.bf16.mxu0 0
          %1425 = vmatpush1.bf16.xpose.msra.mxu0 0
          %1426 = vmatprep.subr.bf16.mxu0 0
          %1427 = vmatpush1.bf16.xpose.msra.mxu0 0
          %1428 = vmatprep.subr.bf16.mxu0 0
          %1429 = vmatpush1.bf16.xpose.msra.mxu0 0
          %1430 = vmatprep.mubr.bf16.mxu0 0
          %1431 = vmatmul.mubr.bf16.gmra.mrb[0].mxu0 %v1393
          %v1432 = vpop.f32.mrb[0].mxu0
          %v1433 = vadd.f32 0.0, %v1432
          %v1434 = vpop.f32.mrb[0].mxu0
          %v1435 = vpop.f32.mrb[0].mxu0
          %v1436 = vadd.f32 0.0, %v1435
          %v1437 = vpop.f32.mrb[0].mxu0
          %1438 = vdwg.mxu0
          %v1439 = vmul.f32 %v1433, 0.25
          %v1440 = vmul.f32 %v1436, 0.25
          %v1441 = vadd.f32 %v1439, %v734
          %v1442 = vadd.f32 %v1440, %v734
          %v1443 = vsel %vm738, %v1441, -inf
          %1444 = vmax.xlane.f32.xlu0 %v1443
          %v1445 = vpop.xlane.xlu0 %1444
          %v1446 = vsel %vm738, %v1442, -inf
          %1447 = vmax.xlane.f32.xlu0 %v1446
          %v1448 = vpop.xlane.xlu0 %1447
          %v1449 = vsub.f32 %v1441, %v1445
          %v1450 = vsub.f32 %v1442, %v1448
          %v1451 = vmul.f32 %v1449, 1.442695
          %v1452 = vpow.pop %v1451
          %v1453 = vmul.f32 %v1450, 1.442695
          %v1454 = vpow.pop %v1453
          %v1455 = vsel %vm738, %v1452, 0.0
          %1456 = vadd.xlane.f32.xlu0 %v1455
          %v1457 = vpop.xlane.xlu0 %1456
          %v1458 = vsel %vm738, %v1454, 0.0
          %1459 = vadd.xlane.f32.xlu0 %v1458
          %v1460 = vpop.xlane.xlu0 %1459
          %v1461 = vrcp.pop %v1457
          %v1462 = vrcp.pop %v1460
          %v1463 = vmul.f32 %v1452, %v1461
          %v1464 = vmul.f32 %v1454, %v1462
          %v1465 = vpack.c.bf16 %v1464, %v1463
          %1467 = vrot.lane.b32.xlu0 %v730, 112
          %v1468 = vpop.permute.xlu0 %1467
          %v1471 = vsel %vm738, %v1465, 0
          %1473 = vmatprep.subr.bf16.mxu0 0
          %1474 = vmatpush1.bf16.msra.mxu0 %v1468
          %1475 = vmatprep.subr.bf16.mxu0 0
          %1476 = vmatpush1.bf16.msra.mxu0 0
          %1477 = vmatprep.subr.bf16.mxu0 0
          %1478 = vmatpush1.bf16.msra.mxu0 0
          %1479 = vmatprep.subr.bf16.mxu0 0
          %1480 = vmatpush1.bf16.msra.mxu0 0
          %1481 = vmatprep.subr.bf16.mxu0 0
          %1482 = vmatpush1.bf16.msra.mxu0 0
          %1483 = vmatprep.subr.bf16.mxu0 0
          %1484 = vmatpush1.bf16.msra.mxu0 0
          %1485 = vmatprep.subr.bf16.mxu0 0
          %1486 = vmatpush1.bf16.msra.mxu0 0
          %1487 = vmatprep.subr.bf16.mxu0 0
          %1488 = vmatpush1.bf16.msra.mxu0 0
          %1489 = vmatprep.subr.bf16.mxu0 0
          %1490 = vmatpush1.bf16.msra.mxu0 0
          %1491 = vmatprep.subr.bf16.mxu0 0
          %1492 = vmatpush1.bf16.msra.mxu0 0
          %1493 = vmatprep.subr.bf16.mxu0 0
          %1494 = vmatpush1.bf16.msra.mxu0 0
          %1495 = vmatprep.subr.bf16.mxu0 0
          %1496 = vmatpush1.bf16.msra.mxu0 0
          %1497 = vmatprep.subr.bf16.mxu0 0
          %1498 = vmatpush1.bf16.msra.mxu0 0
          %1499 = vmatprep.subr.bf16.mxu0 0
          %1500 = vmatpush1.bf16.msra.mxu0 0
          %1501 = vmatprep.subr.bf16.mxu0 0
          %1502 = vmatpush1.bf16.msra.mxu0 0
          %1503 = vmatprep.subr.bf16.mxu0 0
          %1504 = vmatpush1.bf16.msra.mxu0 0
          %1505 = vmatprep.mubr.bf16.mxu0 0
          %1506 = vmatmul.mubr.bf16.gmra.mrb[0].mxu0 %v1471
          %v1507 = vpop.f32.mrb[0].mxu0
          %v1508 = vadd.f32 0.0, %v1507
          %v1509 = vpop.f32.mrb[0].mxu0
          %v1510 = vpop.f32.mrb[0].mxu0
          %v1511 = vadd.f32 0.0, %v1510
          %v1512 = vpop.f32.mrb[0].mxu0
          %1513 = vdwg.mxu0
          %1514 = vrot.lane.b32.xlu0 %v729, 96
          %v1515 = vpop.permute.xlu0 %1514
          %1516 = vrot.lane.b32.xlu0 %v729, 32
          %v1517 = vpop.permute.xlu0 %1516
          %v1519 = vsel %vm738, %v1515, 0
          %v1522 = vsel %vm738, %v1517, 0
          %1524 = vmatprep.subr.bf16.mxu0 0
          %1525 = vmatpush1.bf16.xpose.msra.mxu0 %v1522
          %1526 = vmatprep.subr.bf16.mxu0 0
          %1527 = vmatpush1.bf16.xpose.msra.mxu0 0
          %1528 = vmatprep.subr.bf16.mxu0 0
          %1529 = vmatpush1.bf16.xpose.msra.mxu0 0
          %1530 = vmatprep.subr.bf16.mxu0 0
          %1531 = vmatpush1.bf16.xpose.msra.mxu0 0
          %1532 = vmatprep.subr.bf16.mxu0 0
          %1533 = vmatpush1.bf16.xpose.msra.mxu0 0
          %1534 = vmatprep.subr.bf16.mxu0 0
          %1535 = vmatpush1.bf16.xpose.msra.mxu0 0
          %1536 = vmatprep.subr.bf16.mxu0 0
          %1537 = vmatpush1.bf16.xpose.msra.mxu0 0
          %1538 = vmatprep.subr.bf16.mxu0 0
          %1539 = vmatpush1.bf16.xpose.msra.mxu0 0
          %1540 = vmatprep.subr.bf16.mxu0 0
          %1541 = vmatpush1.bf16.xpose.msra.mxu0 0
          %1542 = vmatprep.subr.bf16.mxu0 0
          %1543 = vmatpush1.bf16.xpose.msra.mxu0 0
          %1544 = vmatprep.subr.bf16.mxu0 0
          %1545 = vmatpush1.bf16.xpose.msra.mxu0 0
          %1546 = vmatprep.subr.bf16.mxu0 0
          %1547 = vmatpush1.bf16.xpose.msra.mxu0 0
          %1548 = vmatprep.subr.bf16.mxu0 0
          %1549 = vmatpush1.bf16.xpose.msra.mxu0 0
          %1550 = vmatprep.subr.bf16.mxu0 0
          %1551 = vmatpush1.bf16.xpose.msra.mxu0 0
          %1552 = vmatprep.subr.bf16.mxu0 0
          %1553 = vmatpush1.bf16.xpose.msra.mxu0 0
          %1554 = vmatprep.subr.bf16.mxu0 0
          %1555 = vmatpush1.bf16.xpose.msra.mxu0 0
          %1556 = vmatprep.mubr.bf16.mxu0 0
          %1557 = vmatmul.mubr.bf16.gmra.mrb[0].mxu0 %v1519
          %v1558 = vpop.f32.mrb[0].mxu0
          %v1559 = vadd.f32 0.0, %v1558
          %v1560 = vpop.f32.mrb[0].mxu0
          %v1561 = vpop.f32.mrb[0].mxu0
          %v1562 = vadd.f32 0.0, %v1561
          %v1563 = vpop.f32.mrb[0].mxu0
          %1564 = vdwg.mxu0
          %v1565 = vmul.f32 %v1559, 0.25
          %v1566 = vmul.f32 %v1562, 0.25
          %v1567 = vadd.f32 %v1565, %v734
          %v1568 = vadd.f32 %v1566, %v734
          %v1569 = vsel %vm738, %v1567, -inf
          %1570 = vmax.xlane.f32.xlu0 %v1569
          %v1571 = vpop.xlane.xlu0 %1570
          %v1572 = vsel %vm738, %v1568, -inf
          %1573 = vmax.xlane.f32.xlu0 %v1572
          %v1574 = vpop.xlane.xlu0 %1573
          %v1575 = vsub.f32 %v1567, %v1571
          %v1576 = vsub.f32 %v1568, %v1574
          %v1577 = vmul.f32 %v1575, 1.442695
          %v1578 = vpow.pop %v1577
          %v1579 = vmul.f32 %v1576, 1.442695
          %v1580 = vpow.pop %v1579
          %v1581 = vsel %vm738, %v1578, 0.0
          %1582 = vadd.xlane.f32.xlu0 %v1581
          %v1583 = vpop.xlane.xlu0 %1582
          %v1584 = vsel %vm738, %v1580, 0.0
          %1585 = vadd.xlane.f32.xlu0 %v1584
          %v1586 = vpop.xlane.xlu0 %1585
          %v1587 = vrcp.pop %v1583
          %v1588 = vrcp.pop %v1586
          %v1589 = vmul.f32 %v1578, %v1587
          %v1590 = vmul.f32 %v1580, %v1588
          %v1591 = vpack.c.bf16 %v1590, %v1589
          %1592 = vrot.lane.b32.xlu0 %v730, 96
          %v1593 = vpop.permute.xlu0 %1592
          %v1596 = vsel %vm738, %v1591, 0
          %1598 = vmatprep.subr.bf16.mxu0 0
          %1599 = vmatpush1.bf16.msra.mxu0 %v1593
          %1600 = vmatprep.subr.bf16.mxu0 0
          %1601 = vmatpush1.bf16.msra.mxu0 0
          %1602 = vmatprep.subr.bf16.mxu0 0
          %1603 = vmatpush1.bf16.msra.mxu0 0
          %1604 = vmatprep.subr.bf16.mxu0 0
          %1605 = vmatpush1.bf16.msra.mxu0 0
          %1606 = vmatprep.subr.bf16.mxu0 0
          %1607 = vmatpush1.bf16.msra.mxu0 0
          %1608 = vmatprep.subr.bf16.mxu0 0
          %1609 = vmatpush1.bf16.msra.mxu0 0
          %1610 = vmatprep.subr.bf16.mxu0 0
          %1611 = vmatpush1.bf16.msra.mxu0 0
          %1612 = vmatprep.subr.bf16.mxu0 0
          %1613 = vmatpush1.bf16.msra.mxu0 0
          %1614 = vmatprep.subr.bf16.mxu0 0
          %1615 = vmatpush1.bf16.msra.mxu0 0
          %1616 = vmatprep.subr.bf16.mxu0 0
          %1617 = vmatpush1.bf16.msra.mxu0 0
          %1618 = vmatprep.subr.bf16.mxu0 0
          %1619 = vmatpush1.bf16.msra.mxu0 0
          %1620 = vmatprep.subr.bf16.mxu0 0
          %1621 = vmatpush1.bf16.msra.mxu0 0
          %1622 = vmatprep.subr.bf16.mxu0 0
          %1623 = vmatpush1.bf16.msra.mxu0 0
          %1624 = vmatprep.subr.bf16.mxu0 0
          %1625 = vmatpush1.bf16.msra.mxu0 0
          %1626 = vmatprep.subr.bf16.mxu0 0
          %1627 = vmatpush1.bf16.msra.mxu0 0
          %1628 = vmatprep.subr.bf16.mxu0 0
          %1629 = vmatpush1.bf16.msra.mxu0 0
          %1630 = vmatprep.mubr.bf16.mxu0 0
          %1631 = vmatmul.mubr.bf16.gmra.mrb[0].mxu0 %v1596
          %v1632 = vpop.f32.mrb[0].mxu0
          %v1633 = vadd.f32 0.0, %v1632
          %v1634 = vpop.f32.mrb[0].mxu0
          %v1635 = vpop.f32.mrb[0].mxu0
          %v1636 = vadd.f32 0.0, %v1635
          %v1637 = vpop.f32.mrb[0].mxu0
          %1638 = vdwg.mxu0
          %1639 = vrot.lane.b32.xlu0 %v729, 80
          %v1640 = vpop.permute.xlu0 %1639
          %1641 = vrot.lane.b32.xlu0 %v729, 16
          %v1642 = vpop.permute.xlu0 %1641
          %v1644 = vsel %vm738, %v1640, 0
          %v1647 = vsel %vm738, %v1642, 0
          %1649 = vmatprep.subr.bf16.mxu0 0
          %1650 = vmatpush1.bf16.xpose.msra.mxu0 %v1647
          %1651 = vmatprep.subr.bf16.mxu0 0
          %1652 = vmatpush1.bf16.xpose.msra.mxu0 0
          %1653 = vmatprep.subr.bf16.mxu0 0
          %1654 = vmatpush1.bf16.xpose.msra.mxu0 0
          %1655 = vmatprep.subr.bf16.mxu0 0
          %1656 = vmatpush1.bf16.xpose.msra.mxu0 0
          %1657 = vmatprep.subr.bf16.mxu0 0
          %1658 = vmatpush1.bf16.xpose.msra.mxu0 0
          %1659 = vmatprep.subr.bf16.mxu0 0
          %1660 = vmatpush1.bf16.xpose.msra.mxu0 0
          %1661 = vmatprep.subr.bf16.mxu0 0
          %1662 = vmatpush1.bf16.xpose.msra.mxu0 0
          %1663 = vmatprep.subr.bf16.mxu0 0
          %1664 = vmatpush1.bf16.xpose.msra.mxu0 0
          %1665 = vmatprep.subr.bf16.mxu0 0
          %1666 = vmatpush1.bf16.xpose.msra.mxu0 0
          %1667 = vmatprep.subr.bf16.mxu0 0
          %1668 = vmatpush1.bf16.xpose.msra.mxu0 0
          %1669 = vmatprep.subr.bf16.mxu0 0
          %1670 = vmatpush1.bf16.xpose.msra.mxu0 0
          %1671 = vmatprep.subr.bf16.mxu0 0
          %1672 = vmatpush1.bf16.xpose.msra.mxu0 0
          %1673 = vmatprep.subr.bf16.mxu0 0
          %1674 = vmatpush1.bf16.xpose.msra.mxu0 0
          %1675 = vmatprep.subr.bf16.mxu0 0
          %1676 = vmatpush1.bf16.xpose.msra.mxu0 0
          %1677 = vmatprep.subr.bf16.mxu0 0
          %1678 = vmatpush1.bf16.xpose.msra.mxu0 0
          %1679 = vmatprep.subr.bf16.mxu0 0
          %1680 = vmatpush1.bf16.xpose.msra.mxu0 0
          %1681 = vmatprep.mubr.bf16.mxu0 0
          %1682 = vmatmul.mubr.bf16.gmra.mrb[0].mxu0 %v1644
          %v1683 = vpop.f32.mrb[0].mxu0
          %v1684 = vadd.f32 0.0, %v1683
          %v1685 = vpop.f32.mrb[0].mxu0
          %v1686 = vpop.f32.mrb[0].mxu0
          %v1687 = vadd.f32 0.0, %v1686
          %v1688 = vpop.f32.mrb[0].mxu0
          %1689 = vdwg.mxu0
          %v1690 = vmul.f32 %v1684, 0.25
          %v1691 = vmul.f32 %v1687, 0.25
          %v1692 = vadd.f32 %v1690, %v734
          %v1693 = vadd.f32 %v1691, %v734
          %v1694 = vsel %vm738, %v1692, -inf
          %1695 = vmax.xlane.f32.xlu0 %v1694
          %v1696 = vpop.xlane.xlu0 %1695
          %v1697 = vsel %vm738, %v1693, -inf
          %1698 = vmax.xlane.f32.xlu0 %v1697
          %v1699 = vpop.xlane.xlu0 %1698
          %v1700 = vsub.f32 %v1692, %v1696
          %v1701 = vsub.f32 %v1693, %v1699
          %v1702 = vmul.f32 %v1700, 1.442695
          %v1703 = vpow.pop %v1702
          %v1704 = vmul.f32 %v1701, 1.442695
          %v1705 = vpow.pop %v1704
          %v1706 = vsel %vm738, %v1703, 0.0
          %1707 = vadd.xlane.f32.xlu0 %v1706
          %v1708 = vpop.xlane.xlu0 %1707
          %v1709 = vsel %vm738, %v1705, 0.0
          %1710 = vadd.xlane.f32.xlu0 %v1709
          %v1711 = vpop.xlane.xlu0 %1710
          %v1712 = vrcp.pop %v1708
          %v1713 = vrcp.pop %v1711
          %v1714 = vmul.f32 %v1703, %v1712
          %v1715 = vmul.f32 %v1705, %v1713
          %v1716 = vpack.c.bf16 %v1715, %v1714
          %1717 = vrot.lane.b32.xlu0 %v730, 80
          %v1718 = vpop.permute.xlu0 %1717
          %v1721 = vsel %vm738, %v1716, 0
          %1723 = vmatprep.subr.bf16.mxu0 0
          %1724 = vmatpush1.bf16.msra.mxu0 %v1718
          %1725 = vmatprep.subr.bf16.mxu0 0
          %1726 = vmatpush1.bf16.msra.mxu0 0
          %1727 = vmatprep.subr.bf16.mxu0 0
          %1728 = vmatpush1.bf16.msra.mxu0 0
          %1729 = vmatprep.subr.bf16.mxu0 0
          %1730 = vmatpush1.bf16.msra.mxu0 0
          %1731 = vmatprep.subr.bf16.mxu0 0
          %1732 = vmatpush1.bf16.msra.mxu0 0
          %1733 = vmatprep.subr.bf16.mxu0 0
          %1734 = vmatpush1.bf16.msra.mxu0 0
          %1735 = vmatprep.subr.bf16.mxu0 0
          %1736 = vmatpush1.bf16.msra.mxu0 0
          %1737 = vmatprep.subr.bf16.mxu0 0
          %1738 = vmatpush1.bf16.msra.mxu0 0
          %1739 = vmatprep.subr.bf16.mxu0 0
          %1740 = vmatpush1.bf16.msra.mxu0 0
          %1741 = vmatprep.subr.bf16.mxu0 0
          %1742 = vmatpush1.bf16.msra.mxu0 0
          %1743 = vmatprep.subr.bf16.mxu0 0
          %1744 = vmatpush1.bf16.msra.mxu0 0
          %1745 = vmatprep.subr.bf16.mxu0 0
          %1746 = vmatpush1.bf16.msra.mxu0 0
          %1747 = vmatprep.subr.bf16.mxu0 0
          %1748 = vmatpush1.bf16.msra.mxu0 0
          %1749 = vmatprep.subr.bf16.mxu0 0
          %1750 = vmatpush1.bf16.msra.mxu0 0
          %1751 = vmatprep.subr.bf16.mxu0 0
          %1752 = vmatpush1.bf16.msra.mxu0 0
          %1753 = vmatprep.subr.bf16.mxu0 0
          %1754 = vmatpush1.bf16.msra.mxu0 0
          %1755 = vmatprep.mubr.bf16.mxu0 0
          %1756 = vmatmul.mubr.bf16.gmra.mrb[0].mxu0 %v1721
          %v1757 = vpop.f32.mrb[0].mxu0
          %v1758 = vadd.f32 0.0, %v1757
          %v1759 = vpop.f32.mrb[0].mxu0
          %v1760 = vpop.f32.mrb[0].mxu0
          %v1761 = vadd.f32 0.0, %v1760
          %v1762 = vpop.f32.mrb[0].mxu0
          %1763 = vdwg.mxu0
          %1766 = vrot.lane.b32.xlu0 %v1508, 16
          %v1767 = vpop.permute.xlu0 %1766
          %1768 = vrot.lane.b32.xlu0 %v1511, 16
          %v1769 = vpop.permute.xlu0 %1768
          %1774 = vrot.lane.b32.xlu0 %v1633, 32
          %v1775 = vpop.permute.xlu0 %1774
          %1776 = vrot.lane.b32.xlu0 %v1636, 32
          %v1777 = vpop.permute.xlu0 %1776
          %1782 = vrot.lane.b32.xlu0 %v1758, 48
          %v1783 = vpop.permute.xlu0 %1782
          %1784 = vrot.lane.b32.xlu0 %v1761, 48
          %v1785 = vpop.permute.xlu0 %1784
          %v1788 = vsel %vm738, %v1382, %v1767
          %v1789 = vsel %vm738, %v1385, %v1769
          %v1790 = vsel %vm1259, %v1788, %v1775
          %v1791 = vsel %vm1259, %v1789, %v1777
          %v1792 = vsel %vm1262, %v1790, %v1783
          %v1793 = vsel %vm1262, %v1791, %v1785
          %1794 = vst.msk [vmem:[#allocation2 + $0x10] sm:$0xff] %vm530, %v1792
          %1795 = vst.msk [vmem:[#allocation2 + $0x18] sm:$0xff] %vm530, %v1793
          %v1796 = vld [vmem:[#allocation2] sm:$0xff]
          %v1797 = vld [vmem:[#allocation2 + $0x8] sm:$0xff]
          %v1798 = vld [vmem:[#allocation2 + $0x10] sm:$0xff]
          %v1799 = vld [vmem:[#allocation2 + $0x18] sm:$0xff]
          %v1800 = vadd.f32 %v526, %v1796
          %v1801 = vadd.f32 %v527, %v1797
          %v1802 = vadd.f32 %v528, %v1798
          %v1803 = vadd.f32 %v529, %v1799
          %v1804 = vsel %vm530, %v1800, 0.0
          %1805 = vadd.xlane.f32.xlu0 %v1804
          %v1806 = vpop.xlane.xlu0 %1805
          %v1807 = vsel %vm530, %v1801, 0.0
          %1808 = vadd.xlane.f32.xlu0 %v1807
          %v1809 = vpop.xlane.xlu0 %1808
          %v1810 = vsel %vm530, %v1802, 0.0
          %1811 = vadd.xlane.f32.xlu0 %v1810
          %v1812 = vpop.xlane.xlu0 %1811
          %v1813 = vsel %vm530, %v1803, 0.0
          %1814 = vadd.xlane.f32.xlu0 %v1813
          %v1815 = vpop.xlane.xlu0 %1814
          %v1816 = vmul.f32 %v1806, %v543
          %v1817 = vmul.f32 %v1809, %v543
          %v1818 = vmul.f32 %v1812, %v543
          %v1819 = vmul.f32 %v1815, %v543
          %v1820 = vsub.f32 %v1800, %v1816
          %v1821 = vsub.f32 %v1801, %v1817
          %v1822 = vsub.f32 %v1802, %v1818
          %v1823 = vsub.f32 %v1803, %v1819
          %v1824 = vmul.f32 %v1820, %v1820
          %v1825 = vmul.f32 %v1821, %v1821
          %v1826 = vmul.f32 %v1822, %v1822
          %v1827 = vmul.f32 %v1823, %v1823
          %v1828 = vsel %vm530, %v1824, 0.0
          %1829 = vadd.xlane.f32.xlu0 %v1828
          %v1830 = vpop.xlane.xlu0 %1829
          %v1831 = vsel %vm530, %v1825, 0.0
          %1832 = vadd.xlane.f32.xlu0 %v1831
          %v1833 = vpop.xlane.xlu0 %1832
          %v1834 = vsel %vm530, %v1826, 0.0
          %1835 = vadd.xlane.f32.xlu0 %v1834
          %v1836 = vpop.xlane.xlu0 %1835
          %v1837 = vsel %vm530, %v1827, 0.0
          %1838 = vadd.xlane.f32.xlu0 %v1837
          %v1839 = vpop.xlane.xlu0 %1838
          %v1840 = vmul.f32 %v1830, %v543
          %v1841 = vmul.f32 %v1833, %v543
          %v1842 = vmul.f32 %v1836, %v543
          %v1843 = vmul.f32 %v1839, %v543
          %v1844 = vadd.f32 %v1840, 1e-05
          %v1845 = vadd.f32 %v1841, 1e-05
          %v1846 = vadd.f32 %v1842, 1e-05
          %v1847 = vadd.f32 %v1843, 1e-05
          %v1848 = vrsqrt.pop %v1844
          %v1849 = vrsqrt.pop %v1845
          %v1850 = vrsqrt.pop %v1846
          %v1851 = vrsqrt.pop %v1847
          %v1852 = vmul.f32 %v1820, %v1848
          %v1853 = vmul.f32 %v1821, %v1849
          %v1854 = vmul.f32 %v1822, %v1850
          %v1855 = vmul.f32 %v1823, %v1851
          %v1856 = vld [vmem:[%s5] sm:$0x1]
          %v1858 = vlaneseq
          %v1859 = vshrl.u32 %v1858, 7
          %v1860 = vsub.s32 0, %v1859
          %v1861 = vrot.slane %v1856, %v1860
          %v1863 = vmul.f32 %v1852, %v1861
          %v1864 = vmul.f32 %v1853, %v1861
          %v1865 = vmul.f32 %v1854, %v1861
          %v1866 = vmul.f32 %v1855, %v1861
          %v1867 = vld [vmem:[%s6] sm:$0x1]
          %v1869 = vlaneseq
          %v1870 = vshrl.u32 %v1869, 7
          %v1871 = vsub.s32 0, %v1870
          %v1872 = vrot.slane %v1867, %v1871
          %v1874 = vadd.f32 %v1863, %v1872
          %v1875 = vadd.f32 %v1864, %v1872
          %v1876 = vadd.f32 %v1865, %v1872
          %v1877 = vadd.f32 %v1866, %v1872
          %v1878 = vpack.c.bf16 %v1875, %v1874
          %v1879 = vpack.c.bf16 %v1877, %v1876
          %1880 = vst.msk [vmem:[#allocation3] sm:$0xff] %vm530, %v1878
          %1881 = vst.msk [vmem:[#allocation3 + $0x8] sm:$0xff] %vm530, %v1879
          %v1882 = vld [vmem:[%s10] sm:$0x1]
          %v1884 = vlaneseq
          %v1885 = vshrl.u32 %v1884, 7
          %v1886 = vsub.s32 0, %v1885
          %v1887 = vrot.slane %v1882, %v1886
          %v1889 = vadd.f32 %v1800, %v1887
          %v1890 = vadd.f32 %v1801, %v1887
          %v1891 = vadd.f32 %v1802, %v1887
          %v1892 = vadd.f32 %v1803, %v1887
          %1893 = vst.msk [vmem:[#allocation4] sm:$0xff] %vm530, %v1889
          %1894 = vst.msk [vmem:[#allocation4 + $0x8] sm:$0xff] %vm530, %v1890
          %1895 = vst.msk [vmem:[#allocation4 + $0x10] sm:$0xff] %vm530, %v1891
          %1896 = vst.msk [vmem:[#allocation4 + $0x18] sm:$0xff] %vm530, %v1892
        $region109: #{tpu_custom_call.1} parent=100 // pred_fallthru
          _
        %v1897 = vld [vmem:[#allocation3] sm:$0xff]
        %v1898 = vld [vmem:[#allocation3 + $0x8] sm:$0xff]
        %v1899 = vld [vmem:[%s458] sm:$0xf]
        %v1900 = vld [vmem:[%s458 + $0x4] sm:$0xf]
        %v1901 = vld [vmem:[%s458 + $0x8] sm:$0xf]
        %v1902 = vld [vmem:[%s458 + $0xc] sm:$0xf]
        %v1903 = vld [vmem:[%s458 + $0x10] sm:$0xf]
        %v1904 = vld [vmem:[%s458 + $0x14] sm:$0xf]
        %v1905 = vld [vmem:[%s458 + $0x18] sm:$0xf]
        %v1906 = vld [vmem:[%s458 + $0x1c] sm:$0xf]
        %v1907 = vld [vmem:[%s513] sm:$0x1]
        %v1909 = vlaneseq
        %v1910 = vshrl.u32 %v1909, 7
        %v1911 = vsub.s32 0, %v1910
        %v1912 = vrot.slane %v1907, %v1911
        %v1922 = vunpack.c.l.b16 %v1899
        %v1923 = vunpack.c.l.b16 %v1900
        %v1924 = vunpack.c.l.b16 %v1901
        %v1925 = vunpack.c.l.b16 %v1902
        %v1926 = vunpack.c.l.b16 %v1903
        %v1927 = vunpack.c.l.b16 %v1904
        %v1928 = vunpack.c.l.b16 %v1905
        %v1929 = vunpack.c.l.b16 %v1906
        %v1930 = vpack.c.b16 %v1923, %v1922
        %v1931 = vpack.c.b16 %v1925, %v1924
        %v1932 = vpack.c.b16 %v1927, %v1926
        %v1933 = vpack.c.b16 %v1929, %v1928
        %vm1938 = vcmask 523264
        %v1940 = vsel %vm1938, %v1897, 0
        %v1943 = vsel %vm1938, %v1898, 0
        %1945 = vmatprep.subr.bf16.mxu0 0
        %1946 = vmatpush1.bf16.msra.mxu0 %v1930
        %1947 = vmatprep.subr.bf16.mxu0 0
        %1948 = vmatpush1.bf16.msra.mxu0 %v1931
        %1949 = vmatprep.subr.bf16.mxu0 0
        %1950 = vmatpush1.bf16.msra.mxu0 %v1932
        %1951 = vmatprep.subr.bf16.mxu0 0
        %1952 = vmatpush1.bf16.msra.mxu0 %v1933
        %1953 = vmatprep.subr.bf16.mxu0 0
        %1954 = vmatpush1.bf16.msra.mxu0 0
        %1955 = vmatprep.subr.bf16.mxu0 0
        %1956 = vmatpush1.bf16.msra.mxu0 0
        %1957 = vmatprep.subr.bf16.mxu0 0
        %1958 = vmatpush1.bf16.msra.mxu0 0
        %1959 = vmatprep.subr.bf16.mxu0 0
        %1960 = vmatpush1.bf16.msra.mxu0 0
        %1961 = vmatprep.subr.bf16.mxu0 0
        %1962 = vmatpush1.bf16.msra.mxu0 0
        %1963 = vmatprep.subr.bf16.mxu0 0
        %1964 = vmatpush1.bf16.msra.mxu0 0
        %1965 = vmatprep.subr.bf16.mxu0 0
        %1966 = vmatpush1.bf16.msra.mxu0 0
        %1967 = vmatprep.subr.bf16.mxu0 0
        %1968 = vmatpush1.bf16.msra.mxu0 0
        %1969 = vmatprep.subr.bf16.mxu0 0
        %1970 = vmatpush1.bf16.msra.mxu0 0
        %1971 = vmatprep.subr.bf16.mxu0 0
        %1972 = vmatpush1.bf16.msra.mxu0 0
        %1973 = vmatprep.subr.bf16.mxu0 0
        %1974 = vmatpush1.bf16.msra.mxu0 0
        %1975 = vmatprep.subr.bf16.mxu0 0
        %1976 = vmatpush1.bf16.msra.mxu0 0
        %1977 = vmatprep.mubr.bf16.mxu0 0
        %1978 = vmatmul.mubr.bf16.gmra.mrb[0].mxu0 %v1940
        %v1979 = vpop.f32.mrb[0].mxu0
        %v1980 = vadd.f32 %v1912, %v1979
        %v1981 = vpop.f32.mrb[0].mxu0
        %v1982 = vpop.f32.mrb[0].mxu0
        %v1983 = vadd.f32 %v1912, %v1982
        %v1984 = vpop.f32.mrb[0].mxu0
        %1985 = vmatprep.mubr.bf16.mxu0 0
        %1986 = vmatmul.mubr.bf16.gmra.mrb[0].mxu0 %v1943
        %v1987 = vpop.f32.mrb[0].mxu0
        %v1988 = vadd.f32 %v1912, %v1987
        %v1989 = vpop.f32.mrb[0].mxu0
        %v1990 = vpop.f32.mrb[0].mxu0
        %v1991 = vadd.f32 %v1912, %v1990
        %v1992 = vpop.f32.mrb[0].mxu0
        %1993 = vdwg.mxu0
        %v1994 = vmul.f32 %v1980, 0.5
        %v1995 = vmul.f32 %v1983, 0.5
        %v1996 = vmul.f32 %v1988, 0.5
        %v1997 = vmul.f32 %v1991, 0.5
        %v1998 = vmul.f32 %v1980, 0.70710677
        %v1999 = vmul.f32 %v1983, 0.70710677
        %v2000 = vmul.f32 %v1988, 0.70710677
        %v2001 = vmul.f32 %v1991, 0.70710677
        %v2002 = verf.f32.pop %v1998
        %v2003 = verf.f32.pop %v1999
        %v2004 = verf.f32.pop %v2000
        %v2005 = verf.f32.pop %v2001
        %v2006 = vadd.f32 %v2002, 1.0
        %v2007 = vadd.f32 %v2003, 1.0
        %v2008 = vadd.f32 %v2004, 1.0
        %v2009 = vadd.f32 %v2005, 1.0
        %v2010 = vmul.f32 %v1994, %v2006
        %v2011 = vmul.f32 %v1995, %v2007
        %v2012 = vmul.f32 %v1996, %v2008
        %v2013 = vmul.f32 %v1997, %v2009
        %v2014 = vld [vmem:[#allocation4] sm:$0xff]
        %v2015 = vld [vmem:[#allocation4 + $0x8] sm:$0xff]
        %v2016 = vld [vmem:[#allocation4 + $0x10] sm:$0xff]
        %v2017 = vld [vmem:[#allocation4 + $0x18] sm:$0xff]
        %v2018 = vpack.c.bf16 %v2011, %v2010
        %v2019 = vpack.c.bf16 %v2013, %v2012
        %v2020 = vld [vmem:[%s518] sm:$0xf]
        %v2021 = vld [vmem:[%s518 + $0x4] sm:$0xf]
        %v2022 = vld [vmem:[%s518 + $0x8] sm:$0xf]
        %v2023 = vld [vmem:[%s518 + $0xc] sm:$0xf]
        %v2024 = vld [vmem:[%s518 + $0x10] sm:$0xf]
        %v2025 = vld [vmem:[%s518 + $0x14] sm:$0xf]
        %v2026 = vld [vmem:[%s518 + $0x18] sm:$0xf]
        %v2027 = vld [vmem:[%s518 + $0x1c] sm:$0xf]
        %v2028 = vld [vmem:[%s518 + $0x20] sm:$0xf]
        %v2029 = vld [vmem:[%s518 + $0x24] sm:$0xf]
        %v2030 = vld [vmem:[%s518 + $0x28] sm:$0xf]
        %v2031 = vld [vmem:[%s518 + $0x2c] sm:$0xf]
        %v2032 = vld [vmem:[%s518 + $0x30] sm:$0xf]
        %v2033 = vld [vmem:[%s518 + $0x34] sm:$0xf]
        %v2034 = vld [vmem:[%s518 + $0x38] sm:$0xf]
        %v2035 = vld [vmem:[%s518 + $0x3c] sm:$0xf]
        %v2052 = vunpack.c.l.b16 %v2020
        %v2053 = vunpack.c.l.b16 %v2021
        %v2054 = vunpack.c.l.b16 %v2022
        %v2055 = vunpack.c.l.b16 %v2023
        %v2056 = vunpack.c.l.b16 %v2024
        %v2057 = vunpack.c.l.b16 %v2025
        %v2058 = vunpack.c.l.b16 %v2026
        %v2059 = vunpack.c.l.b16 %v2027
        %v2060 = vunpack.c.l.b16 %v2028
        %v2061 = vunpack.c.l.b16 %v2029
        %v2062 = vunpack.c.l.b16 %v2030
        %v2063 = vunpack.c.l.b16 %v2031
        %v2064 = vunpack.c.l.b16 %v2032
        %v2065 = vunpack.c.l.b16 %v2033
        %v2066 = vunpack.c.l.b16 %v2034
        %v2067 = vunpack.c.l.b16 %v2035
        %v2068 = vpack.c.b16 %v2053, %v2052
        %v2069 = vpack.c.b16 %v2055, %v2054
        %v2070 = vpack.c.b16 %v2057, %v2056
        %v2071 = vpack.c.b16 %v2059, %v2058
        %v2072 = vpack.c.b16 %v2061, %v2060
        %v2073 = vpack.c.b16 %v2063, %v2062
        %v2074 = vpack.c.b16 %v2065, %v2064
        %v2075 = vpack.c.b16 %v2067, %v2066
        %2084 = vmatprep.subr.bf16.mxu0 0
        %2085 = vmatpush1.bf16.msra.mxu0 %v2068
        %2086 = vmatprep.subr.bf16.mxu0 0
        %2087 = vmatpush1.bf16.msra.mxu0 %v2069
        %2088 = vmatprep.subr.bf16.mxu0 0
        %2089 = vmatpush1.bf16.msra.mxu0 %v2070
        %2090 = vmatprep.subr.bf16.mxu0 0
        %2091 = vmatpush1.bf16.msra.mxu0 %v2071
        %2092 = vmatprep.subr.bf16.mxu0 0
        %2093 = vmatpush1.bf16.msra.mxu0 %v2072
        %2094 = vmatprep.subr.bf16.mxu0 0
        %2095 = vmatpush1.bf16.msra.mxu0 %v2073
        %2096 = vmatprep.subr.bf16.mxu0 0
        %2097 = vmatpush1.bf16.msra.mxu0 %v2074
        %2098 = vmatprep.subr.bf16.mxu0 0
        %2099 = vmatpush1.bf16.msra.mxu0 %v2075
        %2100 = vmatprep.subr.bf16.mxu0 0
        %2101 = vmatpush1.bf16.msra.mxu0 0
        %2102 = vmatprep.subr.bf16.mxu0 0
        %2103 = vmatpush1.bf16.msra.mxu0 0
        %2104 = vmatprep.subr.bf16.mxu0 0
        %2105 = vmatpush1.bf16.msra.mxu0 0
        %2106 = vmatprep.subr.bf16.mxu0 0
        %2107 = vmatpush1.bf16.msra.mxu0 0
        %2108 = vmatprep.subr.bf16.mxu0 0
        %2109 = vmatpush1.bf16.msra.mxu0 0
        %2110 = vmatprep.subr.bf16.mxu0 0
        %2111 = vmatpush1.bf16.msra.mxu0 0
        %2112 = vmatprep.subr.bf16.mxu0 0
        %2113 = vmatpush1.bf16.msra.mxu0 0
        %2114 = vmatprep.subr.bf16.mxu0 0
        %2115 = vmatpush1.bf16.msra.mxu0 0
        %2116 = vmatprep.mubr.bf16.mxu0 0
        %2117 = vmatmul.mubr.bf16.gmra.mrb[0].mxu0 %v2018
        %v2118 = vpop.f32.mrb[0].mxu0
        %v2119 = vadd.f32 0.0, %v2118
        %v2120 = vpop.f32.mrb[0].mxu0
        %v2121 = vpop.f32.mrb[0].mxu0
        %v2122 = vadd.f32 0.0, %v2121
        %v2123 = vpop.f32.mrb[0].mxu0
        %2124 = vmatprep.mubr.bf16.mxu0 0
        %2125 = vmatmul.mubr.bf16.gmra.mrb[0].mxu0 %v2019
        %v2126 = vpop.f32.mrb[0].mxu0
        %v2127 = vadd.f32 0.0, %v2126
        %v2128 = vpop.f32.mrb[0].mxu0
        %v2129 = vpop.f32.mrb[0].mxu0
        %v2130 = vadd.f32 0.0, %v2129
        %v2131 = vpop.f32.mrb[0].mxu0
        %2132 = vdwg.mxu0
        %v2133 = vadd.f32 %v2014, %v2119
        %v2134 = vadd.f32 %v2015, %v2122
        %v2135 = vadd.f32 %v2016, %v2127
        %v2136 = vadd.f32 %v2017, %v2130
        %2137 = vst.msk [vmem:[#allocation4] sm:$0xff] %vm1938, %v2133
        %2138 = vst.msk [vmem:[#allocation4 + $0x8] sm:$0xff] %vm1938, %v2134
        %2139 = vst.msk [vmem:[#allocation4 + $0x10] sm:$0xff] %vm1938, %v2135
        %2140 = vst.msk [vmem:[#allocation4 + $0x18] sm:$0xff] %vm1938, %v2136
        %p2141 = scmp.eq.s32.totalorder %s28, 1
        // Predicated region
        $region110: #{tpu_custom_call.1} parent=100 // pred_check
          %p2142 = pneg %p2141
        $region111: #{tpu_custom_call.1} parent=100 // pred_check_branch
          %2144 = sbr.rel (%p2142) target = $region113
        $region112: #{tpu_custom_call.1} parent=100 // pred_region
          %v2145 = vld [vmem:[#allocation4] sm:$0xff]
          %v2146 = vld [vmem:[#allocation4 + $0x8] sm:$0xff]
          %v2147 = vld [vmem:[#allocation4 + $0x10] sm:$0xff]
          %v2148 = vld [vmem:[#allocation4 + $0x18] sm:$0xff]
          %2149 = vst.msk [vmem:[#allocation6] sm:$0xff] %vm1938, %v2145
          %2150 = vst.msk [vmem:[#allocation6 + $0x8] sm:$0xff] %vm1938, %v2146
          %2151 = vst.msk [vmem:[#allocation6 + $0x10] sm:$0xff] %vm1938, %v2147
          %2152 = vst.msk [vmem:[#allocation6 + $0x18] sm:$0xff] %vm1938, %v2148
        $region113: #{tpu_custom_call.1} parent=100 // pred_fallthru
          _
        // Predicated region
        $region114: #{tpu_custom_call.1} parent=100 // pred_check
          %p2153 = pneg %p304
        $region115: #{tpu_custom_call.1} parent=100 // pred_check_branch
          %2155 = sbr.rel (%p2153) target = $region117
        $region116: #{tpu_custom_call.1} parent=100 // pred_region
          %s2156 = smul.u32 2, %s27
          %s2158 = ssub.s32 512, 512
          %2159 = vsyncadd [#allocation7], %s2158
          %s2160 = smul.addr %s2156, 2
          %s2161 = smul.addr %s2160, 128
          %s2162 = scalar_lea.hbm %s11, %s2161
          %s2163 = sshll.u32 [#allocation6], 4
          %s2164 = int_to_ptr.vmem [resolvable:$true] %s2163
          %2169 = dma.vmem_to_hbm [thread:$0]  %s2164, 512, %s2162, [#allocation7], 128, 128, 8
        $region117: #{tpu_custom_call.1} parent=100 // pred_fallthru
          _
        // Predicated region
        $region118: #{tpu_custom_call.1} parent=100 // pred_check
          %p2170 = pneg %p304
        $region119: #{tpu_custom_call.1} parent=100 // pred_check_branch
          %2172 = sbr.rel (%p2170) target = $region121
        $region120: #{tpu_custom_call.1} parent=100 // pred_region
          %2173 = dma.done [#allocation7], 512
        $region121: #{tpu_custom_call.1} parent=100 // pred_fallthru
          _
      $region101: #{tpu_custom_call.1} parent=5 // pred_fallthru
        _
      %p2174 = scmp.le.s32.totalorder 2, %s18
      // Predicated region
      $region122: #{tpu_custom_call.1} parent=5 // pred_check
        %p2175 = pneg %p2174
      $region123: #{tpu_custom_call.1} parent=5 // pred_check_branch
        %2177 = sbr.rel (%p2175) target = $region125
      $region124: #{tpu_custom_call.1} parent=5 // pred_region
        %s2178 = ssub.s32 %s18, 2
      $region125: #{tpu_custom_call.1} parent=5 // pred_fallthru
        _
    $region6: #{tpu_custom_call.1} parent=1 // loop_footer
      %s22 = sadd.s32 1, %s18
    $region7: #{tpu_custom_call.1} parent=1 // loop_footer_branch
      %17 = sbr.rel target = $region3
    $region8: #{tpu_custom_call.1} parent=1 // loop_exit
      _
    %2179 = vsyncpa [#allocation7], 1
    %s2180 = scalar_lea.sflag [#allocation7], 1
    %2181 = vsyncpa %s2180, 1

</llo_original>
